<compile_context>
chip_gen: v6e
topology: v6e:2x2x1
jax: 0.10.0
libtpu: 0.0.40
codegen_flags: <defaults>
</compile_context>

<pallas_src>
import jax
import jax.numpy as jnp
from jax.experimental import pallas as pl
from jax.experimental.pallas import tpu as pltpu

NUM_FEATURES = 1280   # tf_efficientnetv2_xl num_features
H1 = 2048
H2 = 512
TN1 = 1024            # tile width over the Linear(1280,2048) output axis (2 steps)


def deepfake_head_kernel(pooled_ref, wstem_ref, w1_ref, s1_ref, b1_ref,
                         w2_ref, s2_ref, b2_ref, w3_ref, b3_ref,
                         out_ref, feats_scr, acc2_scr):
    j = pl.program_id(0)

    # ---- backbone stand-in projection + init: run once, stash bf16 features.
    @pl.when(j == 0)
    def _():
        feats = jnp.dot(pooled_ref[...], wstem_ref[...],
                        preferred_element_type=jnp.float32)      # (BP, 1280) f32
        feats_scr[...] = feats.astype(jnp.bfloat16)               # stored bf16 once
        acc2_scr[...] = jnp.zeros_like(acc2_scr)
        # Dropout(0.5) on features: identity in eval mode.

    # ---- Linear(1280,2048) tile j -> ReLU.
    # int8 weight tile dequantized to bf16 in VMEM; f32 MXU accumulation;
    # per-output-channel scale applied after accumulation.
    w1_bf = w1_ref[...].astype(jnp.bfloat16)                      # (1280, TN1)
    h = jnp.dot(feats_scr[...], w1_bf,
                preferred_element_type=jnp.float32)               # (BP, TN1) f32
    h = jnp.maximum(h * s1_ref[...] + b1_ref[...], 0.0)
    # Dropout(0.3): identity in eval mode.

    # ---- Linear(2048,512): accumulate this K-tile's contribution.
    w2_bf = w2_ref[...].astype(jnp.bfloat16)                      # (TN1, H2)
    acc2_scr[...] += jnp.dot(h.astype(jnp.bfloat16), w2_bf,
                             preferred_element_type=jnp.float32)

    # ---- tail: scale + bias + ReLU + Linear(512,1) on the last tile.
    @pl.when(j == pl.num_programs(0) - 1)
    def _():
        h2 = jnp.maximum(acc2_scr[...] * s2_ref[...] + b2_ref[...], 0.0)
        # Dropout(0.2): identity in eval mode.
        # N=1 matmul replaced by VPU multiply + lane reduction.
        out = jnp.sum(h2 * w3_ref[...], axis=-1, keepdims=True) + b3_ref[...]
        out_ref[...] = out.astype(out_ref.dtype)


def deepfake_forward(x_nchw, params):
    """x_nchw: (B, C, H, W) float32 -> logits (B, 1) float32."""
    B, C, H, W = x_nchw.shape
    BP = max(8, ((B + 7) // 8) * 8)          # pad batch to f32 sublane tile

    # Backbone stand-in, part 1 (hoisted out of the kernel so the full image
    # never lands in VMEM): global average pool over H*W.
    pooled = jnp.mean(x_nchw.astype(jnp.float32).reshape(B, C, H * W), axis=-1)
    if BP != B:
        pooled = jnp.pad(pooled, ((0, BP - B), (0, 0)))

    wstem, w1, s1, b1, w2, s2, b2, w3, b3 = params
    assert H1 % TN1 == 0
    n_tiles = H1 // TN1

    grid_spec = pltpu.PrefetchScalarGridSpec(
        num_scalar_prefetch=0,
        grid=(n_tiles,),
        in_specs=[
            pl.BlockSpec((BP, C), lambda j: (0, 0)),               # pooled (tiny)
            pl.BlockSpec((C, NUM_FEATURES), lambda j: (0, 0)),     # wstem f32
            pl.BlockSpec((NUM_FEATURES, TN1), lambda j: (0, j)),   # w1 int8 tile
            pl.BlockSpec((1, TN1), lambda j: (0, j)),              # s1 f32 tile
            pl.BlockSpec((1, TN1), lambda j: (0, j)),              # b1 f32 tile
            pl.BlockSpec((TN1, H2), lambda j: (j, 0)),             # w2 int8 K-tile
            pl.BlockSpec((1, H2), lambda j: (0, 0)),               # s2 f32
            pl.BlockSpec((1, H2), lambda j: (0, 0)),               # b2 f32
            pl.BlockSpec((1, H2), lambda j: (0, 0)),               # w3 f32 (row)
            pl.BlockSpec((1, 1), lambda j: (0, 0)),                # b3 f32
        ],
        out_specs=pl.BlockSpec((BP, 1), lambda j: (0, 0)),
        scratch_shapes=[
            pltpu.VMEM((BP, NUM_FEATURES), jnp.bfloat16),  # feats (bf16, cast once)
            pltpu.VMEM((BP, H2), jnp.float32),             # Linear(2048,512) acc
        ],
    )

    out = pl.pallas_call(
        deepfake_head_kernel,
        out_shape=jax.ShapeDtypeStruct((BP, 1), jnp.float32),
        grid_spec=grid_spec,
        # Peak residency (int8 weight tiles double-buffered + bf16 dequant temps)
        # is ~7-8 MiB: fits v5e's 16 MiB default scoped VMEM, no override needed.
        compiler_params=pltpu.CompilerParams(
            dimension_semantics=("arbitrary",)),
    )(pooled, wstem, w1, s1, b1, w2, s2, b2, w3, b3)
    return out[:B]


def _quantize_per_col(w):
    """Symmetric per-output-channel int8 quantization: w ~= q * s."""
    s = jnp.max(jnp.abs(w), axis=0, keepdims=True) / 127.0
    s = jnp.maximum(s, 1e-8).astype(jnp.float32)
    q = jnp.clip(jnp.round(w / s), -127, 127).astype(jnp.int8)
    return q, s


def init_params(key, in_channels):
    ks = jax.random.split(key, 7)
    scale = 0.02
    wstem = scale * jax.random.normal(ks[0], (in_channels, NUM_FEATURES), jnp.float32)
    w1_f = scale * jax.random.normal(ks[1], (NUM_FEATURES, H1), jnp.float32)
    w1, s1 = _quantize_per_col(w1_f)                      # int8 weight + f32 scale
    b1 = scale * jax.random.normal(ks[2], (1, H1), jnp.float32)
    w2_f = scale * jax.random.normal(ks[3], (H1, H2), jnp.float32)
    w2, s2 = _quantize_per_col(w2_f)                      # int8 weight + f32 scale
    b2 = scale * jax.random.normal(ks[4], (1, H2), jnp.float32)
    w3 = scale * jax.random.normal(ks[5], (1, H2), jnp.float32)   # row vector
    b3 = scale * jax.random.normal(ks[6], (1, 1), jnp.float32)
    return (wstem, w1, s1, b1, w2, s2, b2, w3, b3)


def reference_forward(x_nchw, params):
    """Pure-JAX reference mirroring the kernel's dtype/quantization choices."""
    wstem, w1, s1, b1, w2, s2, b2, w3, b3 = params
    B, C, H, W = x_nchw.shape
    pooled = jnp.mean(x_nchw.astype(jnp.float32).reshape(B, C, H * W), axis=-1)
    feats = jnp.dot(pooled, wstem, preferred_element_type=jnp.float32)
    feats = feats.astype(jnp.bfloat16)
    h = jnp.dot(feats, w1.astype(jnp.bfloat16),
                preferred_element_type=jnp.float32) * s1 + b1
    h = jnp.maximum(h, 0.0)
    h2 = jnp.dot(h.astype(jnp.bfloat16), w2.astype(jnp.bfloat16),
                 preferred_element_type=jnp.float32) * s2 + b2
    h2 = jnp.maximum(h2, 0.0)
    return jnp.sum(h2 * w3, axis=-1, keepdims=True) + b3


if __name__ == "__main__":
    key = jax.random.PRNGKey(0)
    k_x, k_p = jax.random.split(key)

    B, C, H, W = 2, 3, 16, 16
    x = jax.random.normal(k_x, (B, C, H, W), jnp.float32)
    params = init_params(k_p, C)

    out = deepfake_forward(x, params)
    out = jax.block_until_ready(out)
    assert out.shape == (B, 1) and out.dtype == jnp.float32

    ref = reference_forward(x, params)
    assert bool(jnp.all(jnp.isfinite(out)))
    assert bool(jnp.allclose(out, ref, rtol=1e-2, atol=1e-3)), (out, ref)

    print("KERNEL_OK")
</pallas_src>

<mosaic_0001>
module attributes {stable_mosaic.version = 11 : i64} {
  func.func @deepfake_head_kernel(%arg0: i32, %arg1: memref<8x3xf32, #tpu.memory_space<vmem>>, %arg2: memref<3x1280xf32, #tpu.memory_space<vmem>>, %arg3: memref<1280x1024xi8, #tpu.memory_space<vmem>>, %arg4: memref<1x1024xf32, #tpu.memory_space<vmem>>, %arg5: memref<1x1024xf32, #tpu.memory_space<vmem>>, %arg6: memref<1024x512xi8, #tpu.memory_space<vmem>>, %arg7: memref<1x512xf32, #tpu.memory_space<vmem>>, %arg8: memref<1x512xf32, #tpu.memory_space<vmem>>, %arg9: memref<1x512xf32, #tpu.memory_space<vmem>>, %arg10: memref<1x1xf32, #tpu.memory_space<vmem>>, %arg11: memref<8x1xf32, #tpu.memory_space<vmem>>, %arg12: memref<8x1280xbf16, #tpu.memory_space<vmem>>, %arg13: memref<8x512xf32, #tpu.memory_space<vmem>>) attributes {dimension_semantics = [#tpu.dimension_semantics<arbitrary>], iteration_bounds = array<i64: 2>, scalar_prefetch = 0 : i64, scratch_operands = 2 : i64, tpu.core_type = #tpu.core_type<tc>, window_params = [{pipeline_mode = #tpu.pipeline_mode<synchronous>, transform_indices = @transform_0, window_bounds = array<i64: 8, 3>}, {pipeline_mode = #tpu.pipeline_mode<synchronous>, transform_indices = @transform_1, window_bounds = array<i64: 3, 1280>}, {transform_indices = @transform_2, window_bounds = array<i64: 1280, 1024>}, {transform_indices = @transform_3, window_bounds = array<i64: 1, 1024>}, {transform_indices = @transform_4, window_bounds = array<i64: 1, 1024>}, {transform_indices = @transform_5, window_bounds = array<i64: 1024, 512>}, {pipeline_mode = #tpu.pipeline_mode<synchronous>, transform_indices = @transform_6, window_bounds = array<i64: 1, 512>}, {pipeline_mode = #tpu.pipeline_mode<synchronous>, transform_indices = @transform_7, window_bounds = array<i64: 1, 512>}, {pipeline_mode = #tpu.pipeline_mode<synchronous>, transform_indices = @transform_8, window_bounds = array<i64: 1, 512>}, {pipeline_mode = #tpu.pipeline_mode<synchronous>, transform_indices = @transform_9, window_bounds = array<i64: 1, 1>}, {pipeline_mode = #tpu.pipeline_mode<synchronous>, transform_indices = @transform_10, window_bounds = array<i64: 8, 1>}]} {
    %c0_i32 = arith.constant 0 : i32
    %0 = arith.cmpi eq, %arg0, %c0_i32 : i32
    %1 = arith.extui %0 : i1 to i32
    %c0_i32_0 = arith.constant 0 : i32
    %2 = arith.cmpi ne, %1, %c0_i32_0 : i32
    scf.if %2 {
      %c0_17 = arith.constant 0 : index
      %c0_18 = arith.constant 0 : index
      %25 = vector.load %arg1[%c0_17, %c0_18] : memref<8x3xf32, #tpu.memory_space<vmem>>, vector<8x3xf32>
      %c0_19 = arith.constant 0 : index
      %c0_20 = arith.constant 0 : index
      %26 = vector.load %arg2[%c0_19, %c0_20] : memref<3x1280xf32, #tpu.memory_space<vmem>>, vector<3x1280xf32>
      %cst_21 = arith.constant dense<0.000000e+00> : vector<8x1280xf32>
      %27 = tpu.matmul %25, %26, %cst_21 {dimension_numbers = #tpu.dot_dimension_numbers<[1], [0], [0], [1], [0, 0, 1, 1], [], []>} : vector<8x3xf32>, vector<3x1280xf32>, vector<8x1280xf32> -> vector<8x1280xf32>
      %28 = arith.truncf %27 : vector<8x1280xf32> to vector<8x1280xbf16>
      %c0_22 = arith.constant 0 : index
      %c0_23 = arith.constant 0 : index
      %29 = vector.load %arg12[%c0_22, %c0_23] : memref<8x1280xbf16, #tpu.memory_space<vmem>>, vector<8x1280xbf16>
      tpu.vector_store %arg12[%c0_22, %c0_23], %28 {strides = array<i32>} : memref<8x1280xbf16, #tpu.memory_space<vmem>>, vector<8x1280xbf16>,
      %cst_24 = arith.constant 0.000000e+00 : f32
      %30 = vector.broadcast %cst_24 : f32 to vector<8x512xf32>
      %c0_25 = arith.constant 0 : index
      %c0_26 = arith.constant 0 : index
      %31 = vector.load %arg13[%c0_25, %c0_26] : memref<8x512xf32, #tpu.memory_space<vmem>>, vector<8x512xf32>
      tpu.vector_store %arg13[%c0_25, %c0_26], %30 {strides = array<i32>} : memref<8x512xf32, #tpu.memory_space<vmem>>, vector<8x512xf32>,
    } else {
    }
    %c0 = arith.constant 0 : index
    %c0_1 = arith.constant 0 : index
    %3 = vector.load %arg3[%c0, %c0_1] : memref<1280x1024xi8, #tpu.memory_space<vmem>>, vector<1280x1024xi8>
    %4 = arith.sitofp %3 : vector<1280x1024xi8> to vector<1280x1024xbf16>
    %c0_2 = arith.constant 0 : index
    %c0_3 = arith.constant 0 : index
    %5 = vector.load %arg12[%c0_2, %c0_3] : memref<8x1280xbf16, #tpu.memory_space<vmem>>, vector<8x1280xbf16>
    %cst = arith.constant dense<0.000000e+00> : vector<8x1024xf32>
    %6 = tpu.matmul %5, %4, %cst {dimension_numbers = #tpu.dot_dimension_numbers<[1], [0], [0], [1], [0, 0, 1, 1], [], []>} : vector<8x1280xbf16>, vector<1280x1024xbf16>, vector<8x1024xf32> -> vector<8x1024xf32>
    %c0_4 = arith.constant 0 : index
    %c0_5 = arith.constant 0 : index
    %7 = vector.load %arg4[%c0_4, %c0_5] : memref<1x1024xf32, #tpu.memory_space<vmem>>, vector<1x1024xf32>
    %8 = vector.broadcast %7 : vector<1x1024xf32> to vector<8x1024xf32>
    %9 = arith.mulf %6, %8 : vector<8x1024xf32>
    %c0_6 = arith.constant 0 : index
    %c0_7 = arith.constant 0 : index
    %10 = vector.load %arg5[%c0_6, %c0_7] : memref<1x1024xf32, #tpu.memory_space<vmem>>, vector<1x1024xf32>
    %11 = vector.broadcast %10 : vector<1x1024xf32> to vector<8x1024xf32>
    %12 = arith.addf %9, %11 : vector<8x1024xf32>
    %cst_8 = arith.constant 0.000000e+00 : f32
    %13 = vector.broadcast %cst_8 : f32 to vector<8x1024xf32>
    %14 = arith.maximumf %12, %13 : vector<8x1024xf32>
    %c0_9 = arith.constant 0 : index
    %c0_10 = arith.constant 0 : index
    %15 = vector.load %arg6[%c0_9, %c0_10] : memref<1024x512xi8, #tpu.memory_space<vmem>>, vector<1024x512xi8>
    %16 = arith.sitofp %15 : vector<1024x512xi8> to vector<1024x512xbf16>
    %c0_11 = arith.constant 0 : index
    %c0_12 = arith.constant 0 : index
    %17 = vector.load %arg13[%c0_11, %c0_12] : memref<8x512xf32, #tpu.memory_space<vmem>>, vector<8x512xf32>
    %18 = arith.truncf %14 : vector<8x1024xf32> to vector<8x1024xbf16>
    %cst_13 = arith.constant dense<0.000000e+00> : vector<8x512xf32>
    %19 = tpu.matmul %18, %16, %cst_13 {dimension_numbers = #tpu.dot_dimension_numbers<[1], [0], [0], [1], [0, 0, 1, 1], [], []>} : vector<8x1024xbf16>, vector<1024x512xbf16>, vector<8x512xf32> -> vector<8x512xf32>
    %20 = arith.addf %17, %19 : vector<8x512xf32>
    %c0_14 = arith.constant 0 : index
    %c0_15 = arith.constant 0 : index
    %21 = vector.load %arg13[%c0_14, %c0_15] : memref<8x512xf32, #tpu.memory_space<vmem>>, vector<8x512xf32>
    tpu.vector_store %arg13[%c0_14, %c0_15], %20 {strides = array<i32>} : memref<8x512xf32, #tpu.memory_space<vmem>>, vector<8x512xf32>,
    %c1_i32 = arith.constant 1 : i32
    %22 = arith.cmpi eq, %arg0, %c1_i32 : i32
    %23 = arith.extui %22 : i1 to i32
    %c0_i32_16 = arith.constant 0 : i32
    %24 = arith.cmpi ne, %23, %c0_i32_16 : i32
    scf.if %24 {
      %c0_17 = arith.constant 0 : index
      %c0_18 = arith.constant 0 : index
      %25 = vector.load %arg13[%c0_17, %c0_18] : memref<8x512xf32, #tpu.memory_space<vmem>>, vector<8x512xf32>
      %c0_19 = arith.constant 0 : index
      %c0_20 = arith.constant 0 : index
      %26 = vector.load %arg7[%c0_19, %c0_20] : memref<1x512xf32, #tpu.memory_space<vmem>>, vector<1x512xf32>
      %27 = vector.broadcast %26 : vector<1x512xf32> to vector<8x512xf32>
      %28 = arith.mulf %25, %27 : vector<8x512xf32>
      %c0_21 = arith.constant 0 : index
      %c0_22 = arith.constant 0 : index
      %29 = vector.load %arg8[%c0_21, %c0_22] : memref<1x512xf32, #tpu.memory_space<vmem>>, vector<1x512xf32>
      %30 = vector.broadcast %29 : vector<1x512xf32> to vector<8x512xf32>
      %31 = arith.addf %28, %30 : vector<8x512xf32>
      %cst_23 = arith.constant 0.000000e+00 : f32
      %32 = vector.broadcast %cst_23 : f32 to vector<8x512xf32>
      %33 = arith.maximumf %31, %32 : vector<8x512xf32>
      %c0_24 = arith.constant 0 : index
      %c0_25 = arith.constant 0 : index
      %34 = vector.load %arg9[%c0_24, %c0_25] : memref<1x512xf32, #tpu.memory_space<vmem>>, vector<1x512xf32>
      %35 = vector.broadcast %34 : vector<1x512xf32> to vector<8x512xf32>
      %36 = arith.mulf %33, %35 : vector<8x512xf32>
      %cst_26 = arith.constant dense<0.000000e+00> : vector<8xf32>
      %37 = vector.multi_reduction <add>, %36, %cst_26 [1] : vector<8x512xf32> to vector<8xf32>
      %38 = vector.shape_cast %37 : vector<8xf32> to vector<8x1xf32>
      %c0_27 = arith.constant 0 : index
      %c0_28 = arith.constant 0 : index
      %39 = vector.load %arg10[%c0_27, %c0_28] : memref<1x1xf32, #tpu.memory_space<vmem>>, vector<1x1xf32>
      %40 = vector.broadcast %39 : vector<1x1xf32> to vector<8x1xf32>
      %41 = arith.addf %38, %40 : vector<8x1xf32>
      %c0_29 = arith.constant 0 : index
      %c0_30 = arith.constant 0 : index
      %42 = vector.load %arg11[%c0_29, %c0_30] : memref<8x1xf32, #tpu.memory_space<vmem>>, vector<8x1xf32>
      tpu.vector_store %arg11[%c0_29, %c0_30], %41 {strides = array<i32>} : memref<8x1xf32, #tpu.memory_space<vmem>>, vector<8x1xf32>,
    } else {
    }
    return
  }
  func.func @transform_0(%arg0: i32) -> (i32, i32) {
    %c0_i32 = arith.constant 0 : i32
    %c0_i32_0 = arith.constant 0 : i32
    %c0_i32_1 = arith.constant 0 : i32
    return %c0_i32, %c0_i32_0 : i32, i32
  }
  func.func @transform_1(%arg0: i32) -> (i32, i32) {
    %c0_i32 = arith.constant 0 : i32
    %c0_i32_0 = arith.constant 0 : i32
    %c0_i32_1 = arith.constant 0 : i32
    return %c0_i32, %c0_i32_0 : i32, i32
  }
  func.func @transform_2(%arg0: i32) -> (i32, i32) {
    %c0_i32 = arith.constant 0 : i32
    %c0_i32_0 = arith.constant 0 : i32
    return %c0_i32, %arg0 : i32, i32
  }
  func.func @transform_3(%arg0: i32) -> (i32, i32) {
    %c0_i32 = arith.constant 0 : i32
    %c0_i32_0 = arith.constant 0 : i32
    return %c0_i32, %arg0 : i32, i32
  }
  func.func @transform_4(%arg0: i32) -> (i32, i32) {
    %c0_i32 = arith.constant 0 : i32
    %c0_i32_0 = arith.constant 0 : i32
    return %c0_i32, %arg0 : i32, i32
  }
  func.func @transform_5(%arg0: i32) -> (i32, i32) {
    %c0_i32 = arith.constant 0 : i32
    %c0_i32_0 = arith.constant 0 : i32
    return %arg0, %c0_i32 : i32, i32
  }
  func.func @transform_6(%arg0: i32) -> (i32, i32) {
    %c0_i32 = arith.constant 0 : i32
    %c0_i32_0 = arith.constant 0 : i32
    %c0_i32_1 = arith.constant 0 : i32
    return %c0_i32, %c0_i32_0 : i32, i32
  }
  func.func @transform_7(%arg0: i32) -> (i32, i32) {
    %c0_i32 = arith.constant 0 : i32
    %c0_i32_0 = arith.constant 0 : i32
    %c0_i32_1 = arith.constant 0 : i32
    return %c0_i32, %c0_i32_0 : i32, i32
  }
  func.func @transform_8(%arg0: i32) -> (i32, i32) {
    %c0_i32 = arith.constant 0 : i32
    %c0_i32_0 = arith.constant 0 : i32
    %c0_i32_1 = arith.constant 0 : i32
    return %c0_i32, %c0_i32_0 : i32, i32
  }
  func.func @transform_9(%arg0: i32) -> (i32, i32) {
    %c0_i32 = arith.constant 0 : i32
    %c0_i32_0 = arith.constant 0 : i32
    %c0_i32_1 = arith.constant 0 : i32
    return %c0_i32, %c0_i32_0 : i32, i32
  }
  func.func @transform_10(%arg0: i32) -> (i32, i32) {
    %c0_i32 = arith.constant 0 : i32
    %c0_i32_0 = arith.constant 0 : i32
    %c0_i32_1 = arith.constant 0 : i32
    return %c0_i32, %c0_i32_0 : i32, i32
  }
}

</mosaic_0001>

<llo_original>
// kernel: tpu_custom_call.1
$region0: #{tpu_custom_call.1}
  #allocation0 [shape = 'u32[]', space=smem, size = 0x4, offset = 0x4, fixed_abs, tag = 'smem constant byte address 0x4 - core index']
  #allocation1 [shape = 'u32[144,128]{1,0:T(1,128)}', space=vmem, size = 0x12000, scoped, tag = 'internal scratch']
  #allocation2 [shape = 'bf16[8,1280]{1,0:T(8,128)(2,1)}', space=vmem, size = 0x5000, scoped, tag = 'scratch operand']
  #allocation3 [shape = 'f32[8,512]{1,0:T(8,128)}', space=vmem, size = 0x4000, scoped, tag = 'scratch operand']
  #allocation4 [shape = 'f32[1,1]{1,0:T(1,128)S(1)}', space=vmem, size = 0x200, scoped, tag = 'scoped memory for tpu_custom_call.1']
  %s0 = inlined_call_operand.vmem [shape: f32[8,3], index: 0, kind: input, shape index: {}]
  %s1 = inlined_call_operand.hbm [shape: f32[3,1280], index: 1, kind: input, shape index: {}]
  %s2 = inlined_call_operand.hbm [shape: s8[1280,2048], index: 2, kind: input, shape index: {}]
  %s3 = inlined_call_operand.hbm [shape: f32[1,2048], index: 3, kind: input, shape index: {}]
  %s4 = inlined_call_operand.hbm [shape: f32[1,2048], index: 4, kind: input, shape index: {}]
  %s5 = inlined_call_operand.hbm [shape: s8[2048,512], index: 5, kind: input, shape index: {}]
  %s6 = inlined_call_operand.hbm [shape: f32[1,512], index: 6, kind: input, shape index: {}]
  %s7 = inlined_call_operand.hbm [shape: f32[1,512], index: 7, kind: input, shape index: {}]
  %s8 = inlined_call_operand.hbm [shape: f32[1,512], index: 8, kind: input, shape index: {}]
  %s9 = inlined_call_operand.<no memory space> [shape: f32[1,1], index: 9, kind: input, shape index: {}]
  %s10 = inlined_call_operand.vmem [shape: f32[8,1], index: 10, kind: output, shape index: {}]
  %s11 = sld [smem:[#allocation0]]
  $region113: #{tpu_custom_call.1} parent=0
    _
  %s13 = ssub.s32 1, %s11
  %s14 = scalar_select 0, %s13, %s11
  %v15 = vstv %s9
  %16 = vst [vmem:[#allocation4] sm:$0x1] %v15
  $region1: #{tpu_custom_call.1} parent=0
    #allocation5 [shape = 'u8[20480]{0}', space=vmem, size = 0x5000, scoped, tag = 'input window, operand 1, single buffered']
    #allocation6 [shape = 's32[2]{0}', space=sflag, size = 0x8, scoped, tag = 'scoped memory for tpu_custom_call.1']
    #allocation7 [shape = 'u8[2621440]{0}', space=vmem, size = 0x280000, scoped, tag = 'input window, operand 2']
    #allocation8 [shape = 's32[2]{0}', space=sflag, size = 0x8, scoped, tag = 'scoped memory for tpu_custom_call.1']
    #allocation9 [shape = 'u8[8192]{0}', space=vmem, size = 0x2000, scoped, tag = 'input window, operand 3']
    #allocation10 [shape = 'u8[8192]{0}', space=vmem, size = 0x2000, scoped, tag = 'input window, operand 4']
    #allocation11 [shape = 's32[2]{0}', space=sflag, size = 0x8, scoped, tag = 'scoped memory for tpu_custom_call.1']
    #allocation12 [shape = 'u8[1048576]{0}', space=vmem, size = 0x100000, scoped, tag = 'input window, operand 5']
    #allocation13 [shape = 'u8[2048]{0}', space=vmem, size = 0x800, scoped, tag = 'input window, operand 6, single buffered']
    #allocation14 [shape = 's32[1]{0}', space=sflag, size = 0x4, scoped, tag = 'scoped memory for tpu_custom_call.1']
    #allocation15 [shape = 'u8[2048]{0}', space=vmem, size = 0x800, scoped, tag = 'input window, operand 7, single buffered']
    #allocation16 [shape = 'u8[2048]{0}', space=vmem, size = 0x800, scoped, tag = 'input window, operand 8, single buffered']
    #allocation17 [shape = 's32[1]{0}', space=sflag, size = 0x4, scoped, tag = 'scoped memory for tpu_custom_call.1']
    %17 = vsyncpa [#allocation6], 0
    %18 = vsyncpa [#allocation8], 0
    %s19 = scalar_lea.sflag [#allocation8], 1
    %20 = vsyncpa %s19, 0
    %21 = vsyncpa [#allocation11], 0
    %s22 = scalar_lea.sflag [#allocation11], 1
    %23 = vsyncpa %s22, 0
    %24 = vsyncpa [#allocation14], 0
    %25 = vsyncpa [#allocation17], 0
    loop: start=0, step=1, limit=4
    $region2: #{tpu_custom_call.1} parent=1 // loop_pre_header
      _
    $region3: #{tpu_custom_call.1} parent=1 // loop_header
      %s27 = sphi 0, %s31
      %p28 = scmp.ge.s32.totalorder %s27, 4
      %s35 = sphi 0, %s35
      %s37 = sphi 0, %s35
      %s38 = sphi 0, %s37
      %s52 = sphi 0, %s38
      %s56 = sphi 0, %s56
      %s58 = sphi 0, %s56
      %s59 = sphi 0, %s58
      %s73 = sphi 0, %s59
      %s79 = sphi 0, %s81
      %s82 = sphi 0, %s79
      %s83 = sphi 0, %s82
      %s99 = sphi 0, %s83
      %s105 = sphi 0, %s107
      %s108 = sphi 0, %s105
      %s109 = sphi 0, %s108
      %s125 = sphi 0, %s109
      %s131 = sphi 0, %s133
      %s134 = sphi 0, %s131
      %s135 = sphi 0, %s134
      %s151 = sphi 0, %s135
      %s157 = sphi 0, %s159
      %s160 = sphi 0, %s157
      %s161 = sphi 0, %s160
      %s177 = sphi 0, %s161
      %s181 = sphi 0, %s181
      %s183 = sphi 0, %s181
      %s184 = sphi 0, %s183
      %s198 = sphi 0, %s184
      %s202 = sphi 0, %s202
      %s204 = sphi 0, %s202
      %s205 = sphi 0, %s204
      %s219 = sphi 0, %s205
      %s223 = sphi 0, %s223
      %s225 = sphi 0, %s223
      %s226 = sphi 0, %s225
      %s240 = sphi 0, %s226
      %s244 = sphi 0, %s244
      %s246 = sphi 0, %s244
      %s247 = sphi 0, %s246
      %s261 = sphi 0, %s247
      %s265 = sphi 0, %s265
      %s267 = sphi 0, %s265
      %s268 = sphi 0, %s267
      %s282 = sphi 0, %s268
    $region4: #{tpu_custom_call.1} parent=1 // loop_header_branch
      %30 = sbr.rel (%p28) target = $region8
    $region5: #{tpu_custom_call.1} parent=1 // loop_body
      %s32 = ssub.s32 %s27, 1
      %s33 = ssub.s32 %s27, 2
      %s34 = sadd.s32 %s27, 1
      %s36 = sadd.s32 %s35, 1
      %p39 = scmp.eq.s32.totalorder %s27, 1
      %p40 = scmp.ne.s32.totalorder %s35, %s37
      %p41 = scmp.eq.s32.totalorder %s27, 0
      %p42 = por %p40, %p41
      %p43 = scmp.ne.s32.totalorder %s35, %s37
      %p44 = scmp.eq.s32.totalorder %s32, 1
      %p45 = por %p43, %p44
      %p46 = scmp.ne.s32.totalorder %s37, %s38
      %p47 = scmp.eq.s32.totalorder %s32, 0
      %p48 = por %p46, %p47
      %p49 = scmp.ne.s32.totalorder %s37, %s38
      %p50 = scmp.eq.s32.totalorder %s33, 1
      %p51 = por %p49, %p50
      %p53 = scmp.ne.s32.totalorder %s38, %s52
      %p54 = scmp.eq.s32.totalorder %s33, 0
      %p55 = por %p53, %p54
      %s57 = sadd.s32 %s56, 1
      %p60 = scmp.eq.s32.totalorder %s27, 1
      %p61 = scmp.ne.s32.totalorder %s56, %s58
      %p62 = scmp.eq.s32.totalorder %s27, 0
      %p63 = por %p61, %p62
      %p64 = scmp.ne.s32.totalorder %s56, %s58
      %p65 = scmp.eq.s32.totalorder %s32, 1
      %p66 = por %p64, %p65
      %p67 = scmp.ne.s32.totalorder %s58, %s59
      %p68 = scmp.eq.s32.totalorder %s32, 0
      %p69 = por %p67, %p68
      %p70 = scmp.ne.s32.totalorder %s58, %s59
      %p71 = scmp.eq.s32.totalorder %s33, 1
      %p72 = por %p70, %p71
      %p74 = scmp.ne.s32.totalorder %s59, %s73
      %p75 = scmp.eq.s32.totalorder %s33, 0
      %p76 = por %p74, %p75
      %s77 = ssub.s32 %s27, %s34
      %p78 = scmp.eq.s32.totalorder %s77, 0
      %s80 = sadd.s32 %s79, 1
      %s81 = scalar_select %p78, %s79, %s80
      %p84 = pneg %p78
      %p85 = scmp.eq.s32.totalorder %s27, 1
      %p86 = por %p84, %p85
      %p87 = scmp.ne.s32.totalorder %s79, %s82
      %p88 = scmp.eq.s32.totalorder %s27, 0
      %p89 = por %p87, %p88
      %p90 = scmp.ne.s32.totalorder %s79, %s82
      %p91 = scmp.eq.s32.totalorder %s32, 1
      %p92 = por %p90, %p91
      %p93 = scmp.ne.s32.totalorder %s82, %s83
      %p94 = scmp.eq.s32.totalorder %s32, 0
      %p95 = por %p93, %p94
      %p96 = scmp.ne.s32.totalorder %s82, %s83
      %p97 = scmp.eq.s32.totalorder %s33, 1
      %p98 = por %p96, %p97
      %p100 = scmp.ne.s32.totalorder %s83, %s99
      %p101 = scmp.eq.s32.totalorder %s33, 0
      %p102 = por %p100, %p101
      %s103 = ssub.s32 %s27, %s34
      %p104 = scmp.eq.s32.totalorder %s103, 0
      %s106 = sadd.s32 %s105, 1
      %s107 = scalar_select %p104, %s105, %s106
      %p110 = pneg %p104
      %p111 = scmp.eq.s32.totalorder %s27, 1
      %p112 = por %p110, %p111
      %p113 = scmp.ne.s32.totalorder %s105, %s108
      %p114 = scmp.eq.s32.totalorder %s27, 0
      %p115 = por %p113, %p114
      %p116 = scmp.ne.s32.totalorder %s105, %s108
      %p117 = scmp.eq.s32.totalorder %s32, 1
      %p118 = por %p116, %p117
      %p119 = scmp.ne.s32.totalorder %s108, %s109
      %p120 = scmp.eq.s32.totalorder %s32, 0
      %p121 = por %p119, %p120
      %p122 = scmp.ne.s32.totalorder %s108, %s109
      %p123 = scmp.eq.s32.totalorder %s33, 1
      %p124 = por %p122, %p123
      %p126 = scmp.ne.s32.totalorder %s109, %s125
      %p127 = scmp.eq.s32.totalorder %s33, 0
      %p128 = por %p126, %p127
      %s129 = ssub.s32 %s27, %s34
      %p130 = scmp.eq.s32.totalorder %s129, 0
      %s132 = sadd.s32 %s131, 1
      %s133 = scalar_select %p130, %s131, %s132
      %p136 = pneg %p130
      %p137 = scmp.eq.s32.totalorder %s27, 1
      %p138 = por %p136, %p137
      %p139 = scmp.ne.s32.totalorder %s131, %s134
      %p140 = scmp.eq.s32.totalorder %s27, 0
      %p141 = por %p139, %p140
      %p142 = scmp.ne.s32.totalorder %s131, %s134
      %p143 = scmp.eq.s32.totalorder %s32, 1
      %p144 = por %p142, %p143
      %p145 = scmp.ne.s32.totalorder %s134, %s135
      %p146 = scmp.eq.s32.totalorder %s32, 0
      %p147 = por %p145, %p146
      %p148 = scmp.ne.s32.totalorder %s134, %s135
      %p149 = scmp.eq.s32.totalorder %s33, 1
      %p150 = por %p148, %p149
      %p152 = scmp.ne.s32.totalorder %s135, %s151
      %p153 = scmp.eq.s32.totalorder %s33, 0
      %p154 = por %p152, %p153
      %s155 = ssub.s32 %s27, %s34
      %p156 = scmp.eq.s32.totalorder %s155, 0
      %s158 = sadd.s32 %s157, 1
      %s159 = scalar_select %p156, %s157, %s158
      %p162 = pneg %p156
      %p163 = scmp.eq.s32.totalorder %s27, 1
      %p164 = por %p162, %p163
      %p165 = scmp.ne.s32.totalorder %s157, %s160
      %p166 = scmp.eq.s32.totalorder %s27, 0
      %p167 = por %p165, %p166
      %p168 = scmp.ne.s32.totalorder %s157, %s160
      %p169 = scmp.eq.s32.totalorder %s32, 1
      %p170 = por %p168, %p169
      %p171 = scmp.ne.s32.totalorder %s160, %s161
      %p172 = scmp.eq.s32.totalorder %s32, 0
      %p173 = por %p171, %p172
      %p174 = scmp.ne.s32.totalorder %s160, %s161
      %p175 = scmp.eq.s32.totalorder %s33, 1
      %p176 = por %p174, %p175
      %p178 = scmp.ne.s32.totalorder %s161, %s177
      %p179 = scmp.eq.s32.totalorder %s33, 0
      %p180 = por %p178, %p179
      %s182 = sadd.s32 %s181, 1
      %p185 = scmp.eq.s32.totalorder %s27, 1
      %p186 = scmp.ne.s32.totalorder %s181, %s183
      %p187 = scmp.eq.s32.totalorder %s27, 0
      %p188 = por %p186, %p187
      %p189 = scmp.ne.s32.totalorder %s181, %s183
      %p190 = scmp.eq.s32.totalorder %s32, 1
      %p191 = por %p189, %p190
      %p192 = scmp.ne.s32.totalorder %s183, %s184
      %p193 = scmp.eq.s32.totalorder %s32, 0
      %p194 = por %p192, %p193
      %p195 = scmp.ne.s32.totalorder %s183, %s184
      %p196 = scmp.eq.s32.totalorder %s33, 1
      %p197 = por %p195, %p196
      %p199 = scmp.ne.s32.totalorder %s184, %s198
      %p200 = scmp.eq.s32.totalorder %s33, 0
      %p201 = por %p199, %p200
      %s203 = sadd.s32 %s202, 1
      %p206 = scmp.eq.s32.totalorder %s27, 1
      %p207 = scmp.ne.s32.totalorder %s202, %s204
      %p208 = scmp.eq.s32.totalorder %s27, 0
      %p209 = por %p207, %p208
      %p210 = scmp.ne.s32.totalorder %s202, %s204
      %p211 = scmp.eq.s32.totalorder %s32, 1
      %p212 = por %p210, %p211
      %p213 = scmp.ne.s32.totalorder %s204, %s205
      %p214 = scmp.eq.s32.totalorder %s32, 0
      %p215 = por %p213, %p214
      %p216 = scmp.ne.s32.totalorder %s204, %s205
      %p217 = scmp.eq.s32.totalorder %s33, 1
      %p218 = por %p216, %p217
      %p220 = scmp.ne.s32.totalorder %s205, %s219
      %p221 = scmp.eq.s32.totalorder %s33, 0
      %p222 = por %p220, %p221
      %s224 = sadd.s32 %s223, 1
      %p227 = scmp.eq.s32.totalorder %s27, 1
      %p228 = scmp.ne.s32.totalorder %s223, %s225
      %p229 = scmp.eq.s32.totalorder %s27, 0
      %p230 = por %p228, %p229
      %p231 = scmp.ne.s32.totalorder %s223, %s225
      %p232 = scmp.eq.s32.totalorder %s32, 1
      %p233 = por %p231, %p232
      %p234 = scmp.ne.s32.totalorder %s225, %s226
      %p235 = scmp.eq.s32.totalorder %s32, 0
      %p236 = por %p234, %p235
      %p237 = scmp.ne.s32.totalorder %s225, %s226
      %p238 = scmp.eq.s32.totalorder %s33, 1
      %p239 = por %p237, %p238
      %p241 = scmp.ne.s32.totalorder %s226, %s240
      %p242 = scmp.eq.s32.totalorder %s33, 0
      %p243 = por %p241, %p242
      %s245 = sadd.s32 %s244, 1
      %p248 = scmp.eq.s32.totalorder %s27, 1
      %p249 = scmp.ne.s32.totalorder %s244, %s246
      %p250 = scmp.eq.s32.totalorder %s27, 0
      %p251 = por %p249, %p250
      %p252 = scmp.ne.s32.totalorder %s244, %s246
      %p253 = scmp.eq.s32.totalorder %s32, 1
      %p254 = por %p252, %p253
      %p255 = scmp.ne.s32.totalorder %s246, %s247
      %p256 = scmp.eq.s32.totalorder %s32, 0
      %p257 = por %p255, %p256
      %p258 = scmp.ne.s32.totalorder %s246, %s247
      %p259 = scmp.eq.s32.totalorder %s33, 1
      %p260 = por %p258, %p259
      %p262 = scmp.ne.s32.totalorder %s247, %s261
      %p263 = scmp.eq.s32.totalorder %s33, 0
      %p264 = por %p262, %p263
      %s266 = sadd.s32 %s265, 1
      %p269 = scmp.eq.s32.totalorder %s27, 1
      %p270 = scmp.ne.s32.totalorder %s265, %s267
      %p271 = scmp.eq.s32.totalorder %s27, 0
      %p272 = por %p270, %p271
      %p273 = scmp.ne.s32.totalorder %s265, %s267
      %p274 = scmp.eq.s32.totalorder %s32, 1
      %p275 = por %p273, %p274
      %p276 = scmp.ne.s32.totalorder %s267, %s268
      %p277 = scmp.eq.s32.totalorder %s32, 0
      %p278 = por %p276, %p277
      %p279 = scmp.ne.s32.totalorder %s267, %s268
      %p280 = scmp.eq.s32.totalorder %s33, 1
      %p281 = por %p279, %p280
      %p283 = scmp.ne.s32.totalorder %s268, %s282
      %p284 = scmp.eq.s32.totalorder %s33, 0
      %p285 = por %p283, %p284
      %p286 = scmp.le.s32.totalorder 1, %s27
      %p287 = scmp.lt.s32.totalorder %s27, 3
      %p288 = pnand %p286, %p287
      %p289 = pneg %p288
      // Predicated region
      $region9: #{tpu_custom_call.1} parent=5 // pred_check
        _
      $region10: #{tpu_custom_call.1} parent=5 // pred_check_branch
        %291 = sbr.rel (%p288) target = $region12
      $region11: #{tpu_custom_call.1} parent=5 // pred_region
        %s292 = ssub.s32 %s27, 1
        // Predicated region
        $region13: #{tpu_custom_call.1} parent=11 // pred_check
          %p293 = pneg %p48
        $region14: #{tpu_custom_call.1} parent=11 // pred_check_branch
          %295 = sbr.rel (%p293) target = $region16
        $region15: #{tpu_custom_call.1} parent=11 // pred_region
          _
        $region16: #{tpu_custom_call.1} parent=11 // pred_fallthru
          _
        // Predicated region
        $region17: #{tpu_custom_call.1} parent=11 // pred_check
          %p296 = pneg %p69
        $region18: #{tpu_custom_call.1} parent=11 // pred_check_branch
          %298 = sbr.rel (%p296) target = $region20
        $region19: #{tpu_custom_call.1} parent=11 // pred_region
          %s300 = ssub.s32 640, 640
          %301 = vsyncadd [#allocation6], %s300
          %s303 = sshll.u32 [#allocation5], 4
          %s304 = int_to_ptr.vmem [resolvable:$true] %s303
          %306 = dma.hbm_to_vmem [thread:$0]  %s1, 640, %s304, [#allocation6]
        $region20: #{tpu_custom_call.1} parent=11 // pred_fallthru
          _
        // Predicated region
        $region21: #{tpu_custom_call.1} parent=11 // pred_check
          %p307 = pneg %p194
        $region22: #{tpu_custom_call.1} parent=11 // pred_check_branch
          %309 = sbr.rel (%p307) target = $region24
        $region23: #{tpu_custom_call.1} parent=11 // pred_region
          %s311 = ssub.s32 64, 64
          %312 = vsyncadd [#allocation14], %s311
          %s314 = sshll.u32 [#allocation13], 4
          %s315 = int_to_ptr.vmem [resolvable:$true] %s314
          %317 = dma.hbm_to_vmem [thread:$0]  %s6, 64, %s315, [#allocation14]
        $region24: #{tpu_custom_call.1} parent=11 // pred_fallthru
          _
        // Predicated region
        $region25: #{tpu_custom_call.1} parent=11 // pred_check
          %p318 = pneg %p215
        $region26: #{tpu_custom_call.1} parent=11 // pred_check_branch
          %320 = sbr.rel (%p318) target = $region28
        $region27: #{tpu_custom_call.1} parent=11 // pred_region
          %s322 = ssub.s32 64, 64
          %323 = vsyncadd [#allocation14], %s322
          %s325 = sshll.u32 [#allocation15], 4
          %s326 = int_to_ptr.vmem [resolvable:$true] %s325
          %328 = dma.hbm_to_vmem [thread:$0]  %s7, 64, %s326, [#allocation14]
        $region28: #{tpu_custom_call.1} parent=11 // pred_fallthru
          _
        // Predicated region
        $region29: #{tpu_custom_call.1} parent=11 // pred_check
          %p329 = pneg %p236
        $region30: #{tpu_custom_call.1} parent=11 // pred_check_branch
          %331 = sbr.rel (%p329) target = $region32
        $region31: #{tpu_custom_call.1} parent=11 // pred_region
          %s333 = ssub.s32 64, 64
          %334 = vsyncadd [#allocation17], %s333
          %s336 = sshll.u32 [#allocation16], 4
          %s337 = int_to_ptr.vmem [resolvable:$true] %s336
          %339 = dma.hbm_to_vmem [thread:$0]  %s8, 64, %s337, [#allocation17]
        $region32: #{tpu_custom_call.1} parent=11 // pred_fallthru
          _
        // Predicated region
        $region33: #{tpu_custom_call.1} parent=11 // pred_check
          %p340 = pneg %p257
        $region34: #{tpu_custom_call.1} parent=11 // pred_check_branch
          %342 = sbr.rel (%p340) target = $region36
        $region35: #{tpu_custom_call.1} parent=11 // pred_region
          _
        $region36: #{tpu_custom_call.1} parent=11 // pred_fallthru
          _
      $region12: #{tpu_custom_call.1} parent=5 // pred_fallthru
        _
      %p343 = scmp.lt.s32.totalorder %s27, 2
      // Predicated region
      $region37: #{tpu_custom_call.1} parent=5 // pred_check
        %p344 = pneg %p343
      $region38: #{tpu_custom_call.1} parent=5 // pred_check_branch
        %346 = sbr.rel (%p344) target = $region40
      $region39: #{tpu_custom_call.1} parent=5 // pred_region
        // Predicated region
        $region41: #{tpu_custom_call.1} parent=39 // pred_check
          %p347 = pneg %p89
        $region42: #{tpu_custom_call.1} parent=39 // pred_check_branch
          %349 = sbr.rel (%p347) target = $region44
        $region43: #{tpu_custom_call.1} parent=39 // pred_region
          %s350 = sand.u32 %s27, 1
          %s351 = scalar_lea.sflag [#allocation8], %s350
          %s352 = sand.u32 %s79, 1
          %s353 = smul.addr %s352, 2560
          %s354 = scalar_lea.vmem [#allocation7], %s353
          %s355 = smul.u32 8, %s27
          %s357 = ssub.s32 40960, 40960
          %358 = vsyncadd %s351, %s357
          %s359 = smul.addr %s355, 128
          %s360 = scalar_lea.hbm %s2, %s359
          %s361 = sshll.u32 %s354, 4
          %s362 = int_to_ptr.vmem [resolvable:$true] %s361
          %367 = dma.hbm_to_vmem [thread:$0]  %s360, 40960, %s362, %s351, 2048, 1024, 64
        $region44: #{tpu_custom_call.1} parent=39 // pred_fallthru
          _
        // Predicated region
        $region45: #{tpu_custom_call.1} parent=39 // pred_check
          %p368 = pneg %p115
        $region46: #{tpu_custom_call.1} parent=39 // pred_check_branch
          %370 = sbr.rel (%p368) target = $region48
        $region47: #{tpu_custom_call.1} parent=39 // pred_region
          %s371 = sand.u32 %s27, 1
          %s372 = scalar_lea.sflag [#allocation8], %s371
          %s373 = sand.u32 %s105, 1
          %s374 = smul.addr %s373, 8
          %s375 = scalar_lea.vmem [#allocation9], %s374
          %s376 = smul.u32 8, %s27
          %s378 = ssub.s32 128, 128
          %379 = vsyncadd %s372, %s378
          %s380 = smul.addr %s376, 16
          %s381 = scalar_lea.hbm %s3, %s380
          %s383 = sshll.u32 %s375, 4
          %s384 = int_to_ptr.vmem [resolvable:$true] %s383
          %386 = dma.hbm_to_vmem [thread:$0]  %s381, 128, %s384, %s372
        $region48: #{tpu_custom_call.1} parent=39 // pred_fallthru
          _
        // Predicated region
        $region49: #{tpu_custom_call.1} parent=39 // pred_check
          %p387 = pneg %p141
        $region50: #{tpu_custom_call.1} parent=39 // pred_check_branch
          %389 = sbr.rel (%p387) target = $region52
        $region51: #{tpu_custom_call.1} parent=39 // pred_region
          %s390 = sand.u32 %s27, 1
          %s391 = scalar_lea.sflag [#allocation11], %s390
          %s392 = sand.u32 %s131, 1
          %s393 = smul.addr %s392, 8
          %s394 = scalar_lea.vmem [#allocation10], %s393
          %s395 = smul.u32 8, %s27
          %s397 = ssub.s32 128, 128
          %398 = vsyncadd %s391, %s397
          %s399 = smul.addr %s395, 16
          %s400 = scalar_lea.hbm %s4, %s399
          %s402 = sshll.u32 %s394, 4
          %s403 = int_to_ptr.vmem [resolvable:$true] %s402
          %405 = dma.hbm_to_vmem [thread:$0]  %s400, 128, %s403, %s391
        $region52: #{tpu_custom_call.1} parent=39 // pred_fallthru
          _
        // Predicated region
        $region53: #{tpu_custom_call.1} parent=39 // pred_check
          %p406 = pneg %p167
        $region54: #{tpu_custom_call.1} parent=39 // pred_check_branch
          %408 = sbr.rel (%p406) target = $region56
        $region55: #{tpu_custom_call.1} parent=39 // pred_region
          %s409 = sand.u32 %s27, 1
          %s410 = scalar_lea.sflag [#allocation11], %s409
          %s411 = sand.u32 %s157, 1
          %s412 = smul.addr %s411, 1024
          %s413 = scalar_lea.vmem [#allocation12], %s412
          %s414 = smul.u32 32, %s27
          %s416 = ssub.s32 16384, 16384
          %417 = vsyncadd %s410, %s416
          %s418 = smul.addr %s414, 4
          %s419 = smul.addr %s418, 128
          %s420 = scalar_lea.hbm %s5, %s419
          %s421 = sshll.u32 %s413, 4
          %s422 = int_to_ptr.vmem [resolvable:$true] %s421
          %427 = dma.hbm_to_vmem [thread:$0]  %s420, 16384, %s422, %s410, 512, 512, 32
        $region56: #{tpu_custom_call.1} parent=39 // pred_fallthru
          _
      $region40: #{tpu_custom_call.1} parent=5 // pred_fallthru
        _
      %p428 = scmp.le.s32.totalorder 1, %s27
      %p429 = scmp.lt.s32.totalorder %s27, 3
      %p430 = pnand %p428, %p429
      %p431 = pneg %p430
      // Predicated region
      $region57: #{tpu_custom_call.1} parent=5 // pred_check
        _
      $region58: #{tpu_custom_call.1} parent=5 // pred_check_branch
        %433 = sbr.rel (%p430) target = $region60
      $region59: #{tpu_custom_call.1} parent=5 // pred_region
        %s434 = ssub.s32 %s27, 1
        // Predicated region
        $region61: #{tpu_custom_call.1} parent=59 // pred_check
          %p435 = pneg %p69
        $region62: #{tpu_custom_call.1} parent=59 // pred_check_branch
          %437 = sbr.rel (%p435) target = $region64
        $region63: #{tpu_custom_call.1} parent=59 // pred_region
          %438 = dma.done [#allocation6], 640
        $region64: #{tpu_custom_call.1} parent=59 // pred_fallthru
          _
        %s439 = sand.u32 %s32, 1
        %s440 = scalar_lea.sflag [#allocation8], %s439
        %s441 = sand.u32 %s82, 1
        %s442 = smul.addr %s441, 2560
        %s443 = scalar_lea.vmem [#allocation7], %s442
        // Predicated region
        $region65: #{tpu_custom_call.1} parent=59 // pred_check
          %p444 = pneg %p95
        $region66: #{tpu_custom_call.1} parent=59 // pred_check_branch
          %446 = sbr.rel (%p444) target = $region68
        $region67: #{tpu_custom_call.1} parent=59 // pred_region
          %447 = dma.done %s440, 40960
        $region68: #{tpu_custom_call.1} parent=59 // pred_fallthru
          _
        %s448 = sand.u32 %s32, 1
        %s449 = scalar_lea.sflag [#allocation8], %s448
        %s450 = sand.u32 %s108, 1
        %s451 = smul.addr %s450, 8
        %s452 = scalar_lea.vmem [#allocation9], %s451
        // Predicated region
        $region69: #{tpu_custom_call.1} parent=59 // pred_check
          %p453 = pneg %p121
        $region70: #{tpu_custom_call.1} parent=59 // pred_check_branch
          %455 = sbr.rel (%p453) target = $region72
        $region71: #{tpu_custom_call.1} parent=59 // pred_region
          %456 = dma.done %s449, 128
        $region72: #{tpu_custom_call.1} parent=59 // pred_fallthru
          _
        %s457 = sand.u32 %s32, 1
        %s458 = scalar_lea.sflag [#allocation11], %s457
        %s459 = sand.u32 %s134, 1
        %s460 = smul.addr %s459, 8
        %s461 = scalar_lea.vmem [#allocation10], %s460
        // Predicated region
        $region73: #{tpu_custom_call.1} parent=59 // pred_check
          %p462 = pneg %p147
        $region74: #{tpu_custom_call.1} parent=59 // pred_check_branch
          %464 = sbr.rel (%p462) target = $region76
        $region75: #{tpu_custom_call.1} parent=59 // pred_region
          %465 = dma.done %s458, 128
        $region76: #{tpu_custom_call.1} parent=59 // pred_fallthru
          _
        %s466 = sand.u32 %s32, 1
        %s467 = scalar_lea.sflag [#allocation11], %s466
        %s468 = sand.u32 %s160, 1
        %s469 = smul.addr %s468, 1024
        %s470 = scalar_lea.vmem [#allocation12], %s469
        // Predicated region
        $region77: #{tpu_custom_call.1} parent=59 // pred_check
          %p471 = pneg %p173
        $region78: #{tpu_custom_call.1} parent=59 // pred_check_branch
          %473 = sbr.rel (%p471) target = $region80
        $region79: #{tpu_custom_call.1} parent=59 // pred_region
          %474 = dma.done %s467, 16384
        $region80: #{tpu_custom_call.1} parent=59 // pred_fallthru
          _
        // Predicated region
        $region81: #{tpu_custom_call.1} parent=59 // pred_check
          %p475 = pneg %p194
        $region82: #{tpu_custom_call.1} parent=59 // pred_check_branch
          %477 = sbr.rel (%p475) target = $region84
        $region83: #{tpu_custom_call.1} parent=59 // pred_region
          %478 = dma.done [#allocation14], 64
        $region84: #{tpu_custom_call.1} parent=59 // pred_fallthru
          _
        // Predicated region
        $region85: #{tpu_custom_call.1} parent=59 // pred_check
          %p479 = pneg %p215
        $region86: #{tpu_custom_call.1} parent=59 // pred_check_branch
          %481 = sbr.rel (%p479) target = $region88
        $region87: #{tpu_custom_call.1} parent=59 // pred_region
          %482 = dma.done [#allocation14], 64
        $region88: #{tpu_custom_call.1} parent=59 // pred_fallthru
          _
        // Predicated region
        $region89: #{tpu_custom_call.1} parent=59 // pred_check
          %p483 = pneg %p236
        $region90: #{tpu_custom_call.1} parent=59 // pred_check_branch
          %485 = sbr.rel (%p483) target = $region92
        $region91: #{tpu_custom_call.1} parent=59 // pred_region
          %486 = dma.done [#allocation17], 64
        $region92: #{tpu_custom_call.1} parent=59 // pred_fallthru
          _
        %p487 = pneg %p48
        %p488 = pneg %p45
        %p489 = pneg %p69
        %p490 = pneg %p66
        %s491 = sand.u32 %s32, 1
        %s492 = scalar_lea.sflag [#allocation8], %s491
        %s493 = sand.u32 %s82, 1
        %s494 = smul.addr %s493, 2560
        %s495 = scalar_lea.vmem [#allocation7], %s494
        %p496 = pneg %p95
        %p497 = pneg %p92
        %s498 = sand.u32 %s32, 1
        %s499 = scalar_lea.sflag [#allocation8], %s498
        %s500 = sand.u32 %s108, 1
        %s501 = smul.addr %s500, 8
        %s502 = scalar_lea.vmem [#allocation9], %s501
        %p503 = pneg %p121
        %p504 = pneg %p118
        %s505 = sand.u32 %s32, 1
        %s506 = scalar_lea.sflag [#allocation11], %s505
        %s507 = sand.u32 %s134, 1
        %s508 = smul.addr %s507, 8
        %s509 = scalar_lea.vmem [#allocation10], %s508
        %p510 = pneg %p147
        %p511 = pneg %p144
        %s512 = sand.u32 %s32, 1
        %s513 = scalar_lea.sflag [#allocation11], %s512
        %s514 = sand.u32 %s160, 1
        %s515 = smul.addr %s514, 1024
        %s516 = scalar_lea.vmem [#allocation12], %s515
        %p517 = pneg %p173
        %p518 = pneg %p170
        %p519 = pneg %p194
        %p520 = pneg %p191
        %p521 = pneg %p215
        %p522 = pneg %p212
        %p523 = pneg %p236
        %p524 = pneg %p233
        %p525 = pneg %p257
        %p526 = pneg %p254
        %p527 = pneg %p278
        %p528 = pneg %p275
        %s529 = smul.u32 8, %s32
        %s530 = smul.u32 8, %s32
        %s531 = smul.u32 8, %s32
        %s532 = smul.u32 32, %s32
        %p533 = scmp.eq.s32.totalorder %s32, 0
        // Predicated region
        $region93: #{tpu_custom_call.1} parent=59 // pred_check
          %p534 = pneg %p533
        $region94: #{tpu_custom_call.1} parent=59 // pred_check_branch
          %536 = sbr.rel (%p534) target = $region96
        $region95: #{tpu_custom_call.1} parent=59 // pred_region
          %v537 = vld [vmem:[%s0] sm:$0xff]
          %v538 = vld [vmem:[#allocation5] sm:$0x77]
          %v539 = vld [vmem:[#allocation5 + $0x8] sm:$0x77]
          %v540 = vld [vmem:[#allocation5 + $0x10] sm:$0x77]
          %v541 = vld [vmem:[#allocation5 + $0x18] sm:$0x77]
          %v542 = vld [vmem:[#allocation5 + $0x20] sm:$0x77]
          %v548 = vcombine.high %v538, %v538
          %v549 = vcombine.high %v539, %v539
          %v550 = vcombine.high %v540, %v540
          %v551 = vcombine.high %v541, %v541
          %v552 = vcombine.high %v542, %v542
          %vm553 = vcmask 23552
          %v555 = vsel %vm553, %v537, 0
          %vm557 = vcmask 1042432
          %v558 = vsel %vm557, %v538, 0
          %v560 = vsel %vm557, %v548, 0
          %v562 = vsel %vm557, %v539, 0
          %v564 = vsel %vm557, %v549, 0
          %v566 = vsel %vm557, %v540, 0
          %v568 = vsel %vm557, %v550, 0
          %v570 = vsel %vm557, %v541, 0
          %v572 = vsel %vm557, %v551, 0
          %v574 = vsel %vm557, %v542, 0
          %v576 = vsel %vm557, %v552, 0
          %578 = vmatprep.subr.mxu0 0.0
          %579 = vmatpush1.msra.mxu0 0.0
          %580 = vmatprep.subr.mxu0 0.0
          %581 = vmatpush1.msra.mxu0 0.0
          %582 = vmatprep.subr.mxu0 0.0
          %583 = vmatpush1.msra.mxu0 0.0
          %584 = vmatprep.subr.mxu0 0.0
          %585 = vmatpush1.msra.mxu0 0.0
          %586 = vmatprep.subr.mxu0 0.0
          %587 = vmatpush1.msra.mxu0 0.0
          %588 = vmatprep.subr.mxu0 0.0
          %589 = vmatpush1.msra.mxu0 0.0
          %590 = vmatprep.subr.mxu0 0.0
          %591 = vmatpush1.msra.mxu0 0.0
          %592 = vmatprep.subr.mxu0 0.0
          %593 = vmatpush1.msra.mxu0 0.0
          %594 = vmatprep.subr.mxu0 0.0
          %595 = vmatpush1.msra.mxu0 0.0
          %596 = vmatprep.subr.mxu0 0.0
          %597 = vmatpush1.msra.mxu0 0.0
          %598 = vmatprep.subr.mxu0 0.0
          %599 = vmatpush1.msra.mxu0 0.0
          %600 = vmatprep.subr.mxu0 0.0
          %601 = vmatpush1.msra.mxu0 0.0
          %602 = vmatprep.subr.mxu0 0.0
          %603 = vmatpush1.msra.mxu0 0.0
          %604 = vmatprep.subr.mxu0 0.0
          %605 = vmatpush1.msra.mxu0 0.0
          %606 = vmatprep.subr.mxu0 0.0
          %607 = vmatpush1.msra.mxu0 0.0
          %608 = vmatprep.subr.mxu0 %v560
          %609 = vmatpush1.msra.mxu0 %v558
          %610 = vmatprep.subr.mxu0 0.0
          %611 = vmatpush2.msra.mxu0 0.0
          %612 = vmatprep.subr.mxu0 0.0
          %613 = vmatpush2.msra.mxu0 0.0
          %614 = vmatprep.subr.mxu0 0.0
          %615 = vmatpush2.msra.mxu0 0.0
          %616 = vmatprep.subr.mxu0 0.0
          %617 = vmatpush2.msra.mxu0 0.0
          %618 = vmatprep.subr.mxu0 0.0
          %619 = vmatpush2.msra.mxu0 0.0
          %620 = vmatprep.subr.mxu0 0.0
          %621 = vmatpush2.msra.mxu0 0.0
          %622 = vmatprep.subr.mxu0 0.0
          %623 = vmatpush2.msra.mxu0 0.0
          %624 = vmatprep.subr.mxu0 0.0
          %625 = vmatpush2.msra.mxu0 0.0
          %626 = vmatprep.subr.mxu0 0.0
          %627 = vmatpush2.msra.mxu0 0.0
          %628 = vmatprep.subr.mxu0 0.0
          %629 = vmatpush2.msra.mxu0 0.0
          %630 = vmatprep.subr.mxu0 0.0
          %631 = vmatpush2.msra.mxu0 0.0
          %632 = vmatprep.subr.mxu0 0.0
          %633 = vmatpush2.msra.mxu0 0.0
          %634 = vmatprep.subr.mxu0 0.0
          %635 = vmatpush2.msra.mxu0 0.0
          %636 = vmatprep.subr.mxu0 0.0
          %637 = vmatpush2.msra.mxu0 0.0
          %638 = vmatprep.subr.mxu0 0.0
          %639 = vmatpush2.msra.mxu0 0.0
          %640 = vmatprep.subr.mxu0 0.0
          %641 = vmatpush2.msra.mxu0 0.0
          %642 = vmatprep.mubr.f32.mxu0 0.0
          %643 = vmatmul.mubr.f32.gmra.mxu0 %v555
          %v644 = vpop.f32.mrf.mxu0
          %v645 = vadd.f32 0.0, %v644
          %v646 = vpop.f32.mrf.mxu0
          %v647 = vadd.f32 0.0, %v646
          %648 = vdwg.mxu0
          %649 = vmatprep.subr.mxu0 0.0
          %650 = vmatpush1.msra.mxu0 0.0
          %651 = vmatprep.subr.mxu0 0.0
          %652 = vmatpush1.msra.mxu0 0.0
          %653 = vmatprep.subr.mxu0 0.0
          %654 = vmatpush1.msra.mxu0 0.0
          %655 = vmatprep.subr.mxu0 0.0
          %656 = vmatpush1.msra.mxu0 0.0
          %657 = vmatprep.subr.mxu0 0.0
          %658 = vmatpush1.msra.mxu0 0.0
          %659 = vmatprep.subr.mxu0 0.0
          %660 = vmatpush1.msra.mxu0 0.0
          %661 = vmatprep.subr.mxu0 0.0
          %662 = vmatpush1.msra.mxu0 0.0
          %663 = vmatprep.subr.mxu0 0.0
          %664 = vmatpush1.msra.mxu0 0.0
          %665 = vmatprep.subr.mxu0 0.0
          %666 = vmatpush1.msra.mxu0 0.0
          %667 = vmatprep.subr.mxu0 0.0
          %668 = vmatpush1.msra.mxu0 0.0
          %669 = vmatprep.subr.mxu0 0.0
          %670 = vmatpush1.msra.mxu0 0.0
          %671 = vmatprep.subr.mxu0 0.0
          %672 = vmatpush1.msra.mxu0 0.0
          %673 = vmatprep.subr.mxu0 0.0
          %674 = vmatpush1.msra.mxu0 0.0
          %675 = vmatprep.subr.mxu0 0.0
          %676 = vmatpush1.msra.mxu0 0.0
          %677 = vmatprep.subr.mxu0 0.0
          %678 = vmatpush1.msra.mxu0 0.0
          %679 = vmatprep.subr.mxu0 %v564
          %680 = vmatpush1.msra.mxu0 %v562
          %681 = vmatprep.subr.mxu0 0.0
          %682 = vmatpush2.msra.mxu0 0.0
          %683 = vmatprep.subr.mxu0 0.0
          %684 = vmatpush2.msra.mxu0 0.0
          %685 = vmatprep.subr.mxu0 0.0
          %686 = vmatpush2.msra.mxu0 0.0
          %687 = vmatprep.subr.mxu0 0.0
          %688 = vmatpush2.msra.mxu0 0.0
          %689 = vmatprep.subr.mxu0 0.0
          %690 = vmatpush2.msra.mxu0 0.0
          %691 = vmatprep.subr.mxu0 0.0
          %692 = vmatpush2.msra.mxu0 0.0
          %693 = vmatprep.subr.mxu0 0.0
          %694 = vmatpush2.msra.mxu0 0.0
          %695 = vmatprep.subr.mxu0 0.0
          %696 = vmatpush2.msra.mxu0 0.0
          %697 = vmatprep.subr.mxu0 0.0
          %698 = vmatpush2.msra.mxu0 0.0
          %699 = vmatprep.subr.mxu0 0.0
          %700 = vmatpush2.msra.mxu0 0.0
          %701 = vmatprep.subr.mxu0 0.0
          %702 = vmatpush2.msra.mxu0 0.0
          %703 = vmatprep.subr.mxu0 0.0
          %704 = vmatpush2.msra.mxu0 0.0
          %705 = vmatprep.subr.mxu0 0.0
          %706 = vmatpush2.msra.mxu0 0.0
          %707 = vmatprep.subr.mxu0 0.0
          %708 = vmatpush2.msra.mxu0 0.0
          %709 = vmatprep.subr.mxu0 0.0
          %710 = vmatpush2.msra.mxu0 0.0
          %711 = vmatprep.subr.mxu0 0.0
          %712 = vmatpush2.msra.mxu0 0.0
          %713 = vmatprep.mubr.f32.mxu0 0.0
          %714 = vmatmul.mubr.f32.gmra.mxu0 %v555
          %v715 = vpop.f32.mrf.mxu0
          %v716 = vadd.f32 0.0, %v715
          %v717 = vpop.f32.mrf.mxu0
          %v718 = vadd.f32 0.0, %v717
          %719 = vdwg.mxu0
          %720 = vmatprep.subr.mxu0 0.0
          %721 = vmatpush1.msra.mxu0 0.0
          %722 = vmatprep.subr.mxu0 0.0
          %723 = vmatpush1.msra.mxu0 0.0
          %724 = vmatprep.subr.mxu0 0.0
          %725 = vmatpush1.msra.mxu0 0.0
          %726 = vmatprep.subr.mxu0 0.0
          %727 = vmatpush1.msra.mxu0 0.0
          %728 = vmatprep.subr.mxu0 0.0
          %729 = vmatpush1.msra.mxu0 0.0
          %730 = vmatprep.subr.mxu0 0.0
          %731 = vmatpush1.msra.mxu0 0.0
          %732 = vmatprep.subr.mxu0 0.0
          %733 = vmatpush1.msra.mxu0 0.0
          %734 = vmatprep.subr.mxu0 0.0
          %735 = vmatpush1.msra.mxu0 0.0
          %736 = vmatprep.subr.mxu0 0.0
          %737 = vmatpush1.msra.mxu0 0.0
          %738 = vmatprep.subr.mxu0 0.0
          %739 = vmatpush1.msra.mxu0 0.0
          %740 = vmatprep.subr.mxu0 0.0
          %741 = vmatpush1.msra.mxu0 0.0
          %742 = vmatprep.subr.mxu0 0.0
          %743 = vmatpush1.msra.mxu0 0.0
          %744 = vmatprep.subr.mxu0 0.0
          %745 = vmatpush1.msra.mxu0 0.0
          %746 = vmatprep.subr.mxu0 0.0
          %747 = vmatpush1.msra.mxu0 0.0
          %748 = vmatprep.subr.mxu0 0.0
          %749 = vmatpush1.msra.mxu0 0.0
          %750 = vmatprep.subr.mxu0 %v568
          %751 = vmatpush1.msra.mxu0 %v566
          %752 = vmatprep.subr.mxu0 0.0
          %753 = vmatpush2.msra.mxu0 0.0
          %754 = vmatprep.subr.mxu0 0.0
          %755 = vmatpush2.msra.mxu0 0.0
          %756 = vmatprep.subr.mxu0 0.0
          %757 = vmatpush2.msra.mxu0 0.0
          %758 = vmatprep.subr.mxu0 0.0
          %759 = vmatpush2.msra.mxu0 0.0
          %760 = vmatprep.subr.mxu0 0.0
          %761 = vmatpush2.msra.mxu0 0.0
          %762 = vmatprep.subr.mxu0 0.0
          %763 = vmatpush2.msra.mxu0 0.0
          %764 = vmatprep.subr.mxu0 0.0
          %765 = vmatpush2.msra.mxu0 0.0
          %766 = vmatprep.subr.mxu0 0.0
          %767 = vmatpush2.msra.mxu0 0.0
          %768 = vmatprep.subr.mxu0 0.0
          %769 = vmatpush2.msra.mxu0 0.0
          %770 = vmatprep.subr.mxu0 0.0
          %771 = vmatpush2.msra.mxu0 0.0
          %772 = vmatprep.subr.mxu0 0.0
          %773 = vmatpush2.msra.mxu0 0.0
          %774 = vmatprep.subr.mxu0 0.0
          %775 = vmatpush2.msra.mxu0 0.0
          %776 = vmatprep.subr.mxu0 0.0
          %777 = vmatpush2.msra.mxu0 0.0
          %778 = vmatprep.subr.mxu0 0.0
          %779 = vmatpush2.msra.mxu0 0.0
          %780 = vmatprep.subr.mxu0 0.0
          %781 = vmatpush2.msra.mxu0 0.0
          %782 = vmatprep.subr.mxu0 0.0
          %783 = vmatpush2.msra.mxu0 0.0
          %784 = vmatprep.mubr.f32.mxu0 0.0
          %785 = vmatmul.mubr.f32.gmra.mxu0 %v555
          %v786 = vpop.f32.mrf.mxu0
          %v787 = vadd.f32 0.0, %v786
          %v788 = vpop.f32.mrf.mxu0
          %v789 = vadd.f32 0.0, %v788
          %790 = vdwg.mxu0
          %791 = vmatprep.subr.mxu0 0.0
          %792 = vmatpush1.msra.mxu0 0.0
          %793 = vmatprep.subr.mxu0 0.0
          %794 = vmatpush1.msra.mxu0 0.0
          %795 = vmatprep.subr.mxu0 0.0
          %796 = vmatpush1.msra.mxu0 0.0
          %797 = vmatprep.subr.mxu0 0.0
          %798 = vmatpush1.msra.mxu0 0.0
          %799 = vmatprep.subr.mxu0 0.0
          %800 = vmatpush1.msra.mxu0 0.0
          %801 = vmatprep.subr.mxu0 0.0
          %802 = vmatpush1.msra.mxu0 0.0
          %803 = vmatprep.subr.mxu0 0.0
          %804 = vmatpush1.msra.mxu0 0.0
          %805 = vmatprep.subr.mxu0 0.0
          %806 = vmatpush1.msra.mxu0 0.0
          %807 = vmatprep.subr.mxu0 0.0
          %808 = vmatpush1.msra.mxu0 0.0
          %809 = vmatprep.subr.mxu0 0.0
          %810 = vmatpush1.msra.mxu0 0.0
          %811 = vmatprep.subr.mxu0 0.0
          %812 = vmatpush1.msra.mxu0 0.0
          %813 = vmatprep.subr.mxu0 0.0
          %814 = vmatpush1.msra.mxu0 0.0
          %815 = vmatprep.subr.mxu0 0.0
          %816 = vmatpush1.msra.mxu0 0.0
          %817 = vmatprep.subr.mxu0 0.0
          %818 = vmatpush1.msra.mxu0 0.0
          %819 = vmatprep.subr.mxu0 0.0
          %820 = vmatpush1.msra.mxu0 0.0
          %821 = vmatprep.subr.mxu0 %v572
          %822 = vmatpush1.msra.mxu0 %v570
          %823 = vmatprep.subr.mxu0 0.0
          %824 = vmatpush2.msra.mxu0 0.0
          %825 = vmatprep.subr.mxu0 0.0
          %826 = vmatpush2.msra.mxu0 0.0
          %827 = vmatprep.subr.mxu0 0.0
          %828 = vmatpush2.msra.mxu0 0.0
          %829 = vmatprep.subr.mxu0 0.0
          %830 = vmatpush2.msra.mxu0 0.0
          %831 = vmatprep.subr.mxu0 0.0
          %832 = vmatpush2.msra.mxu0 0.0
          %833 = vmatprep.subr.mxu0 0.0
          %834 = vmatpush2.msra.mxu0 0.0
          %835 = vmatprep.subr.mxu0 0.0
          %836 = vmatpush2.msra.mxu0 0.0
          %837 = vmatprep.subr.mxu0 0.0
          %838 = vmatpush2.msra.mxu0 0.0
          %839 = vmatprep.subr.mxu0 0.0
          %840 = vmatpush2.msra.mxu0 0.0
          %841 = vmatprep.subr.mxu0 0.0
          %842 = vmatpush2.msra.mxu0 0.0
          %843 = vmatprep.subr.mxu0 0.0
          %844 = vmatpush2.msra.mxu0 0.0
          %845 = vmatprep.subr.mxu0 0.0
          %846 = vmatpush2.msra.mxu0 0.0
          %847 = vmatprep.subr.mxu0 0.0
          %848 = vmatpush2.msra.mxu0 0.0
          %849 = vmatprep.subr.mxu0 0.0
          %850 = vmatpush2.msra.mxu0 0.0
          %851 = vmatprep.subr.mxu0 0.0
          %852 = vmatpush2.msra.mxu0 0.0
          %853 = vmatprep.subr.mxu0 0.0
          %854 = vmatpush2.msra.mxu0 0.0
          %855 = vmatprep.mubr.f32.mxu0 0.0
          %856 = vmatmul.mubr.f32.gmra.mxu0 %v555
          %v857 = vpop.f32.mrf.mxu0
          %v858 = vadd.f32 0.0, %v857
          %v859 = vpop.f32.mrf.mxu0
          %v860 = vadd.f32 0.0, %v859
          %861 = vdwg.mxu0
          %862 = vmatprep.subr.mxu0 0.0
          %863 = vmatpush1.msra.mxu0 0.0
          %864 = vmatprep.subr.mxu0 0.0
          %865 = vmatpush1.msra.mxu0 0.0
          %866 = vmatprep.subr.mxu0 0.0
          %867 = vmatpush1.msra.mxu0 0.0
          %868 = vmatprep.subr.mxu0 0.0
          %869 = vmatpush1.msra.mxu0 0.0
          %870 = vmatprep.subr.mxu0 0.0
          %871 = vmatpush1.msra.mxu0 0.0
          %872 = vmatprep.subr.mxu0 0.0
          %873 = vmatpush1.msra.mxu0 0.0
          %874 = vmatprep.subr.mxu0 0.0
          %875 = vmatpush1.msra.mxu0 0.0
          %876 = vmatprep.subr.mxu0 0.0
          %877 = vmatpush1.msra.mxu0 0.0
          %878 = vmatprep.subr.mxu0 0.0
          %879 = vmatpush1.msra.mxu0 0.0
          %880 = vmatprep.subr.mxu0 0.0
          %881 = vmatpush1.msra.mxu0 0.0
          %882 = vmatprep.subr.mxu0 0.0
          %883 = vmatpush1.msra.mxu0 0.0
          %884 = vmatprep.subr.mxu0 0.0
          %885 = vmatpush1.msra.mxu0 0.0
          %886 = vmatprep.subr.mxu0 0.0
          %887 = vmatpush1.msra.mxu0 0.0
          %888 = vmatprep.subr.mxu0 0.0
          %889 = vmatpush1.msra.mxu0 0.0
          %890 = vmatprep.subr.mxu0 0.0
          %891 = vmatpush1.msra.mxu0 0.0
          %892 = vmatprep.subr.mxu0 %v576
          %893 = vmatpush1.msra.mxu0 %v574
          %894 = vmatprep.subr.mxu0 0.0
          %895 = vmatpush2.msra.mxu0 0.0
          %896 = vmatprep.subr.mxu0 0.0
          %897 = vmatpush2.msra.mxu0 0.0
          %898 = vmatprep.subr.mxu0 0.0
          %899 = vmatpush2.msra.mxu0 0.0
          %900 = vmatprep.subr.mxu0 0.0
          %901 = vmatpush2.msra.mxu0 0.0
          %902 = vmatprep.subr.mxu0 0.0
          %903 = vmatpush2.msra.mxu0 0.0
          %904 = vmatprep.subr.mxu0 0.0
          %905 = vmatpush2.msra.mxu0 0.0
          %906 = vmatprep.subr.mxu0 0.0
          %907 = vmatpush2.msra.mxu0 0.0
          %908 = vmatprep.subr.mxu0 0.0
          %909 = vmatpush2.msra.mxu0 0.0
          %910 = vmatprep.subr.mxu0 0.0
          %911 = vmatpush2.msra.mxu0 0.0
          %912 = vmatprep.subr.mxu0 0.0
          %913 = vmatpush2.msra.mxu0 0.0
          %914 = vmatprep.subr.mxu0 0.0
          %915 = vmatpush2.msra.mxu0 0.0
          %916 = vmatprep.subr.mxu0 0.0
          %917 = vmatpush2.msra.mxu0 0.0
          %918 = vmatprep.subr.mxu0 0.0
          %919 = vmatpush2.msra.mxu0 0.0
          %920 = vmatprep.subr.mxu0 0.0
          %921 = vmatpush2.msra.mxu0 0.0
          %922 = vmatprep.subr.mxu0 0.0
          %923 = vmatpush2.msra.mxu0 0.0
          %924 = vmatprep.subr.mxu0 0.0
          %925 = vmatpush2.msra.mxu0 0.0
          %926 = vmatprep.mubr.f32.mxu0 0.0
          %927 = vmatmul.mubr.f32.gmra.mxu0 %v555
          %v928 = vpop.f32.mrf.mxu0
          %v929 = vadd.f32 0.0, %v928
          %v930 = vpop.f32.mrf.mxu0
          %v931 = vadd.f32 0.0, %v930
          %932 = vdwg.mxu0
          %v933 = vpack.c.bf16 %v645, %v645
          %v934 = vpack.c.bf16 %v647, %v647
          %v935 = vpack.c.bf16 %v716, %v716
          %v936 = vpack.c.bf16 %v718, %v718
          %v937 = vpack.c.bf16 %v787, %v787
          %v938 = vpack.c.bf16 %v789, %v789
          %v939 = vpack.c.bf16 %v858, %v858
          %v940 = vpack.c.bf16 %v860, %v860
          %v941 = vpack.c.bf16 %v929, %v929
          %v942 = vpack.c.bf16 %v931, %v931
          %v953 = vunpack.c.l.b16 %v933
          %v954 = vunpack.c.l.b16 %v934
          %v955 = vunpack.c.l.b16 %v935
          %v956 = vunpack.c.l.b16 %v936
          %v957 = vunpack.c.l.b16 %v937
          %v958 = vunpack.c.l.b16 %v938
          %v959 = vunpack.c.l.b16 %v939
          %v960 = vunpack.c.l.b16 %v940
          %v961 = vunpack.c.l.b16 %v941
          %v962 = vunpack.c.l.b16 %v942
          %v963 = vpack.c.b16 %v954, %v953
          %v964 = vpack.c.b16 %v956, %v955
          %v965 = vpack.c.b16 %v958, %v957
          %v966 = vpack.c.b16 %v960, %v959
          %v967 = vpack.c.b16 %v962, %v961
          %973 = vst [vmem:[#allocation2] sm:$0xff] %v963
          %974 = vst [vmem:[#allocation2 + $0x8] sm:$0xff] %v964
          %975 = vst [vmem:[#allocation2 + $0x10] sm:$0xff] %v965
          %976 = vst [vmem:[#allocation2 + $0x18] sm:$0xff] %v966
          %977 = vst [vmem:[#allocation2 + $0x20] sm:$0xff] %v967
          %978 = vst [vmem:[#allocation3] sm:$0xff] 0.0
          %979 = vst [vmem:[#allocation3 + $0x8] sm:$0xff] 0.0
          %980 = vst [vmem:[#allocation3 + $0x10] sm:$0xff] 0.0
          %981 = vst [vmem:[#allocation3 + $0x18] sm:$0xff] 0.0
        $region96: #{tpu_custom_call.1} parent=59 // pred_fallthru
          _
        %v982 = vld [vmem:[%s443] sm:$0xff]
        %v983 = vld [vmem:[%s443 + $0x8] sm:$0xff]
        %v984 = vld [vmem:[%s443 + $0x10] sm:$0xff]
        %v985 = vld [vmem:[%s443 + $0x18] sm:$0xff]
        %v986 = vld [vmem:[%s443 + $0x20] sm:$0xff]
        %v987 = vld [vmem:[%s443 + $0x28] sm:$0xff]
        %v988 = vld [vmem:[%s443 + $0x30] sm:$0xff]
        %v989 = vld [vmem:[%s443 + $0x38] sm:$0xff]
        %v990 = vld [vmem:[%s443 + $0x40] sm:$0xff]
        %v991 = vld [vmem:[%s443 + $0x48] sm:$0xff]
        %v992 = vld [vmem:[%s443 + $0x50] sm:$0xff]
        %v993 = vld [vmem:[%s443 + $0x58] sm:$0xff]
        %v994 = vld [vmem:[%s443 + $0x60] sm:$0xff]
        %v995 = vld [vmem:[%s443 + $0x68] sm:$0xff]
        %v996 = vld [vmem:[%s443 + $0x70] sm:$0xff]
        %v997 = vld [vmem:[%s443 + $0x78] sm:$0xff]
        %v998 = vld [vmem:[%s443 + $0x80] sm:$0xff]
        %v999 = vld [vmem:[%s443 + $0x88] sm:$0xff]
        %v1000 = vld [vmem:[%s443 + $0x90] sm:$0xff]
        %v1001 = vld [vmem:[%s443 + $0x98] sm:$0xff]
        %v1002 = vld [vmem:[%s443 + $0xa0] sm:$0xff]
        %v1003 = vld [vmem:[%s443 + $0xa8] sm:$0xff]
        %v1004 = vld [vmem:[%s443 + $0xb0] sm:$0xff]
        %v1005 = vld [vmem:[%s443 + $0xb8] sm:$0xff]
        %v1006 = vld [vmem:[%s443 + $0xc0] sm:$0xff]
        %v1007 = vld [vmem:[%s443 + $0xc8] sm:$0xff]
        %v1008 = vld [vmem:[%s443 + $0xd0] sm:$0xff]
        %v1009 = vld [vmem:[%s443 + $0xd8] sm:$0xff]
        %v1010 = vld [vmem:[%s443 + $0xe0] sm:$0xff]
        %v1011 = vld [vmem:[%s443 + $0xe8] sm:$0xff]
        %v1012 = vld [vmem:[%s443 + $0xf0] sm:$0xff]
        %v1013 = vld [vmem:[%s443 + $0xf8] sm:$0xff]
        %v1014 = vld [vmem:[%s443 + $0x100] sm:$0xff]
        %v1015 = vld [vmem:[%s443 + $0x108] sm:$0xff]
        %v1016 = vld [vmem:[%s443 + $0x110] sm:$0xff]
        %v1017 = vld [vmem:[%s443 + $0x118] sm:$0xff]
        %v1018 = vld [vmem:[%s443 + $0x120] sm:$0xff]
        %v1019 = vld [vmem:[%s443 + $0x128] sm:$0xff]
        %v1020 = vld [vmem:[%s443 + $0x130] sm:$0xff]
        %v1021 = vld [vmem:[%s443 + $0x138] sm:$0xff]
        %v1022 = vld [vmem:[%s443 + $0x140] sm:$0xff]
        %v1023 = vld [vmem:[%s443 + $0x148] sm:$0xff]
        %v1024 = vld [vmem:[%s443 + $0x150] sm:$0xff]
        %v1025 = vld [vmem:[%s443 + $0x158] sm:$0xff]
        %v1026 = vld [vmem:[%s443 + $0x160] sm:$0xff]
        %v1027 = vld [vmem:[%s443 + $0x168] sm:$0xff]
        %v1028 = vld [vmem:[%s443 + $0x170] sm:$0xff]
        %v1029 = vld [vmem:[%s443 + $0x178] sm:$0xff]
        %v1030 = vld [vmem:[%s443 + $0x180] sm:$0xff]
        %v1031 = vld [vmem:[%s443 + $0x188] sm:$0xff]
        %v1032 = vld [vmem:[%s443 + $0x190] sm:$0xff]
        %v1033 = vld [vmem:[%s443 + $0x198] sm:$0xff]
        %v1034 = vld [vmem:[%s443 + $0x1a0] sm:$0xff]
        %v1035 = vld [vmem:[%s443 + $0x1a8] sm:$0xff]
        %v1036 = vld [vmem:[%s443 + $0x1b0] sm:$0xff]
        %v1037 = vld [vmem:[%s443 + $0x1b8] sm:$0xff]
        %v1038 = vld [vmem:[%s443 + $0x1c0] sm:$0xff]
        %v1039 = vld [vmem:[%s443 + $0x1c8] sm:$0xff]
        %v1040 = vld [vmem:[%s443 + $0x1d0] sm:$0xff]
        %v1041 = vld [vmem:[%s443 + $0x1d8] sm:$0xff]
        %v1042 = vld [vmem:[%s443 + $0x1e0] sm:$0xff]
        %v1043 = vld [vmem:[%s443 + $0x1e8] sm:$0xff]
        %v1044 = vld [vmem:[%s443 + $0x1f0] sm:$0xff]
        %v1045 = vld [vmem:[%s443 + $0x1f8] sm:$0xff]
        %v1046 = vld [vmem:[%s443 + $0x200] sm:$0xff]
        %v1047 = vld [vmem:[%s443 + $0x208] sm:$0xff]
        %v1048 = vld [vmem:[%s443 + $0x210] sm:$0xff]
        %v1049 = vld [vmem:[%s443 + $0x218] sm:$0xff]
        %v1050 = vld [vmem:[%s443 + $0x220] sm:$0xff]
        %v1051 = vld [vmem:[%s443 + $0x228] sm:$0xff]
        %v1052 = vld [vmem:[%s443 + $0x230] sm:$0xff]
        %v1053 = vld [vmem:[%s443 + $0x238] sm:$0xff]
        %v1054 = vld [vmem:[%s443 + $0x240] sm:$0xff]
        %v1055 = vld [vmem:[%s443 + $0x248] sm:$0xff]
        %v1056 = vld [vmem:[%s443 + $0x250] sm:$0xff]
        %v1057 = vld [vmem:[%s443 + $0x258] sm:$0xff]
        %v1058 = vld [vmem:[%s443 + $0x260] sm:$0xff]
        %v1059 = vld [vmem:[%s443 + $0x268] sm:$0xff]
        %v1060 = vld [vmem:[%s443 + $0x270] sm:$0xff]
        %v1061 = vld [vmem:[%s443 + $0x278] sm:$0xff]
        %v1062 = vld [vmem:[%s443 + $0x280] sm:$0xff]
        %v1063 = vld [vmem:[%s443 + $0x288] sm:$0xff]
        %v1064 = vld [vmem:[%s443 + $0x290] sm:$0xff]
        %v1065 = vld [vmem:[%s443 + $0x298] sm:$0xff]
        %v1066 = vld [vmem:[%s443 + $0x2a0] sm:$0xff]
        %v1067 = vld [vmem:[%s443 + $0x2a8] sm:$0xff]
        %v1068 = vld [vmem:[%s443 + $0x2b0] sm:$0xff]
        %v1069 = vld [vmem:[%s443 + $0x2b8] sm:$0xff]
        %v1070 = vld [vmem:[%s443 + $0x2c0] sm:$0xff]
        %v1071 = vld [vmem:[%s443 + $0x2c8] sm:$0xff]
        %v1072 = vld [vmem:[%s443 + $0x2d0] sm:$0xff]
        %v1073 = vld [vmem:[%s443 + $0x2d8] sm:$0xff]
        %v1074 = vld [vmem:[%s443 + $0x2e0] sm:$0xff]
        %v1075 = vld [vmem:[%s443 + $0x2e8] sm:$0xff]
        %v1076 = vld [vmem:[%s443 + $0x2f0] sm:$0xff]
        %v1077 = vld [vmem:[%s443 + $0x2f8] sm:$0xff]
        %v1078 = vld [vmem:[%s443 + $0x300] sm:$0xff]
        %v1079 = vld [vmem:[%s443 + $0x308] sm:$0xff]
        %v1080 = vld [vmem:[%s443 + $0x310] sm:$0xff]
        %v1081 = vld [vmem:[%s443 + $0x318] sm:$0xff]
        %v1082 = vld [vmem:[%s443 + $0x320] sm:$0xff]
        %v1083 = vld [vmem:[%s443 + $0x328] sm:$0xff]
        %v1084 = vld [vmem:[%s443 + $0x330] sm:$0xff]
        %v1085 = vld [vmem:[%s443 + $0x338] sm:$0xff]
        %v1086 = vld [vmem:[%s443 + $0x340] sm:$0xff]
        %v1087 = vld [vmem:[%s443 + $0x348] sm:$0xff]
        %v1088 = vld [vmem:[%s443 + $0x350] sm:$0xff]
        %v1089 = vld [vmem:[%s443 + $0x358] sm:$0xff]
        %v1090 = vld [vmem:[%s443 + $0x360] sm:$0xff]
        %v1091 = vld [vmem:[%s443 + $0x368] sm:$0xff]
        %v1092 = vld [vmem:[%s443 + $0x370] sm:$0xff]
        %v1093 = vld [vmem:[%s443 + $0x378] sm:$0xff]
        %v1094 = vld [vmem:[%s443 + $0x380] sm:$0xff]
        %v1095 = vld [vmem:[%s443 + $0x388] sm:$0xff]
        %v1096 = vld [vmem:[%s443 + $0x390] sm:$0xff]
        %v1097 = vld [vmem:[%s443 + $0x398] sm:$0xff]
        %v1098 = vld [vmem:[%s443 + $0x3a0] sm:$0xff]
        %v1099 = vld [vmem:[%s443 + $0x3a8] sm:$0xff]
        %v1100 = vld [vmem:[%s443 + $0x3b0] sm:$0xff]
        %v1101 = vld [vmem:[%s443 + $0x3b8] sm:$0xff]
        %v1102 = vld [vmem:[%s443 + $0x3c0] sm:$0xff]
        %v1103 = vld [vmem:[%s443 + $0x3c8] sm:$0xff]
        %v1104 = vld [vmem:[%s443 + $0x3d0] sm:$0xff]
        %v1105 = vld [vmem:[%s443 + $0x3d8] sm:$0xff]
        %v1106 = vld [vmem:[%s443 + $0x3e0] sm:$0xff]
        %v1107 = vld [vmem:[%s443 + $0x3e8] sm:$0xff]
        %v1108 = vld [vmem:[%s443 + $0x3f0] sm:$0xff]
        %v1109 = vld [vmem:[%s443 + $0x3f8] sm:$0xff]
        %v1110 = vld [vmem:[%s443 + $0x400] sm:$0xff]
        %v1111 = vld [vmem:[%s443 + $0x408] sm:$0xff]
        %v1112 = vld [vmem:[%s443 + $0x410] sm:$0xff]
        %v1113 = vld [vmem:[%s443 + $0x418] sm:$0xff]
        %v1114 = vld [vmem:[%s443 + $0x420] sm:$0xff]
        %v1115 = vld [vmem:[%s443 + $0x428] sm:$0xff]
        %v1116 = vld [vmem:[%s443 + $0x430] sm:$0xff]
        %v1117 = vld [vmem:[%s443 + $0x438] sm:$0xff]
        %v1118 = vld [vmem:[%s443 + $0x440] sm:$0xff]
        %v1119 = vld [vmem:[%s443 + $0x448] sm:$0xff]
        %v1120 = vld [vmem:[%s443 + $0x450] sm:$0xff]
        %v1121 = vld [vmem:[%s443 + $0x458] sm:$0xff]
        %v1122 = vld [vmem:[%s443 + $0x460] sm:$0xff]
        %v1123 = vld [vmem:[%s443 + $0x468] sm:$0xff]
        %v1124 = vld [vmem:[%s443 + $0x470] sm:$0xff]
        %v1125 = vld [vmem:[%s443 + $0x478] sm:$0xff]
        %v1126 = vld [vmem:[%s443 + $0x480] sm:$0xff]
        %v1127 = vld [vmem:[%s443 + $0x488] sm:$0xff]
        %v1128 = vld [vmem:[%s443 + $0x490] sm:$0xff]
        %v1129 = vld [vmem:[%s443 + $0x498] sm:$0xff]
        %v1130 = vld [vmem:[%s443 + $0x4a0] sm:$0xff]
        %v1131 = vld [vmem:[%s443 + $0x4a8] sm:$0xff]
        %v1132 = vld [vmem:[%s443 + $0x4b0] sm:$0xff]
        %v1133 = vld [vmem:[%s443 + $0x4b8] sm:$0xff]
        %v1134 = vld [vmem:[%s443 + $0x4c0] sm:$0xff]
        %v1135 = vld [vmem:[%s443 + $0x4c8] sm:$0xff]
        %v1136 = vld [vmem:[%s443 + $0x4d0] sm:$0xff]
        %v1137 = vld [vmem:[%s443 + $0x4d8] sm:$0xff]
        %v1138 = vld [vmem:[%s443 + $0x4e0] sm:$0xff]
        %v1139 = vld [vmem:[%s443 + $0x4e8] sm:$0xff]
        %v1140 = vld [vmem:[%s443 + $0x4f0] sm:$0xff]
        %v1141 = vld [vmem:[%s443 + $0x4f8] sm:$0xff]
        %v1142 = vld [vmem:[%s443 + $0x500] sm:$0xff]
        %v1143 = vld [vmem:[%s443 + $0x508] sm:$0xff]
        %v1144 = vld [vmem:[%s443 + $0x510] sm:$0xff]
        %v1145 = vld [vmem:[%s443 + $0x518] sm:$0xff]
        %v1146 = vld [vmem:[%s443 + $0x520] sm:$0xff]
        %v1147 = vld [vmem:[%s443 + $0x528] sm:$0xff]
        %v1148 = vld [vmem:[%s443 + $0x530] sm:$0xff]
        %v1149 = vld [vmem:[%s443 + $0x538] sm:$0xff]
        %v1150 = vld [vmem:[%s443 + $0x540] sm:$0xff]
        %v1151 = vld [vmem:[%s443 + $0x548] sm:$0xff]
        %v1152 = vld [vmem:[%s443 + $0x550] sm:$0xff]
        %v1153 = vld [vmem:[%s443 + $0x558] sm:$0xff]
        %v1154 = vld [vmem:[%s443 + $0x560] sm:$0xff]
        %v1155 = vld [vmem:[%s443 + $0x568] sm:$0xff]
        %v1156 = vld [vmem:[%s443 + $0x570] sm:$0xff]
        %v1157 = vld [vmem:[%s443 + $0x578] sm:$0xff]
        %v1158 = vld [vmem:[%s443 + $0x580] sm:$0xff]
        %v1159 = vld [vmem:[%s443 + $0x588] sm:$0xff]
        %v1160 = vld [vmem:[%s443 + $0x590] sm:$0xff]
        %v1161 = vld [vmem:[%s443 + $0x598] sm:$0xff]
        %v1162 = vld [vmem:[%s443 + $0x5a0] sm:$0xff]
        %v1163 = vld [vmem:[%s443 + $0x5a8] sm:$0xff]
        %v1164 = vld [vmem:[%s443 + $0x5b0] sm:$0xff]
        %v1165 = vld [vmem:[%s443 + $0x5b8] sm:$0xff]
        %v1166 = vld [vmem:[%s443 + $0x5c0] sm:$0xff]
        %v1167 = vld [vmem:[%s443 + $0x5c8] sm:$0xff]
        %v1168 = vld [vmem:[%s443 + $0x5d0] sm:$0xff]
        %v1169 = vld [vmem:[%s443 + $0x5d8] sm:$0xff]
        %v1170 = vld [vmem:[%s443 + $0x5e0] sm:$0xff]
        %v1171 = vld [vmem:[%s443 + $0x5e8] sm:$0xff]
        %v1172 = vld [vmem:[%s443 + $0x5f0] sm:$0xff]
        %v1173 = vld [vmem:[%s443 + $0x5f8] sm:$0xff]
        %v1174 = vld [vmem:[%s443 + $0x600] sm:$0xff]
        %v1175 = vld [vmem:[%s443 + $0x608] sm:$0xff]
        %v1176 = vld [vmem:[%s443 + $0x610] sm:$0xff]
        %v1177 = vld [vmem:[%s443 + $0x618] sm:$0xff]
        %v1178 = vld [vmem:[%s443 + $0x620] sm:$0xff]
        %v1179 = vld [vmem:[%s443 + $0x628] sm:$0xff]
        %v1180 = vld [vmem:[%s443 + $0x630] sm:$0xff]
        %v1181 = vld [vmem:[%s443 + $0x638] sm:$0xff]
        %v1182 = vld [vmem:[%s443 + $0x640] sm:$0xff]
        %v1183 = vld [vmem:[%s443 + $0x648] sm:$0xff]
        %v1184 = vld [vmem:[%s443 + $0x650] sm:$0xff]
        %v1185 = vld [vmem:[%s443 + $0x658] sm:$0xff]
        %v1186 = vld [vmem:[%s443 + $0x660] sm:$0xff]
        %v1187 = vld [vmem:[%s443 + $0x668] sm:$0xff]
        %v1188 = vld [vmem:[%s443 + $0x670] sm:$0xff]
        %v1189 = vld [vmem:[%s443 + $0x678] sm:$0xff]
        %v1190 = vld [vmem:[%s443 + $0x680] sm:$0xff]
        %v1191 = vld [vmem:[%s443 + $0x688] sm:$0xff]
        %v1192 = vld [vmem:[%s443 + $0x690] sm:$0xff]
        %v1193 = vld [vmem:[%s443 + $0x698] sm:$0xff]
        %v1194 = vld [vmem:[%s443 + $0x6a0] sm:$0xff]
        %v1195 = vld [vmem:[%s443 + $0x6a8] sm:$0xff]
        %v1196 = vld [vmem:[%s443 + $0x6b0] sm:$0xff]
        %v1197 = vld [vmem:[%s443 + $0x6b8] sm:$0xff]
        %v1198 = vld [vmem:[%s443 + $0x6c0] sm:$0xff]
        %v1199 = vld [vmem:[%s443 + $0x6c8] sm:$0xff]
        %v1200 = vld [vmem:[%s443 + $0x6d0] sm:$0xff]
        %v1201 = vld [vmem:[%s443 + $0x6d8] sm:$0xff]
        %v1202 = vld [vmem:[%s443 + $0x6e0] sm:$0xff]
        %v1203 = vld [vmem:[%s443 + $0x6e8] sm:$0xff]
        %v1204 = vld [vmem:[%s443 + $0x6f0] sm:$0xff]
        %v1205 = vld [vmem:[%s443 + $0x6f8] sm:$0xff]
        %v1206 = vld [vmem:[%s443 + $0x700] sm:$0xff]
        %v1207 = vld [vmem:[%s443 + $0x708] sm:$0xff]
        %v1208 = vld [vmem:[%s443 + $0x710] sm:$0xff]
        %v1209 = vld [vmem:[%s443 + $0x718] sm:$0xff]
        %v1210 = vld [vmem:[%s443 + $0x720] sm:$0xff]
        %v1211 = vld [vmem:[%s443 + $0x728] sm:$0xff]
        %v1212 = vld [vmem:[%s443 + $0x730] sm:$0xff]
        %v1213 = vld [vmem:[%s443 + $0x738] sm:$0xff]
        %v1214 = vld [vmem:[%s443 + $0x740] sm:$0xff]
        %v1215 = vld [vmem:[%s443 + $0x748] sm:$0xff]
        %v1216 = vld [vmem:[%s443 + $0x750] sm:$0xff]
        %v1217 = vld [vmem:[%s443 + $0x758] sm:$0xff]
        %v1218 = vld [vmem:[%s443 + $0x760] sm:$0xff]
        %v1219 = vld [vmem:[%s443 + $0x768] sm:$0xff]
        %v1220 = vld [vmem:[%s443 + $0x770] sm:$0xff]
        %v1221 = vld [vmem:[%s443 + $0x778] sm:$0xff]
        %v1222 = vld [vmem:[%s443 + $0x780] sm:$0xff]
        %v1223 = vld [vmem:[%s443 + $0x788] sm:$0xff]
        %v1224 = vld [vmem:[%s443 + $0x790] sm:$0xff]
        %v1225 = vld [vmem:[%s443 + $0x798] sm:$0xff]
        %v1226 = vld [vmem:[%s443 + $0x7a0] sm:$0xff]
        %v1227 = vld [vmem:[%s443 + $0x7a8] sm:$0xff]
        %v1228 = vld [vmem:[%s443 + $0x7b0] sm:$0xff]
        %v1229 = vld [vmem:[%s443 + $0x7b8] sm:$0xff]
        %v1230 = vld [vmem:[%s443 + $0x7c0] sm:$0xff]
        %v1231 = vld [vmem:[%s443 + $0x7c8] sm:$0xff]
        %v1232 = vld [vmem:[%s443 + $0x7d0] sm:$0xff]
        %v1233 = vld [vmem:[%s443 + $0x7d8] sm:$0xff]
        %v1234 = vld [vmem:[%s443 + $0x7e0] sm:$0xff]
        %v1235 = vld [vmem:[%s443 + $0x7e8] sm:$0xff]
        %v1236 = vld [vmem:[%s443 + $0x7f0] sm:$0xff]
        %v1237 = vld [vmem:[%s443 + $0x7f8] sm:$0xff]
        %v1238 = vld [vmem:[%s443 + $0x800] sm:$0xff]
        %v1239 = vld [vmem:[%s443 + $0x808] sm:$0xff]
        %v1240 = vld [vmem:[%s443 + $0x810] sm:$0xff]
        %v1241 = vld [vmem:[%s443 + $0x818] sm:$0xff]
        %v1242 = vld [vmem:[%s443 + $0x820] sm:$0xff]
        %v1243 = vld [vmem:[%s443 + $0x828] sm:$0xff]
        %v1244 = vld [vmem:[%s443 + $0x830] sm:$0xff]
        %v1245 = vld [vmem:[%s443 + $0x838] sm:$0xff]
        %v1246 = vld [vmem:[%s443 + $0x840] sm:$0xff]
        %v1247 = vld [vmem:[%s443 + $0x848] sm:$0xff]
        %v1248 = vld [vmem:[%s443 + $0x850] sm:$0xff]
        %v1249 = vld [vmem:[%s443 + $0x858] sm:$0xff]
        %v1250 = vld [vmem:[%s443 + $0x860] sm:$0xff]
        %v1251 = vld [vmem:[%s443 + $0x868] sm:$0xff]
        %v1252 = vld [vmem:[%s443 + $0x870] sm:$0xff]
        %v1253 = vld [vmem:[%s443 + $0x878] sm:$0xff]
        %v1254 = vld [vmem:[%s443 + $0x880] sm:$0xff]
        %v1255 = vld [vmem:[%s443 + $0x888] sm:$0xff]
        %v1256 = vld [vmem:[%s443 + $0x890] sm:$0xff]
        %v1257 = vld [vmem:[%s443 + $0x898] sm:$0xff]
        %v1258 = vld [vmem:[%s443 + $0x8a0] sm:$0xff]
        %v1259 = vld [vmem:[%s443 + $0x8a8] sm:$0xff]
        %v1260 = vld [vmem:[%s443 + $0x8b0] sm:$0xff]
        %v1261 = vld [vmem:[%s443 + $0x8b8] sm:$0xff]
        %v1262 = vld [vmem:[%s443 + $0x8c0] sm:$0xff]
        %v1263 = vld [vmem:[%s443 + $0x8c8] sm:$0xff]
        %v1264 = vld [vmem:[%s443 + $0x8d0] sm:$0xff]
        %v1265 = vld [vmem:[%s443 + $0x8d8] sm:$0xff]
        %v1266 = vld [vmem:[%s443 + $0x8e0] sm:$0xff]
        %v1267 = vld [vmem:[%s443 + $0x8e8] sm:$0xff]
        %v1268 = vld [vmem:[%s443 + $0x8f0] sm:$0xff]
        %v1269 = vld [vmem:[%s443 + $0x8f8] sm:$0xff]
        %v1270 = vld [vmem:[%s443 + $0x900] sm:$0xff]
        %v1271 = vld [vmem:[%s443 + $0x908] sm:$0xff]
        %v1272 = vld [vmem:[%s443 + $0x910] sm:$0xff]
        %v1273 = vld [vmem:[%s443 + $0x918] sm:$0xff]
        %v1274 = vld [vmem:[%s443 + $0x920] sm:$0xff]
        %v1275 = vld [vmem:[%s443 + $0x928] sm:$0xff]
        %v1276 = vld [vmem:[%s443 + $0x930] sm:$0xff]
        %v1277 = vld [vmem:[%s443 + $0x938] sm:$0xff]
        %v1278 = vld [vmem:[%s443 + $0x940] sm:$0xff]
        %v1279 = vld [vmem:[%s443 + $0x948] sm:$0xff]
        %v1280 = vld [vmem:[%s443 + $0x950] sm:$0xff]
        %v1281 = vld [vmem:[%s443 + $0x958] sm:$0xff]
        %v1282 = vld [vmem:[%s443 + $0x960] sm:$0xff]
        %v1283 = vld [vmem:[%s443 + $0x968] sm:$0xff]
        %v1284 = vld [vmem:[%s443 + $0x970] sm:$0xff]
        %v1285 = vld [vmem:[%s443 + $0x978] sm:$0xff]
        %v1286 = vld [vmem:[%s443 + $0x980] sm:$0xff]
        %v1287 = vld [vmem:[%s443 + $0x988] sm:$0xff]
        %v1288 = vld [vmem:[%s443 + $0x990] sm:$0xff]
        %v1289 = vld [vmem:[%s443 + $0x998] sm:$0xff]
        %v1290 = vld [vmem:[%s443 + $0x9a0] sm:$0xff]
        %v1291 = vld [vmem:[%s443 + $0x9a8] sm:$0xff]
        %v1292 = vld [vmem:[%s443 + $0x9b0] sm:$0xff]
        %v1293 = vld [vmem:[%s443 + $0x9b8] sm:$0xff]
        %v1294 = vld [vmem:[%s443 + $0x9c0] sm:$0xff]
        %v1295 = vld [vmem:[%s443 + $0x9c8] sm:$0xff]
        %v1296 = vld [vmem:[%s443 + $0x9d0] sm:$0xff]
        %v1297 = vld [vmem:[%s443 + $0x9d8] sm:$0xff]
        %v1298 = vld [vmem:[%s443 + $0x9e0] sm:$0xff]
        %v1299 = vld [vmem:[%s443 + $0x9e8] sm:$0xff]
        %v1300 = vld [vmem:[%s443 + $0x9f0] sm:$0xff]
        %v1301 = vld [vmem:[%s443 + $0x9f8] sm:$0xff]
        %v1302 = vunpack.c.l.s8.bf16 %v982
        %v1303 = vunpack.c.l.s8.bf16 %v983
        %v1304 = vunpack.c.l.s8.bf16 %v984
        %v1305 = vunpack.c.l.s8.bf16 %v985
        %v1306 = vunpack.c.l.s8.bf16 %v986
        %v1307 = vunpack.c.l.s8.bf16 %v987
        %v1308 = vunpack.c.l.s8.bf16 %v988
        %v1309 = vunpack.c.l.s8.bf16 %v989
        %v1310 = vunpack.c.h.s8.bf16 %v982
        %v1311 = vunpack.c.h.s8.bf16 %v983
        %v1312 = vunpack.c.h.s8.bf16 %v984
        %v1313 = vunpack.c.h.s8.bf16 %v985
        %v1314 = vunpack.c.h.s8.bf16 %v986
        %v1315 = vunpack.c.h.s8.bf16 %v987
        %v1316 = vunpack.c.h.s8.bf16 %v988
        %v1317 = vunpack.c.h.s8.bf16 %v989
        %v1318 = vunpack.c.l.s8.bf16 %v990
        %v1319 = vunpack.c.l.s8.bf16 %v991
        %v1320 = vunpack.c.l.s8.bf16 %v992
        %v1321 = vunpack.c.l.s8.bf16 %v993
        %v1322 = vunpack.c.l.s8.bf16 %v994
        %v1323 = vunpack.c.l.s8.bf16 %v995
        %v1324 = vunpack.c.l.s8.bf16 %v996
        %v1325 = vunpack.c.l.s8.bf16 %v997
        %v1326 = vunpack.c.h.s8.bf16 %v990
        %v1327 = vunpack.c.h.s8.bf16 %v991
        %v1328 = vunpack.c.h.s8.bf16 %v992
        %v1329 = vunpack.c.h.s8.bf16 %v993
        %v1330 = vunpack.c.h.s8.bf16 %v994
        %v1331 = vunpack.c.h.s8.bf16 %v995
        %v1332 = vunpack.c.h.s8.bf16 %v996
        %v1333 = vunpack.c.h.s8.bf16 %v997
        %v1334 = vunpack.c.l.s8.bf16 %v998
        %v1335 = vunpack.c.l.s8.bf16 %v999
        %v1336 = vunpack.c.l.s8.bf16 %v1000
        %v1337 = vunpack.c.l.s8.bf16 %v1001
        %v1338 = vunpack.c.l.s8.bf16 %v1002
        %v1339 = vunpack.c.l.s8.bf16 %v1003
        %v1340 = vunpack.c.l.s8.bf16 %v1004
        %v1341 = vunpack.c.l.s8.bf16 %v1005
        %v1342 = vunpack.c.h.s8.bf16 %v998
        %v1343 = vunpack.c.h.s8.bf16 %v999
        %v1344 = vunpack.c.h.s8.bf16 %v1000
        %v1345 = vunpack.c.h.s8.bf16 %v1001
        %v1346 = vunpack.c.h.s8.bf16 %v1002
        %v1347 = vunpack.c.h.s8.bf16 %v1003
        %v1348 = vunpack.c.h.s8.bf16 %v1004
        %v1349 = vunpack.c.h.s8.bf16 %v1005
        %v1350 = vunpack.c.l.s8.bf16 %v1006
        %v1351 = vunpack.c.l.s8.bf16 %v1007
        %v1352 = vunpack.c.l.s8.bf16 %v1008
        %v1353 = vunpack.c.l.s8.bf16 %v1009
        %v1354 = vunpack.c.l.s8.bf16 %v1010
        %v1355 = vunpack.c.l.s8.bf16 %v1011
        %v1356 = vunpack.c.l.s8.bf16 %v1012
        %v1357 = vunpack.c.l.s8.bf16 %v1013
        %v1358 = vunpack.c.h.s8.bf16 %v1006
        %v1359 = vunpack.c.h.s8.bf16 %v1007
        %v1360 = vunpack.c.h.s8.bf16 %v1008
        %v1361 = vunpack.c.h.s8.bf16 %v1009
        %v1362 = vunpack.c.h.s8.bf16 %v1010
        %v1363 = vunpack.c.h.s8.bf16 %v1011
        %v1364 = vunpack.c.h.s8.bf16 %v1012
        %v1365 = vunpack.c.h.s8.bf16 %v1013
        %v1366 = vunpack.c.l.s8.bf16 %v1014
        %v1367 = vunpack.c.l.s8.bf16 %v1015
        %v1368 = vunpack.c.l.s8.bf16 %v1016
        %v1369 = vunpack.c.l.s8.bf16 %v1017
        %v1370 = vunpack.c.l.s8.bf16 %v1018
        %v1371 = vunpack.c.l.s8.bf16 %v1019
        %v1372 = vunpack.c.l.s8.bf16 %v1020
        %v1373 = vunpack.c.l.s8.bf16 %v1021
        %v1374 = vunpack.c.h.s8.bf16 %v1014
        %v1375 = vunpack.c.h.s8.bf16 %v1015
        %v1376 = vunpack.c.h.s8.bf16 %v1016
        %v1377 = vunpack.c.h.s8.bf16 %v1017
        %v1378 = vunpack.c.h.s8.bf16 %v1018
        %v1379 = vunpack.c.h.s8.bf16 %v1019
        %v1380 = vunpack.c.h.s8.bf16 %v1020
        %v1381 = vunpack.c.h.s8.bf16 %v1021
        %v1382 = vunpack.c.l.s8.bf16 %v1022
        %v1383 = vunpack.c.l.s8.bf16 %v1023
        %v1384 = vunpack.c.l.s8.bf16 %v1024
        %v1385 = vunpack.c.l.s8.bf16 %v1025
        %v1386 = vunpack.c.l.s8.bf16 %v1026
        %v1387 = vunpack.c.l.s8.bf16 %v1027
        %v1388 = vunpack.c.l.s8.bf16 %v1028
        %v1389 = vunpack.c.l.s8.bf16 %v1029
        %v1390 = vunpack.c.h.s8.bf16 %v1022
        %v1391 = vunpack.c.h.s8.bf16 %v1023
        %v1392 = vunpack.c.h.s8.bf16 %v1024
        %v1393 = vunpack.c.h.s8.bf16 %v1025
        %v1394 = vunpack.c.h.s8.bf16 %v1026
        %v1395 = vunpack.c.h.s8.bf16 %v1027
        %v1396 = vunpack.c.h.s8.bf16 %v1028
        %v1397 = vunpack.c.h.s8.bf16 %v1029
        %v1398 = vunpack.c.l.s8.bf16 %v1030
        %v1399 = vunpack.c.l.s8.bf16 %v1031
        %v1400 = vunpack.c.l.s8.bf16 %v1032
        %v1401 = vunpack.c.l.s8.bf16 %v1033
        %v1402 = vunpack.c.l.s8.bf16 %v1034
        %v1403 = vunpack.c.l.s8.bf16 %v1035
        %v1404 = vunpack.c.l.s8.bf16 %v1036
        %v1405 = vunpack.c.l.s8.bf16 %v1037
        %v1406 = vunpack.c.h.s8.bf16 %v1030
        %v1407 = vunpack.c.h.s8.bf16 %v1031
        %v1408 = vunpack.c.h.s8.bf16 %v1032
        %v1409 = vunpack.c.h.s8.bf16 %v1033
        %v1410 = vunpack.c.h.s8.bf16 %v1034
        %v1411 = vunpack.c.h.s8.bf16 %v1035
        %v1412 = vunpack.c.h.s8.bf16 %v1036
        %v1413 = vunpack.c.h.s8.bf16 %v1037
        %v1414 = vunpack.c.l.s8.bf16 %v1038
        %v1415 = vunpack.c.l.s8.bf16 %v1039
        %v1416 = vunpack.c.l.s8.bf16 %v1040
        %v1417 = vunpack.c.l.s8.bf16 %v1041
        %v1418 = vunpack.c.l.s8.bf16 %v1042
        %v1419 = vunpack.c.l.s8.bf16 %v1043
        %v1420 = vunpack.c.l.s8.bf16 %v1044
        %v1421 = vunpack.c.l.s8.bf16 %v1045
        %v1422 = vunpack.c.h.s8.bf16 %v1038
        %v1423 = vunpack.c.h.s8.bf16 %v1039
        %v1424 = vunpack.c.h.s8.bf16 %v1040
        %v1425 = vunpack.c.h.s8.bf16 %v1041
        %v1426 = vunpack.c.h.s8.bf16 %v1042
        %v1427 = vunpack.c.h.s8.bf16 %v1043
        %v1428 = vunpack.c.h.s8.bf16 %v1044
        %v1429 = vunpack.c.h.s8.bf16 %v1045
        %v1430 = vunpack.c.l.s8.bf16 %v1046
        %v1431 = vunpack.c.l.s8.bf16 %v1047
        %v1432 = vunpack.c.l.s8.bf16 %v1048
        %v1433 = vunpack.c.l.s8.bf16 %v1049
        %v1434 = vunpack.c.l.s8.bf16 %v1050
        %v1435 = vunpack.c.l.s8.bf16 %v1051
        %v1436 = vunpack.c.l.s8.bf16 %v1052
        %v1437 = vunpack.c.l.s8.bf16 %v1053
        %v1438 = vunpack.c.h.s8.bf16 %v1046
        %v1439 = vunpack.c.h.s8.bf16 %v1047
        %v1440 = vunpack.c.h.s8.bf16 %v1048
        %v1441 = vunpack.c.h.s8.bf16 %v1049
        %v1442 = vunpack.c.h.s8.bf16 %v1050
        %v1443 = vunpack.c.h.s8.bf16 %v1051
        %v1444 = vunpack.c.h.s8.bf16 %v1052
        %v1445 = vunpack.c.h.s8.bf16 %v1053
        %v1446 = vunpack.c.l.s8.bf16 %v1054
        %v1447 = vunpack.c.l.s8.bf16 %v1055
        %v1448 = vunpack.c.l.s8.bf16 %v1056
        %v1449 = vunpack.c.l.s8.bf16 %v1057
        %v1450 = vunpack.c.l.s8.bf16 %v1058
        %v1451 = vunpack.c.l.s8.bf16 %v1059
        %v1452 = vunpack.c.l.s8.bf16 %v1060
        %v1453 = vunpack.c.l.s8.bf16 %v1061
        %v1454 = vunpack.c.h.s8.bf16 %v1054
        %v1455 = vunpack.c.h.s8.bf16 %v1055
        %v1456 = vunpack.c.h.s8.bf16 %v1056
        %v1457 = vunpack.c.h.s8.bf16 %v1057
        %v1458 = vunpack.c.h.s8.bf16 %v1058
        %v1459 = vunpack.c.h.s8.bf16 %v1059
        %v1460 = vunpack.c.h.s8.bf16 %v1060
        %v1461 = vunpack.c.h.s8.bf16 %v1061
        %v1462 = vunpack.c.l.s8.bf16 %v1062
        %v1463 = vunpack.c.l.s8.bf16 %v1063
        %v1464 = vunpack.c.l.s8.bf16 %v1064
        %v1465 = vunpack.c.l.s8.bf16 %v1065
        %v1466 = vunpack.c.l.s8.bf16 %v1066
        %v1467 = vunpack.c.l.s8.bf16 %v1067
        %v1468 = vunpack.c.l.s8.bf16 %v1068
        %v1469 = vunpack.c.l.s8.bf16 %v1069
        %v1470 = vunpack.c.h.s8.bf16 %v1062
        %v1471 = vunpack.c.h.s8.bf16 %v1063
        %v1472 = vunpack.c.h.s8.bf16 %v1064
        %v1473 = vunpack.c.h.s8.bf16 %v1065
        %v1474 = vunpack.c.h.s8.bf16 %v1066
        %v1475 = vunpack.c.h.s8.bf16 %v1067
        %v1476 = vunpack.c.h.s8.bf16 %v1068
        %v1477 = vunpack.c.h.s8.bf16 %v1069
        %v1478 = vunpack.c.l.s8.bf16 %v1070
        %v1479 = vunpack.c.l.s8.bf16 %v1071
        %v1480 = vunpack.c.l.s8.bf16 %v1072
        %v1481 = vunpack.c.l.s8.bf16 %v1073
        %v1482 = vunpack.c.l.s8.bf16 %v1074
        %v1483 = vunpack.c.l.s8.bf16 %v1075
        %v1484 = vunpack.c.l.s8.bf16 %v1076
        %v1485 = vunpack.c.l.s8.bf16 %v1077
        %v1486 = vunpack.c.h.s8.bf16 %v1070
        %v1487 = vunpack.c.h.s8.bf16 %v1071
        %v1488 = vunpack.c.h.s8.bf16 %v1072
        %v1489 = vunpack.c.h.s8.bf16 %v1073
        %v1490 = vunpack.c.h.s8.bf16 %v1074
        %v1491 = vunpack.c.h.s8.bf16 %v1075
        %v1492 = vunpack.c.h.s8.bf16 %v1076
        %v1493 = vunpack.c.h.s8.bf16 %v1077
        %v1494 = vunpack.c.l.s8.bf16 %v1078
        %v1495 = vunpack.c.l.s8.bf16 %v1079
        %v1496 = vunpack.c.l.s8.bf16 %v1080
        %v1497 = vunpack.c.l.s8.bf16 %v1081
        %v1498 = vunpack.c.l.s8.bf16 %v1082
        %v1499 = vunpack.c.l.s8.bf16 %v1083
        %v1500 = vunpack.c.l.s8.bf16 %v1084
        %v1501 = vunpack.c.l.s8.bf16 %v1085
        %v1502 = vunpack.c.h.s8.bf16 %v1078
        %v1503 = vunpack.c.h.s8.bf16 %v1079
        %v1504 = vunpack.c.h.s8.bf16 %v1080
        %v1505 = vunpack.c.h.s8.bf16 %v1081
        %v1506 = vunpack.c.h.s8.bf16 %v1082
        %v1507 = vunpack.c.h.s8.bf16 %v1083
        %v1508 = vunpack.c.h.s8.bf16 %v1084
        %v1509 = vunpack.c.h.s8.bf16 %v1085
        %v1510 = vunpack.c.l.s8.bf16 %v1086
        %v1511 = vunpack.c.l.s8.bf16 %v1087
        %v1512 = vunpack.c.l.s8.bf16 %v1088
        %v1513 = vunpack.c.l.s8.bf16 %v1089
        %v1514 = vunpack.c.l.s8.bf16 %v1090
        %v1515 = vunpack.c.l.s8.bf16 %v1091
        %v1516 = vunpack.c.l.s8.bf16 %v1092
        %v1517 = vunpack.c.l.s8.bf16 %v1093
        %v1518 = vunpack.c.h.s8.bf16 %v1086
        %v1519 = vunpack.c.h.s8.bf16 %v1087
        %v1520 = vunpack.c.h.s8.bf16 %v1088
        %v1521 = vunpack.c.h.s8.bf16 %v1089
        %v1522 = vunpack.c.h.s8.bf16 %v1090
        %v1523 = vunpack.c.h.s8.bf16 %v1091
        %v1524 = vunpack.c.h.s8.bf16 %v1092
        %v1525 = vunpack.c.h.s8.bf16 %v1093
        %v1526 = vunpack.c.l.s8.bf16 %v1094
        %v1527 = vunpack.c.l.s8.bf16 %v1095
        %v1528 = vunpack.c.l.s8.bf16 %v1096
        %v1529 = vunpack.c.l.s8.bf16 %v1097
        %v1530 = vunpack.c.l.s8.bf16 %v1098
        %v1531 = vunpack.c.l.s8.bf16 %v1099
        %v1532 = vunpack.c.l.s8.bf16 %v1100
        %v1533 = vunpack.c.l.s8.bf16 %v1101
        %v1534 = vunpack.c.h.s8.bf16 %v1094
        %v1535 = vunpack.c.h.s8.bf16 %v1095
        %v1536 = vunpack.c.h.s8.bf16 %v1096
        %v1537 = vunpack.c.h.s8.bf16 %v1097
        %v1538 = vunpack.c.h.s8.bf16 %v1098
        %v1539 = vunpack.c.h.s8.bf16 %v1099
        %v1540 = vunpack.c.h.s8.bf16 %v1100
        %v1541 = vunpack.c.h.s8.bf16 %v1101
        %v1542 = vunpack.c.l.s8.bf16 %v1102
        %v1543 = vunpack.c.l.s8.bf16 %v1103
        %v1544 = vunpack.c.l.s8.bf16 %v1104
        %v1545 = vunpack.c.l.s8.bf16 %v1105
        %v1546 = vunpack.c.l.s8.bf16 %v1106
        %v1547 = vunpack.c.l.s8.bf16 %v1107
        %v1548 = vunpack.c.l.s8.bf16 %v1108
        %v1549 = vunpack.c.l.s8.bf16 %v1109
        %v1550 = vunpack.c.h.s8.bf16 %v1102
        %v1551 = vunpack.c.h.s8.bf16 %v1103
        %v1552 = vunpack.c.h.s8.bf16 %v1104
        %v1553 = vunpack.c.h.s8.bf16 %v1105
        %v1554 = vunpack.c.h.s8.bf16 %v1106
        %v1555 = vunpack.c.h.s8.bf16 %v1107
        %v1556 = vunpack.c.h.s8.bf16 %v1108
        %v1557 = vunpack.c.h.s8.bf16 %v1109
        %v1558 = vunpack.c.l.s8.bf16 %v1110
        %v1559 = vunpack.c.l.s8.bf16 %v1111
        %v1560 = vunpack.c.l.s8.bf16 %v1112
        %v1561 = vunpack.c.l.s8.bf16 %v1113
        %v1562 = vunpack.c.l.s8.bf16 %v1114
        %v1563 = vunpack.c.l.s8.bf16 %v1115
        %v1564 = vunpack.c.l.s8.bf16 %v1116
        %v1565 = vunpack.c.l.s8.bf16 %v1117
        %v1566 = vunpack.c.h.s8.bf16 %v1110
        %v1567 = vunpack.c.h.s8.bf16 %v1111
        %v1568 = vunpack.c.h.s8.bf16 %v1112
        %v1569 = vunpack.c.h.s8.bf16 %v1113
        %v1570 = vunpack.c.h.s8.bf16 %v1114
        %v1571 = vunpack.c.h.s8.bf16 %v1115
        %v1572 = vunpack.c.h.s8.bf16 %v1116
        %v1573 = vunpack.c.h.s8.bf16 %v1117
        %v1574 = vunpack.c.l.s8.bf16 %v1118
        %v1575 = vunpack.c.l.s8.bf16 %v1119
        %v1576 = vunpack.c.l.s8.bf16 %v1120
        %v1577 = vunpack.c.l.s8.bf16 %v1121
        %v1578 = vunpack.c.l.s8.bf16 %v1122
        %v1579 = vunpack.c.l.s8.bf16 %v1123
        %v1580 = vunpack.c.l.s8.bf16 %v1124
        %v1581 = vunpack.c.l.s8.bf16 %v1125
        %v1582 = vunpack.c.h.s8.bf16 %v1118
        %v1583 = vunpack.c.h.s8.bf16 %v1119
        %v1584 = vunpack.c.h.s8.bf16 %v1120
        %v1585 = vunpack.c.h.s8.bf16 %v1121
        %v1586 = vunpack.c.h.s8.bf16 %v1122
        %v1587 = vunpack.c.h.s8.bf16 %v1123
        %v1588 = vunpack.c.h.s8.bf16 %v1124
        %v1589 = vunpack.c.h.s8.bf16 %v1125
        %v1590 = vunpack.c.l.s8.bf16 %v1126
        %v1591 = vunpack.c.l.s8.bf16 %v1127
        %v1592 = vunpack.c.l.s8.bf16 %v1128
        %v1593 = vunpack.c.l.s8.bf16 %v1129
        %v1594 = vunpack.c.l.s8.bf16 %v1130
        %v1595 = vunpack.c.l.s8.bf16 %v1131
        %v1596 = vunpack.c.l.s8.bf16 %v1132
        %v1597 = vunpack.c.l.s8.bf16 %v1133
        %v1598 = vunpack.c.h.s8.bf16 %v1126
        %v1599 = vunpack.c.h.s8.bf16 %v1127
        %v1600 = vunpack.c.h.s8.bf16 %v1128
        %v1601 = vunpack.c.h.s8.bf16 %v1129
        %v1602 = vunpack.c.h.s8.bf16 %v1130
        %v1603 = vunpack.c.h.s8.bf16 %v1131
        %v1604 = vunpack.c.h.s8.bf16 %v1132
        %v1605 = vunpack.c.h.s8.bf16 %v1133
        %v1606 = vunpack.c.l.s8.bf16 %v1134
        %v1607 = vunpack.c.l.s8.bf16 %v1135
        %v1608 = vunpack.c.l.s8.bf16 %v1136
        %v1609 = vunpack.c.l.s8.bf16 %v1137
        %v1610 = vunpack.c.l.s8.bf16 %v1138
        %v1611 = vunpack.c.l.s8.bf16 %v1139
        %v1612 = vunpack.c.l.s8.bf16 %v1140
        %v1613 = vunpack.c.l.s8.bf16 %v1141
        %v1614 = vunpack.c.h.s8.bf16 %v1134
        %v1615 = vunpack.c.h.s8.bf16 %v1135
        %v1616 = vunpack.c.h.s8.bf16 %v1136
        %v1617 = vunpack.c.h.s8.bf16 %v1137
        %v1618 = vunpack.c.h.s8.bf16 %v1138
        %v1619 = vunpack.c.h.s8.bf16 %v1139
        %v1620 = vunpack.c.h.s8.bf16 %v1140
        %v1621 = vunpack.c.h.s8.bf16 %v1141
        %v1622 = vunpack.c.l.s8.bf16 %v1142
        %v1623 = vunpack.c.l.s8.bf16 %v1143
        %v1624 = vunpack.c.l.s8.bf16 %v1144
        %v1625 = vunpack.c.l.s8.bf16 %v1145
        %v1626 = vunpack.c.l.s8.bf16 %v1146
        %v1627 = vunpack.c.l.s8.bf16 %v1147
        %v1628 = vunpack.c.l.s8.bf16 %v1148
        %v1629 = vunpack.c.l.s8.bf16 %v1149
        %v1630 = vunpack.c.h.s8.bf16 %v1142
        %v1631 = vunpack.c.h.s8.bf16 %v1143
        %v1632 = vunpack.c.h.s8.bf16 %v1144
        %v1633 = vunpack.c.h.s8.bf16 %v1145
        %v1634 = vunpack.c.h.s8.bf16 %v1146
        %v1635 = vunpack.c.h.s8.bf16 %v1147
        %v1636 = vunpack.c.h.s8.bf16 %v1148
        %v1637 = vunpack.c.h.s8.bf16 %v1149
        %v1638 = vunpack.c.l.s8.bf16 %v1150
        %v1639 = vunpack.c.l.s8.bf16 %v1151
        %v1640 = vunpack.c.l.s8.bf16 %v1152
        %v1641 = vunpack.c.l.s8.bf16 %v1153
        %v1642 = vunpack.c.l.s8.bf16 %v1154
        %v1643 = vunpack.c.l.s8.bf16 %v1155
        %v1644 = vunpack.c.l.s8.bf16 %v1156
        %v1645 = vunpack.c.l.s8.bf16 %v1157
        %v1646 = vunpack.c.h.s8.bf16 %v1150
        %v1647 = vunpack.c.h.s8.bf16 %v1151
        %v1648 = vunpack.c.h.s8.bf16 %v1152
        %v1649 = vunpack.c.h.s8.bf16 %v1153
        %v1650 = vunpack.c.h.s8.bf16 %v1154
        %v1651 = vunpack.c.h.s8.bf16 %v1155
        %v1652 = vunpack.c.h.s8.bf16 %v1156
        %v1653 = vunpack.c.h.s8.bf16 %v1157
        %v1654 = vunpack.c.l.s8.bf16 %v1158
        %v1655 = vunpack.c.l.s8.bf16 %v1159
        %v1656 = vunpack.c.l.s8.bf16 %v1160
        %v1657 = vunpack.c.l.s8.bf16 %v1161
        %v1658 = vunpack.c.l.s8.bf16 %v1162
        %v1659 = vunpack.c.l.s8.bf16 %v1163
        %v1660 = vunpack.c.l.s8.bf16 %v1164
        %v1661 = vunpack.c.l.s8.bf16 %v1165
        %v1662 = vunpack.c.h.s8.bf16 %v1158
        %v1663 = vunpack.c.h.s8.bf16 %v1159
        %v1664 = vunpack.c.h.s8.bf16 %v1160
        %v1665 = vunpack.c.h.s8.bf16 %v1161
        %v1666 = vunpack.c.h.s8.bf16 %v1162
        %v1667 = vunpack.c.h.s8.bf16 %v1163
        %v1668 = vunpack.c.h.s8.bf16 %v1164
        %v1669 = vunpack.c.h.s8.bf16 %v1165
        %v1670 = vunpack.c.l.s8.bf16 %v1166
        %v1671 = vunpack.c.l.s8.bf16 %v1167
        %v1672 = vunpack.c.l.s8.bf16 %v1168
        %v1673 = vunpack.c.l.s8.bf16 %v1169
        %v1674 = vunpack.c.l.s8.bf16 %v1170
        %v1675 = vunpack.c.l.s8.bf16 %v1171
        %v1676 = vunpack.c.l.s8.bf16 %v1172
        %v1677 = vunpack.c.l.s8.bf16 %v1173
        %v1678 = vunpack.c.h.s8.bf16 %v1166
        %v1679 = vunpack.c.h.s8.bf16 %v1167
        %v1680 = vunpack.c.h.s8.bf16 %v1168
        %v1681 = vunpack.c.h.s8.bf16 %v1169
        %v1682 = vunpack.c.h.s8.bf16 %v1170
        %v1683 = vunpack.c.h.s8.bf16 %v1171
        %v1684 = vunpack.c.h.s8.bf16 %v1172
        %v1685 = vunpack.c.h.s8.bf16 %v1173
        %v1686 = vunpack.c.l.s8.bf16 %v1174
        %v1687 = vunpack.c.l.s8.bf16 %v1175
        %v1688 = vunpack.c.l.s8.bf16 %v1176
        %v1689 = vunpack.c.l.s8.bf16 %v1177
        %v1690 = vunpack.c.l.s8.bf16 %v1178
        %v1691 = vunpack.c.l.s8.bf16 %v1179
        %v1692 = vunpack.c.l.s8.bf16 %v1180
        %v1693 = vunpack.c.l.s8.bf16 %v1181
        %v1694 = vunpack.c.h.s8.bf16 %v1174
        %v1695 = vunpack.c.h.s8.bf16 %v1175
        %v1696 = vunpack.c.h.s8.bf16 %v1176
        %v1697 = vunpack.c.h.s8.bf16 %v1177
        %v1698 = vunpack.c.h.s8.bf16 %v1178
        %v1699 = vunpack.c.h.s8.bf16 %v1179
        %v1700 = vunpack.c.h.s8.bf16 %v1180
        %v1701 = vunpack.c.h.s8.bf16 %v1181
        %v1702 = vunpack.c.l.s8.bf16 %v1182
        %v1703 = vunpack.c.l.s8.bf16 %v1183
        %v1704 = vunpack.c.l.s8.bf16 %v1184
        %v1705 = vunpack.c.l.s8.bf16 %v1185
        %v1706 = vunpack.c.l.s8.bf16 %v1186
        %v1707 = vunpack.c.l.s8.bf16 %v1187
        %v1708 = vunpack.c.l.s8.bf16 %v1188
        %v1709 = vunpack.c.l.s8.bf16 %v1189
        %v1710 = vunpack.c.h.s8.bf16 %v1182
        %v1711 = vunpack.c.h.s8.bf16 %v1183
        %v1712 = vunpack.c.h.s8.bf16 %v1184
        %v1713 = vunpack.c.h.s8.bf16 %v1185
        %v1714 = vunpack.c.h.s8.bf16 %v1186
        %v1715 = vunpack.c.h.s8.bf16 %v1187
        %v1716 = vunpack.c.h.s8.bf16 %v1188
        %v1717 = vunpack.c.h.s8.bf16 %v1189
        %v1718 = vunpack.c.l.s8.bf16 %v1190
        %v1719 = vunpack.c.l.s8.bf16 %v1191
        %v1720 = vunpack.c.l.s8.bf16 %v1192
        %v1721 = vunpack.c.l.s8.bf16 %v1193
        %v1722 = vunpack.c.l.s8.bf16 %v1194
        %v1723 = vunpack.c.l.s8.bf16 %v1195
        %v1724 = vunpack.c.l.s8.bf16 %v1196
        %v1725 = vunpack.c.l.s8.bf16 %v1197
        %v1726 = vunpack.c.h.s8.bf16 %v1190
        %v1727 = vunpack.c.h.s8.bf16 %v1191
        %v1728 = vunpack.c.h.s8.bf16 %v1192
        %v1729 = vunpack.c.h.s8.bf16 %v1193
        %v1730 = vunpack.c.h.s8.bf16 %v1194
        %v1731 = vunpack.c.h.s8.bf16 %v1195
        %v1732 = vunpack.c.h.s8.bf16 %v1196
        %v1733 = vunpack.c.h.s8.bf16 %v1197
        %v1734 = vunpack.c.l.s8.bf16 %v1198
        %v1735 = vunpack.c.l.s8.bf16 %v1199
        %v1736 = vunpack.c.l.s8.bf16 %v1200
        %v1737 = vunpack.c.l.s8.bf16 %v1201
        %v1738 = vunpack.c.l.s8.bf16 %v1202
        %v1739 = vunpack.c.l.s8.bf16 %v1203
        %v1740 = vunpack.c.l.s8.bf16 %v1204
        %v1741 = vunpack.c.l.s8.bf16 %v1205
        %v1742 = vunpack.c.h.s8.bf16 %v1198
        %v1743 = vunpack.c.h.s8.bf16 %v1199
        %v1744 = vunpack.c.h.s8.bf16 %v1200
        %v1745 = vunpack.c.h.s8.bf16 %v1201
        %v1746 = vunpack.c.h.s8.bf16 %v1202
        %v1747 = vunpack.c.h.s8.bf16 %v1203
        %v1748 = vunpack.c.h.s8.bf16 %v1204
        %v1749 = vunpack.c.h.s8.bf16 %v1205
        %v1750 = vunpack.c.l.s8.bf16 %v1206
        %v1751 = vunpack.c.l.s8.bf16 %v1207
        %v1752 = vunpack.c.l.s8.bf16 %v1208
        %v1753 = vunpack.c.l.s8.bf16 %v1209
        %v1754 = vunpack.c.l.s8.bf16 %v1210
        %v1755 = vunpack.c.l.s8.bf16 %v1211
        %v1756 = vunpack.c.l.s8.bf16 %v1212
        %v1757 = vunpack.c.l.s8.bf16 %v1213
        %v1758 = vunpack.c.h.s8.bf16 %v1206
        %v1759 = vunpack.c.h.s8.bf16 %v1207
        %v1760 = vunpack.c.h.s8.bf16 %v1208
        %v1761 = vunpack.c.h.s8.bf16 %v1209
        %v1762 = vunpack.c.h.s8.bf16 %v1210
        %v1763 = vunpack.c.h.s8.bf16 %v1211
        %v1764 = vunpack.c.h.s8.bf16 %v1212
        %v1765 = vunpack.c.h.s8.bf16 %v1213
        %v1766 = vunpack.c.l.s8.bf16 %v1214
        %v1767 = vunpack.c.l.s8.bf16 %v1215
        %v1768 = vunpack.c.l.s8.bf16 %v1216
        %v1769 = vunpack.c.l.s8.bf16 %v1217
        %v1770 = vunpack.c.l.s8.bf16 %v1218
        %v1771 = vunpack.c.l.s8.bf16 %v1219
        %v1772 = vunpack.c.l.s8.bf16 %v1220
        %v1773 = vunpack.c.l.s8.bf16 %v1221
        %v1774 = vunpack.c.h.s8.bf16 %v1214
        %v1775 = vunpack.c.h.s8.bf16 %v1215
        %v1776 = vunpack.c.h.s8.bf16 %v1216
        %v1777 = vunpack.c.h.s8.bf16 %v1217
        %v1778 = vunpack.c.h.s8.bf16 %v1218
        %v1779 = vunpack.c.h.s8.bf16 %v1219
        %v1780 = vunpack.c.h.s8.bf16 %v1220
        %v1781 = vunpack.c.h.s8.bf16 %v1221
        %v1782 = vunpack.c.l.s8.bf16 %v1222
        %v1783 = vunpack.c.l.s8.bf16 %v1223
        %v1784 = vunpack.c.l.s8.bf16 %v1224
        %v1785 = vunpack.c.l.s8.bf16 %v1225
        %v1786 = vunpack.c.l.s8.bf16 %v1226
        %v1787 = vunpack.c.l.s8.bf16 %v1227
        %v1788 = vunpack.c.l.s8.bf16 %v1228
        %v1789 = vunpack.c.l.s8.bf16 %v1229
        %v1790 = vunpack.c.h.s8.bf16 %v1222
        %v1791 = vunpack.c.h.s8.bf16 %v1223
        %v1792 = vunpack.c.h.s8.bf16 %v1224
        %v1793 = vunpack.c.h.s8.bf16 %v1225
        %v1794 = vunpack.c.h.s8.bf16 %v1226
        %v1795 = vunpack.c.h.s8.bf16 %v1227
        %v1796 = vunpack.c.h.s8.bf16 %v1228
        %v1797 = vunpack.c.h.s8.bf16 %v1229
        %v1798 = vunpack.c.l.s8.bf16 %v1230
        %v1799 = vunpack.c.l.s8.bf16 %v1231
        %v1800 = vunpack.c.l.s8.bf16 %v1232
        %v1801 = vunpack.c.l.s8.bf16 %v1233
        %v1802 = vunpack.c.l.s8.bf16 %v1234
        %v1803 = vunpack.c.l.s8.bf16 %v1235
        %v1804 = vunpack.c.l.s8.bf16 %v1236
        %v1805 = vunpack.c.l.s8.bf16 %v1237
        %v1806 = vunpack.c.h.s8.bf16 %v1230
        %v1807 = vunpack.c.h.s8.bf16 %v1231
        %v1808 = vunpack.c.h.s8.bf16 %v1232
        %v1809 = vunpack.c.h.s8.bf16 %v1233
        %v1810 = vunpack.c.h.s8.bf16 %v1234
        %v1811 = vunpack.c.h.s8.bf16 %v1235
        %v1812 = vunpack.c.h.s8.bf16 %v1236
        %v1813 = vunpack.c.h.s8.bf16 %v1237
        %v1814 = vunpack.c.l.s8.bf16 %v1238
        %v1815 = vunpack.c.l.s8.bf16 %v1239
        %v1816 = vunpack.c.l.s8.bf16 %v1240
        %v1817 = vunpack.c.l.s8.bf16 %v1241
        %v1818 = vunpack.c.l.s8.bf16 %v1242
        %v1819 = vunpack.c.l.s8.bf16 %v1243
        %v1820 = vunpack.c.l.s8.bf16 %v1244
        %v1821 = vunpack.c.l.s8.bf16 %v1245
        %v1822 = vunpack.c.h.s8.bf16 %v1238
        %v1823 = vunpack.c.h.s8.bf16 %v1239
        %v1824 = vunpack.c.h.s8.bf16 %v1240
        %v1825 = vunpack.c.h.s8.bf16 %v1241
        %v1826 = vunpack.c.h.s8.bf16 %v1242
        %v1827 = vunpack.c.h.s8.bf16 %v1243
        %v1828 = vunpack.c.h.s8.bf16 %v1244
        %v1829 = vunpack.c.h.s8.bf16 %v1245
        %v1830 = vunpack.c.l.s8.bf16 %v1246
        %v1831 = vunpack.c.l.s8.bf16 %v1247
        %v1832 = vunpack.c.l.s8.bf16 %v1248
        %v1833 = vunpack.c.l.s8.bf16 %v1249
        %v1834 = vunpack.c.l.s8.bf16 %v1250
        %v1835 = vunpack.c.l.s8.bf16 %v1251
        %v1836 = vunpack.c.l.s8.bf16 %v1252
        %v1837 = vunpack.c.l.s8.bf16 %v1253
        %v1838 = vunpack.c.h.s8.bf16 %v1246
        %v1839 = vunpack.c.h.s8.bf16 %v1247
        %v1840 = vunpack.c.h.s8.bf16 %v1248
        %v1841 = vunpack.c.h.s8.bf16 %v1249
        %v1842 = vunpack.c.h.s8.bf16 %v1250
        %v1843 = vunpack.c.h.s8.bf16 %v1251
        %v1844 = vunpack.c.h.s8.bf16 %v1252
        %v1845 = vunpack.c.h.s8.bf16 %v1253
        %v1846 = vunpack.c.l.s8.bf16 %v1254
        %v1847 = vunpack.c.l.s8.bf16 %v1255
        %v1848 = vunpack.c.l.s8.bf16 %v1256
        %v1849 = vunpack.c.l.s8.bf16 %v1257
        %v1850 = vunpack.c.l.s8.bf16 %v1258
        %v1851 = vunpack.c.l.s8.bf16 %v1259
        %v1852 = vunpack.c.l.s8.bf16 %v1260
        %v1853 = vunpack.c.l.s8.bf16 %v1261
        %v1854 = vunpack.c.h.s8.bf16 %v1254
        %v1855 = vunpack.c.h.s8.bf16 %v1255
        %v1856 = vunpack.c.h.s8.bf16 %v1256
        %v1857 = vunpack.c.h.s8.bf16 %v1257
        %v1858 = vunpack.c.h.s8.bf16 %v1258
        %v1859 = vunpack.c.h.s8.bf16 %v1259
        %v1860 = vunpack.c.h.s8.bf16 %v1260
        %v1861 = vunpack.c.h.s8.bf16 %v1261
        %v1862 = vunpack.c.l.s8.bf16 %v1262
        %v1863 = vunpack.c.l.s8.bf16 %v1263
        %v1864 = vunpack.c.l.s8.bf16 %v1264
        %v1865 = vunpack.c.l.s8.bf16 %v1265
        %v1866 = vunpack.c.l.s8.bf16 %v1266
        %v1867 = vunpack.c.l.s8.bf16 %v1267
        %v1868 = vunpack.c.l.s8.bf16 %v1268
        %v1869 = vunpack.c.l.s8.bf16 %v1269
        %v1870 = vunpack.c.h.s8.bf16 %v1262
        %v1871 = vunpack.c.h.s8.bf16 %v1263
        %v1872 = vunpack.c.h.s8.bf16 %v1264
        %v1873 = vunpack.c.h.s8.bf16 %v1265
        %v1874 = vunpack.c.h.s8.bf16 %v1266
        %v1875 = vunpack.c.h.s8.bf16 %v1267
        %v1876 = vunpack.c.h.s8.bf16 %v1268
        %v1877 = vunpack.c.h.s8.bf16 %v1269
        %v1878 = vunpack.c.l.s8.bf16 %v1270
        %v1879 = vunpack.c.l.s8.bf16 %v1271
        %v1880 = vunpack.c.l.s8.bf16 %v1272
        %v1881 = vunpack.c.l.s8.bf16 %v1273
        %v1882 = vunpack.c.l.s8.bf16 %v1274
        %v1883 = vunpack.c.l.s8.bf16 %v1275
        %v1884 = vunpack.c.l.s8.bf16 %v1276
        %v1885 = vunpack.c.l.s8.bf16 %v1277
        %v1886 = vunpack.c.h.s8.bf16 %v1270
        %v1887 = vunpack.c.h.s8.bf16 %v1271
        %v1888 = vunpack.c.h.s8.bf16 %v1272
        %v1889 = vunpack.c.h.s8.bf16 %v1273
        %v1890 = vunpack.c.h.s8.bf16 %v1274
        %v1891 = vunpack.c.h.s8.bf16 %v1275
        %v1892 = vunpack.c.h.s8.bf16 %v1276
        %v1893 = vunpack.c.h.s8.bf16 %v1277
        %v1894 = vunpack.c.l.s8.bf16 %v1278
        %v1895 = vunpack.c.l.s8.bf16 %v1279
        %v1896 = vunpack.c.l.s8.bf16 %v1280
        %v1897 = vunpack.c.l.s8.bf16 %v1281
        %v1898 = vunpack.c.l.s8.bf16 %v1282
        %v1899 = vunpack.c.l.s8.bf16 %v1283
        %v1900 = vunpack.c.l.s8.bf16 %v1284
        %v1901 = vunpack.c.l.s8.bf16 %v1285
        %v1902 = vunpack.c.h.s8.bf16 %v1278
        %v1903 = vunpack.c.h.s8.bf16 %v1279
        %v1904 = vunpack.c.h.s8.bf16 %v1280
        %v1905 = vunpack.c.h.s8.bf16 %v1281
        %v1906 = vunpack.c.h.s8.bf16 %v1282
        %v1907 = vunpack.c.h.s8.bf16 %v1283
        %v1908 = vunpack.c.h.s8.bf16 %v1284
        %v1909 = vunpack.c.h.s8.bf16 %v1285
        %v1910 = vunpack.c.l.s8.bf16 %v1286
        %v1911 = vunpack.c.l.s8.bf16 %v1287
        %v1912 = vunpack.c.l.s8.bf16 %v1288
        %v1913 = vunpack.c.l.s8.bf16 %v1289
        %v1914 = vunpack.c.l.s8.bf16 %v1290
        %v1915 = vunpack.c.l.s8.bf16 %v1291
        %v1916 = vunpack.c.l.s8.bf16 %v1292
        %v1917 = vunpack.c.l.s8.bf16 %v1293
        %v1918 = vunpack.c.h.s8.bf16 %v1286
        %v1919 = vunpack.c.h.s8.bf16 %v1287
        %v1920 = vunpack.c.h.s8.bf16 %v1288
        %v1921 = vunpack.c.h.s8.bf16 %v1289
        %v1922 = vunpack.c.h.s8.bf16 %v1290
        %v1923 = vunpack.c.h.s8.bf16 %v1291
        %v1924 = vunpack.c.h.s8.bf16 %v1292
        %v1925 = vunpack.c.h.s8.bf16 %v1293
        %v1926 = vunpack.c.l.s8.bf16 %v1294
        %v1927 = vunpack.c.l.s8.bf16 %v1295
        %v1928 = vunpack.c.l.s8.bf16 %v1296
        %v1929 = vunpack.c.l.s8.bf16 %v1297
        %v1930 = vunpack.c.l.s8.bf16 %v1298
        %v1931 = vunpack.c.l.s8.bf16 %v1299
        %v1932 = vunpack.c.l.s8.bf16 %v1300
        %v1933 = vunpack.c.l.s8.bf16 %v1301
        %v1934 = vunpack.c.h.s8.bf16 %v1294
        %v1935 = vunpack.c.h.s8.bf16 %v1295
        %v1936 = vunpack.c.h.s8.bf16 %v1296
        %v1937 = vunpack.c.h.s8.bf16 %v1297
        %v1938 = vunpack.c.h.s8.bf16 %v1298
        %v1939 = vunpack.c.h.s8.bf16 %v1299
        %v1940 = vunpack.c.h.s8.bf16 %v1300
        %v1941 = vunpack.c.h.s8.bf16 %v1301
        %v1942 = vld [vmem:[#allocation2] sm:$0xff]
        %v1943 = vld [vmem:[#allocation2 + $0x8] sm:$0xff]
        %v1944 = vld [vmem:[#allocation2 + $0x10] sm:$0xff]
        %v1945 = vld [vmem:[#allocation2 + $0x18] sm:$0xff]
        %v1946 = vld [vmem:[#allocation2 + $0x20] sm:$0xff]
        %v1952 = vunpack.c.l.b16 %v1942
        %v1953 = vunpack.c.h.b16 %v1942
        %v1954 = vunpack.c.l.b16 %v1943
        %v1955 = vunpack.c.h.b16 %v1943
        %v1956 = vunpack.c.l.b16 %v1944
        %v1957 = vunpack.c.h.b16 %v1944
        %v1958 = vunpack.c.l.b16 %v1945
        %v1959 = vunpack.c.h.b16 %v1945
        %v1960 = vunpack.c.l.b16 %v1946
        %v1961 = vunpack.c.h.b16 %v1946
        %v1962 = vpack.c.b16 %v1952, %v1952
        %v1963 = vpack.c.b16 %v1953, %v1953
        %v1964 = vpack.c.b16 %v1954, %v1954
        %v1965 = vpack.c.b16 %v1955, %v1955
        %v1966 = vpack.c.b16 %v1956, %v1956
        %v1967 = vpack.c.b16 %v1957, %v1957
        %v1968 = vpack.c.b16 %v1958, %v1958
        %v1969 = vpack.c.b16 %v1959, %v1959
        %v1970 = vpack.c.b16 %v1960, %v1960
        %v1971 = vpack.c.b16 %v1961, %v1961
        %1982 = vmatprep.subr.bf16.mxu0 %v1359
        %1983 = vmatpush1.bf16.msra.mxu0 %v1358
        %1984 = vmatprep.subr.bf16.mxu0 %v1351
        %1985 = vmatpush1.bf16.msra.mxu0 %v1350
        %1986 = vmatprep.subr.bf16.mxu0 %v1343
        %1987 = vmatpush1.bf16.msra.mxu0 %v1342
        %1988 = vmatprep.subr.bf16.mxu0 %v1335
        %1989 = vmatpush1.bf16.msra.mxu0 %v1334
        %1990 = vmatprep.subr.bf16.mxu0 %v1327
        %1991 = vmatpush1.bf16.msra.mxu0 %v1326
        %1992 = vmatprep.subr.bf16.mxu0 %v1319
        %1993 = vmatpush1.bf16.msra.mxu0 %v1318
        %1994 = vmatprep.subr.bf16.mxu0 %v1311
        %1995 = vmatpush1.bf16.msra.mxu0 %v1310
        %1996 = vmatprep.subr.bf16.mxu0 %v1303
        %1997 = vmatpush1.bf16.msra.mxu0 %v1302
        %1998 = vmatprep.subr.bf16.mxu0 %v1423
        %1999 = vmatpush2.bf16.msra.mxu0 %v1422
        %2000 = vmatprep.subr.bf16.mxu0 %v1415
        %2001 = vmatpush2.bf16.msra.mxu0 %v1414
        %2002 = vmatprep.subr.bf16.mxu0 %v1407
        %2003 = vmatpush2.bf16.msra.mxu0 %v1406
        %2004 = vmatprep.subr.bf16.mxu0 %v1399
        %2005 = vmatpush2.bf16.msra.mxu0 %v1398
        %2006 = vmatprep.subr.bf16.mxu0 %v1391
        %2007 = vmatpush2.bf16.msra.mxu0 %v1390
        %2008 = vmatprep.subr.bf16.mxu0 %v1383
        %2009 = vmatpush2.bf16.msra.mxu0 %v1382
        %2010 = vmatprep.subr.bf16.mxu0 %v1375
        %2011 = vmatpush2.bf16.msra.mxu0 %v1374
        %2012 = vmatprep.subr.bf16.mxu0 %v1367
        %2013 = vmatpush2.bf16.msra.mxu0 %v1366
        %2014 = vmatprep.mubr.bf16.mxu0 %v1963
        %2015 = vmatmul.mubr.bf16.gmra.mxu0 %v1962
        %v2016 = vpop.f32.mrf.mxu0
        %v2017 = vadd.f32 0.0, %v2016
        %v2018 = vpop.f32.mrf.mxu0
        %v2019 = vadd.f32 0.0, %v2018
        %v2020 = vpop.f32.mrf.mxu0
        %v2021 = vpop.f32.mrf.mxu0
        %2022 = vdwg.mxu0
        %2023 = vmatprep.subr.bf16.mxu0 %v1487
        %2024 = vmatpush1.bf16.msra.mxu0 %v1486
        %2025 = vmatprep.subr.bf16.mxu0 %v1479
        %2026 = vmatpush1.bf16.msra.mxu0 %v1478
        %2027 = vmatprep.subr.bf16.mxu0 %v1471
        %2028 = vmatpush1.bf16.msra.mxu0 %v1470
        %2029 = vmatprep.subr.bf16.mxu0 %v1463
        %2030 = vmatpush1.bf16.msra.mxu0 %v1462
        %2031 = vmatprep.subr.bf16.mxu0 %v1455
        %2032 = vmatpush1.bf16.msra.mxu0 %v1454
        %2033 = vmatprep.subr.bf16.mxu0 %v1447
        %2034 = vmatpush1.bf16.msra.mxu0 %v1446
        %2035 = vmatprep.subr.bf16.mxu0 %v1439
        %2036 = vmatpush1.bf16.msra.mxu0 %v1438
        %2037 = vmatprep.subr.bf16.mxu0 %v1431
        %2038 = vmatpush1.bf16.msra.mxu0 %v1430
        %2039 = vmatprep.subr.bf16.mxu0 %v1551
        %2040 = vmatpush2.bf16.msra.mxu0 %v1550
        %2041 = vmatprep.subr.bf16.mxu0 %v1543
        %2042 = vmatpush2.bf16.msra.mxu0 %v1542
        %2043 = vmatprep.subr.bf16.mxu0 %v1535
        %2044 = vmatpush2.bf16.msra.mxu0 %v1534
        %2045 = vmatprep.subr.bf16.mxu0 %v1527
        %2046 = vmatpush2.bf16.msra.mxu0 %v1526
        %2047 = vmatprep.subr.bf16.mxu0 %v1519
        %2048 = vmatpush2.bf16.msra.mxu0 %v1518
        %2049 = vmatprep.subr.bf16.mxu0 %v1511
        %2050 = vmatpush2.bf16.msra.mxu0 %v1510
        %2051 = vmatprep.subr.bf16.mxu0 %v1503
        %2052 = vmatpush2.bf16.msra.mxu0 %v1502
        %2053 = vmatprep.subr.bf16.mxu0 %v1495
        %2054 = vmatpush2.bf16.msra.mxu0 %v1494
        %2055 = vmatprep.mubr.bf16.mxu0 %v1965
        %2056 = vmatmul.mubr.bf16.gmra.mxu0 %v1964
        %v2057 = vpop.f32.mrf.mxu0
        %v2058 = vadd.f32 %v2017, %v2057
        %v2059 = vpop.f32.mrf.mxu0
        %v2060 = vadd.f32 %v2019, %v2059
        %v2061 = vpop.f32.mrf.mxu0
        %v2062 = vpop.f32.mrf.mxu0
        %2063 = vdwg.mxu0
        %2064 = vmatprep.subr.bf16.mxu0 %v1615
        %2065 = vmatpush1.bf16.msra.mxu0 %v1614
        %2066 = vmatprep.subr.bf16.mxu0 %v1607
        %2067 = vmatpush1.bf16.msra.mxu0 %v1606
        %2068 = vmatprep.subr.bf16.mxu0 %v1599
        %2069 = vmatpush1.bf16.msra.mxu0 %v1598
        %2070 = vmatprep.subr.bf16.mxu0 %v1591
        %2071 = vmatpush1.bf16.msra.mxu0 %v1590
        %2072 = vmatprep.subr.bf16.mxu0 %v1583
        %2073 = vmatpush1.bf16.msra.mxu0 %v1582
        %2074 = vmatprep.subr.bf16.mxu0 %v1575
        %2075 = vmatpush1.bf16.msra.mxu0 %v1574
        %2076 = vmatprep.subr.bf16.mxu0 %v1567
        %2077 = vmatpush1.bf16.msra.mxu0 %v1566
        %2078 = vmatprep.subr.bf16.mxu0 %v1559
        %2079 = vmatpush1.bf16.msra.mxu0 %v1558
        %2080 = vmatprep.subr.bf16.mxu0 %v1679
        %2081 = vmatpush2.bf16.msra.mxu0 %v1678
        %2082 = vmatprep.subr.bf16.mxu0 %v1671
        %2083 = vmatpush2.bf16.msra.mxu0 %v1670
        %2084 = vmatprep.subr.bf16.mxu0 %v1663
        %2085 = vmatpush2.bf16.msra.mxu0 %v1662
        %2086 = vmatprep.subr.bf16.mxu0 %v1655
        %2087 = vmatpush2.bf16.msra.mxu0 %v1654
        %2088 = vmatprep.subr.bf16.mxu0 %v1647
        %2089 = vmatpush2.bf16.msra.mxu0 %v1646
        %2090 = vmatprep.subr.bf16.mxu0 %v1639
        %2091 = vmatpush2.bf16.msra.mxu0 %v1638
        %2092 = vmatprep.subr.bf16.mxu0 %v1631
        %2093 = vmatpush2.bf16.msra.mxu0 %v1630
        %2094 = vmatprep.subr.bf16.mxu0 %v1623
        %2095 = vmatpush2.bf16.msra.mxu0 %v1622
        %2096 = vmatprep.mubr.bf16.mxu0 %v1967
        %2097 = vmatmul.mubr.bf16.gmra.mxu0 %v1966
        %v2098 = vpop.f32.mrf.mxu0
        %v2099 = vadd.f32 %v2058, %v2098
        %v2100 = vpop.f32.mrf.mxu0
        %v2101 = vadd.f32 %v2060, %v2100
        %v2102 = vpop.f32.mrf.mxu0
        %v2103 = vpop.f32.mrf.mxu0
        %2104 = vdwg.mxu0
        %2105 = vmatprep.subr.bf16.mxu0 %v1743
        %2106 = vmatpush1.bf16.msra.mxu0 %v1742
        %2107 = vmatprep.subr.bf16.mxu0 %v1735
        %2108 = vmatpush1.bf16.msra.mxu0 %v1734
        %2109 = vmatprep.subr.bf16.mxu0 %v1727
        %2110 = vmatpush1.bf16.msra.mxu0 %v1726
        %2111 = vmatprep.subr.bf16.mxu0 %v1719
        %2112 = vmatpush1.bf16.msra.mxu0 %v1718
        %2113 = vmatprep.subr.bf16.mxu0 %v1711
        %2114 = vmatpush1.bf16.msra.mxu0 %v1710
        %2115 = vmatprep.subr.bf16.mxu0 %v1703
        %2116 = vmatpush1.bf16.msra.mxu0 %v1702
        %2117 = vmatprep.subr.bf16.mxu0 %v1695
        %2118 = vmatpush1.bf16.msra.mxu0 %v1694
        %2119 = vmatprep.subr.bf16.mxu0 %v1687
        %2120 = vmatpush1.bf16.msra.mxu0 %v1686
        %2121 = vmatprep.subr.bf16.mxu0 %v1807
        %2122 = vmatpush2.bf16.msra.mxu0 %v1806
        %2123 = vmatprep.subr.bf16.mxu0 %v1799
        %2124 = vmatpush2.bf16.msra.mxu0 %v1798
        %2125 = vmatprep.subr.bf16.mxu0 %v1791
        %2126 = vmatpush2.bf16.msra.mxu0 %v1790
        %2127 = vmatprep.subr.bf16.mxu0 %v1783
        %2128 = vmatpush2.bf16.msra.mxu0 %v1782
        %2129 = vmatprep.subr.bf16.mxu0 %v1775
        %2130 = vmatpush2.bf16.msra.mxu0 %v1774
        %2131 = vmatprep.subr.bf16.mxu0 %v1767
        %2132 = vmatpush2.bf16.msra.mxu0 %v1766
        %2133 = vmatprep.subr.bf16.mxu0 %v1759
        %2134 = vmatpush2.bf16.msra.mxu0 %v1758
        %2135 = vmatprep.subr.bf16.mxu0 %v1751
        %2136 = vmatpush2.bf16.msra.mxu0 %v1750
        %2137 = vmatprep.mubr.bf16.mxu0 %v1969
        %2138 = vmatmul.mubr.bf16.gmra.mxu0 %v1968
        %v2139 = vpop.f32.mrf.mxu0
        %v2140 = vadd.f32 %v2099, %v2139
        %v2141 = vpop.f32.mrf.mxu0
        %v2142 = vadd.f32 %v2101, %v2141
        %v2143 = vpop.f32.mrf.mxu0
        %v2144 = vpop.f32.mrf.mxu0
        %2145 = vdwg.mxu0
        %2146 = vmatprep.subr.bf16.mxu0 %v1871
        %2147 = vmatpush1.bf16.msra.mxu0 %v1870
        %2148 = vmatprep.subr.bf16.mxu0 %v1863
        %2149 = vmatpush1.bf16.msra.mxu0 %v1862
        %2150 = vmatprep.subr.bf16.mxu0 %v1855
        %2151 = vmatpush1.bf16.msra.mxu0 %v1854
        %2152 = vmatprep.subr.bf16.mxu0 %v1847
        %2153 = vmatpush1.bf16.msra.mxu0 %v1846
        %2154 = vmatprep.subr.bf16.mxu0 %v1839
        %2155 = vmatpush1.bf16.msra.mxu0 %v1838
        %2156 = vmatprep.subr.bf16.mxu0 %v1831
        %2157 = vmatpush1.bf16.msra.mxu0 %v1830
        %2158 = vmatprep.subr.bf16.mxu0 %v1823
        %2159 = vmatpush1.bf16.msra.mxu0 %v1822
        %2160 = vmatprep.subr.bf16.mxu0 %v1815
        %2161 = vmatpush1.bf16.msra.mxu0 %v1814
        %2162 = vmatprep.subr.bf16.mxu0 %v1935
        %2163 = vmatpush2.bf16.msra.mxu0 %v1934
        %2164 = vmatprep.subr.bf16.mxu0 %v1927
        %2165 = vmatpush2.bf16.msra.mxu0 %v1926
        %2166 = vmatprep.subr.bf16.mxu0 %v1919
        %2167 = vmatpush2.bf16.msra.mxu0 %v1918
        %2168 = vmatprep.subr.bf16.mxu0 %v1911
        %2169 = vmatpush2.bf16.msra.mxu0 %v1910
        %2170 = vmatprep.subr.bf16.mxu0 %v1903
        %2171 = vmatpush2.bf16.msra.mxu0 %v1902
        %2172 = vmatprep.subr.bf16.mxu0 %v1895
        %2173 = vmatpush2.bf16.msra.mxu0 %v1894
        %2174 = vmatprep.subr.bf16.mxu0 %v1887
        %2175 = vmatpush2.bf16.msra.mxu0 %v1886
        %2176 = vmatprep.subr.bf16.mxu0 %v1879
        %2177 = vmatpush2.bf16.msra.mxu0 %v1878
        %2178 = vmatprep.mubr.bf16.mxu0 %v1971
        %2179 = vmatmul.mubr.bf16.gmra.mxu0 %v1970
        %v2180 = vpop.f32.mrf.mxu0
        %v2181 = vadd.f32 %v2140, %v2180
        %v2182 = vpop.f32.mrf.mxu0
        %v2183 = vadd.f32 %v2142, %v2182
        %v2184 = vpop.f32.mrf.mxu0
        %v2185 = vpop.f32.mrf.mxu0
        %2186 = vdwg.mxu0
        %2187 = vmatprep.subr.bf16.mxu0 %v1361
        %2188 = vmatpush1.bf16.msra.mxu0 %v1360
        %2189 = vmatprep.subr.bf16.mxu0 %v1353
        %2190 = vmatpush1.bf16.msra.mxu0 %v1352
        %2191 = vmatprep.subr.bf16.mxu0 %v1345
        %2192 = vmatpush1.bf16.msra.mxu0 %v1344
        %2193 = vmatprep.subr.bf16.mxu0 %v1337
        %2194 = vmatpush1.bf16.msra.mxu0 %v1336
        %2195 = vmatprep.subr.bf16.mxu0 %v1329
        %2196 = vmatpush1.bf16.msra.mxu0 %v1328
        %2197 = vmatprep.subr.bf16.mxu0 %v1321
        %2198 = vmatpush1.bf16.msra.mxu0 %v1320
        %2199 = vmatprep.subr.bf16.mxu0 %v1313
        %2200 = vmatpush1.bf16.msra.mxu0 %v1312
        %2201 = vmatprep.subr.bf16.mxu0 %v1305
        %2202 = vmatpush1.bf16.msra.mxu0 %v1304
        %2203 = vmatprep.subr.bf16.mxu0 %v1425
        %2204 = vmatpush2.bf16.msra.mxu0 %v1424
        %2205 = vmatprep.subr.bf16.mxu0 %v1417
        %2206 = vmatpush2.bf16.msra.mxu0 %v1416
        %2207 = vmatprep.subr.bf16.mxu0 %v1409
        %2208 = vmatpush2.bf16.msra.mxu0 %v1408
        %2209 = vmatprep.subr.bf16.mxu0 %v1401
        %2210 = vmatpush2.bf16.msra.mxu0 %v1400
        %2211 = vmatprep.subr.bf16.mxu0 %v1393
        %2212 = vmatpush2.bf16.msra.mxu0 %v1392
        %2213 = vmatprep.subr.bf16.mxu0 %v1385
        %2214 = vmatpush2.bf16.msra.mxu0 %v1384
        %2215 = vmatprep.subr.bf16.mxu0 %v1377
        %2216 = vmatpush2.bf16.msra.mxu0 %v1376
        %2217 = vmatprep.subr.bf16.mxu0 %v1369
        %2218 = vmatpush2.bf16.msra.mxu0 %v1368
        %2219 = vmatprep.mubr.bf16.mxu0 %v1963
        %2220 = vmatmul.mubr.bf16.gmra.mxu0 %v1962
        %v2221 = vpop.f32.mrf.mxu0
        %v2222 = vadd.f32 0.0, %v2221
        %v2223 = vpop.f32.mrf.mxu0
        %v2224 = vadd.f32 0.0, %v2223
        %v2225 = vpop.f32.mrf.mxu0
        %v2226 = vpop.f32.mrf.mxu0
        %2227 = vdwg.mxu0
        %2228 = vmatprep.subr.bf16.mxu0 %v1489
        %2229 = vmatpush1.bf16.msra.mxu0 %v1488
        %2230 = vmatprep.subr.bf16.mxu0 %v1481
        %2231 = vmatpush1.bf16.msra.mxu0 %v1480
        %2232 = vmatprep.subr.bf16.mxu0 %v1473
        %2233 = vmatpush1.bf16.msra.mxu0 %v1472
        %2234 = vmatprep.subr.bf16.mxu0 %v1465
        %2235 = vmatpush1.bf16.msra.mxu0 %v1464
        %2236 = vmatprep.subr.bf16.mxu0 %v1457
        %2237 = vmatpush1.bf16.msra.mxu0 %v1456
        %2238 = vmatprep.subr.bf16.mxu0 %v1449
        %2239 = vmatpush1.bf16.msra.mxu0 %v1448
        %2240 = vmatprep.subr.bf16.mxu0 %v1441
        %2241 = vmatpush1.bf16.msra.mxu0 %v1440
        %2242 = vmatprep.subr.bf16.mxu0 %v1433
        %2243 = vmatpush1.bf16.msra.mxu0 %v1432
        %2244 = vmatprep.subr.bf16.mxu0 %v1553
        %2245 = vmatpush2.bf16.msra.mxu0 %v1552
        %2246 = vmatprep.subr.bf16.mxu0 %v1545
        %2247 = vmatpush2.bf16.msra.mxu0 %v1544
        %2248 = vmatprep.subr.bf16.mxu0 %v1537
        %2249 = vmatpush2.bf16.msra.mxu0 %v1536
        %2250 = vmatprep.subr.bf16.mxu0 %v1529
        %2251 = vmatpush2.bf16.msra.mxu0 %v1528
        %2252 = vmatprep.subr.bf16.mxu0 %v1521
        %2253 = vmatpush2.bf16.msra.mxu0 %v1520
        %2254 = vmatprep.subr.bf16.mxu0 %v1513
        %2255 = vmatpush2.bf16.msra.mxu0 %v1512
        %2256 = vmatprep.subr.bf16.mxu0 %v1505
        %2257 = vmatpush2.bf16.msra.mxu0 %v1504
        %2258 = vmatprep.subr.bf16.mxu0 %v1497
        %2259 = vmatpush2.bf16.msra.mxu0 %v1496
        %2260 = vmatprep.mubr.bf16.mxu0 %v1965
        %2261 = vmatmul.mubr.bf16.gmra.mxu0 %v1964
        %v2262 = vpop.f32.mrf.mxu0
        %v2263 = vadd.f32 %v2222, %v2262
        %v2264 = vpop.f32.mrf.mxu0
        %v2265 = vadd.f32 %v2224, %v2264
        %v2266 = vpop.f32.mrf.mxu0
        %v2267 = vpop.f32.mrf.mxu0
        %2268 = vdwg.mxu0
        %2269 = vmatprep.subr.bf16.mxu0 %v1617
        %2270 = vmatpush1.bf16.msra.mxu0 %v1616
        %2271 = vmatprep.subr.bf16.mxu0 %v1609
        %2272 = vmatpush1.bf16.msra.mxu0 %v1608
        %2273 = vmatprep.subr.bf16.mxu0 %v1601
        %2274 = vmatpush1.bf16.msra.mxu0 %v1600
        %2275 = vmatprep.subr.bf16.mxu0 %v1593
        %2276 = vmatpush1.bf16.msra.mxu0 %v1592
        %2277 = vmatprep.subr.bf16.mxu0 %v1585
        %2278 = vmatpush1.bf16.msra.mxu0 %v1584
        %2279 = vmatprep.subr.bf16.mxu0 %v1577
        %2280 = vmatpush1.bf16.msra.mxu0 %v1576
        %2281 = vmatprep.subr.bf16.mxu0 %v1569
        %2282 = vmatpush1.bf16.msra.mxu0 %v1568
        %2283 = vmatprep.subr.bf16.mxu0 %v1561
        %2284 = vmatpush1.bf16.msra.mxu0 %v1560
        %2285 = vmatprep.subr.bf16.mxu0 %v1681
        %2286 = vmatpush2.bf16.msra.mxu0 %v1680
        %2287 = vmatprep.subr.bf16.mxu0 %v1673
        %2288 = vmatpush2.bf16.msra.mxu0 %v1672
        %2289 = vmatprep.subr.bf16.mxu0 %v1665
        %2290 = vmatpush2.bf16.msra.mxu0 %v1664
        %2291 = vmatprep.subr.bf16.mxu0 %v1657
        %2292 = vmatpush2.bf16.msra.mxu0 %v1656
        %2293 = vmatprep.subr.bf16.mxu0 %v1649
        %2294 = vmatpush2.bf16.msra.mxu0 %v1648
        %2295 = vmatprep.subr.bf16.mxu0 %v1641
        %2296 = vmatpush2.bf16.msra.mxu0 %v1640
        %2297 = vmatprep.subr.bf16.mxu0 %v1633
        %2298 = vmatpush2.bf16.msra.mxu0 %v1632
        %2299 = vmatprep.subr.bf16.mxu0 %v1625
        %2300 = vmatpush2.bf16.msra.mxu0 %v1624
        %2301 = vmatprep.mubr.bf16.mxu0 %v1967
        %2302 = vmatmul.mubr.bf16.gmra.mxu0 %v1966
        %v2303 = vpop.f32.mrf.mxu0
        %v2304 = vadd.f32 %v2263, %v2303
        %v2305 = vpop.f32.mrf.mxu0
        %v2306 = vadd.f32 %v2265, %v2305
        %v2307 = vpop.f32.mrf.mxu0
        %v2308 = vpop.f32.mrf.mxu0
        %2309 = vdwg.mxu0
        %2310 = vmatprep.subr.bf16.mxu0 %v1745
        %2311 = vmatpush1.bf16.msra.mxu0 %v1744
        %2312 = vmatprep.subr.bf16.mxu0 %v1737
        %2313 = vmatpush1.bf16.msra.mxu0 %v1736
        %2314 = vmatprep.subr.bf16.mxu0 %v1729
        %2315 = vmatpush1.bf16.msra.mxu0 %v1728
        %2316 = vmatprep.subr.bf16.mxu0 %v1721
        %2317 = vmatpush1.bf16.msra.mxu0 %v1720
        %2318 = vmatprep.subr.bf16.mxu0 %v1713
        %2319 = vmatpush1.bf16.msra.mxu0 %v1712
        %2320 = vmatprep.subr.bf16.mxu0 %v1705
        %2321 = vmatpush1.bf16.msra.mxu0 %v1704
        %2322 = vmatprep.subr.bf16.mxu0 %v1697
        %2323 = vmatpush1.bf16.msra.mxu0 %v1696
        %2324 = vmatprep.subr.bf16.mxu0 %v1689
        %2325 = vmatpush1.bf16.msra.mxu0 %v1688
        %2326 = vmatprep.subr.bf16.mxu0 %v1809
        %2327 = vmatpush2.bf16.msra.mxu0 %v1808
        %2328 = vmatprep.subr.bf16.mxu0 %v1801
        %2329 = vmatpush2.bf16.msra.mxu0 %v1800
        %2330 = vmatprep.subr.bf16.mxu0 %v1793
        %2331 = vmatpush2.bf16.msra.mxu0 %v1792
        %2332 = vmatprep.subr.bf16.mxu0 %v1785
        %2333 = vmatpush2.bf16.msra.mxu0 %v1784
        %2334 = vmatprep.subr.bf16.mxu0 %v1777
        %2335 = vmatpush2.bf16.msra.mxu0 %v1776
        %2336 = vmatprep.subr.bf16.mxu0 %v1769
        %2337 = vmatpush2.bf16.msra.mxu0 %v1768
        %2338 = vmatprep.subr.bf16.mxu0 %v1761
        %2339 = vmatpush2.bf16.msra.mxu0 %v1760
        %2340 = vmatprep.subr.bf16.mxu0 %v1753
        %2341 = vmatpush2.bf16.msra.mxu0 %v1752
        %2342 = vmatprep.mubr.bf16.mxu0 %v1969
        %2343 = vmatmul.mubr.bf16.gmra.mxu0 %v1968
        %v2344 = vpop.f32.mrf.mxu0
        %v2345 = vadd.f32 %v2304, %v2344
        %v2346 = vpop.f32.mrf.mxu0
        %v2347 = vadd.f32 %v2306, %v2346
        %v2348 = vpop.f32.mrf.mxu0
        %v2349 = vpop.f32.mrf.mxu0
        %2350 = vdwg.mxu0
        %2351 = vmatprep.subr.bf16.mxu0 %v1873
        %2352 = vmatpush1.bf16.msra.mxu0 %v1872
        %2353 = vmatprep.subr.bf16.mxu0 %v1865
        %2354 = vmatpush1.bf16.msra.mxu0 %v1864
        %2355 = vmatprep.subr.bf16.mxu0 %v1857
        %2356 = vmatpush1.bf16.msra.mxu0 %v1856
        %2357 = vmatprep.subr.bf16.mxu0 %v1849
        %2358 = vmatpush1.bf16.msra.mxu0 %v1848
        %2359 = vmatprep.subr.bf16.mxu0 %v1841
        %2360 = vmatpush1.bf16.msra.mxu0 %v1840
        %2361 = vmatprep.subr.bf16.mxu0 %v1833
        %2362 = vmatpush1.bf16.msra.mxu0 %v1832
        %2363 = vmatprep.subr.bf16.mxu0 %v1825
        %2364 = vmatpush1.bf16.msra.mxu0 %v1824
        %2365 = vmatprep.subr.bf16.mxu0 %v1817
        %2366 = vmatpush1.bf16.msra.mxu0 %v1816
        %2367 = vmatprep.subr.bf16.mxu0 %v1937
        %2368 = vmatpush2.bf16.msra.mxu0 %v1936
        %2369 = vmatprep.subr.bf16.mxu0 %v1929
        %2370 = vmatpush2.bf16.msra.mxu0 %v1928
        %2371 = vmatprep.subr.bf16.mxu0 %v1921
        %2372 = vmatpush2.bf16.msra.mxu0 %v1920
        %2373 = vmatprep.subr.bf16.mxu0 %v1913
        %2374 = vmatpush2.bf16.msra.mxu0 %v1912
        %2375 = vmatprep.subr.bf16.mxu0 %v1905
        %2376 = vmatpush2.bf16.msra.mxu0 %v1904
        %2377 = vmatprep.subr.bf16.mxu0 %v1897
        %2378 = vmatpush2.bf16.msra.mxu0 %v1896
        %2379 = vmatprep.subr.bf16.mxu0 %v1889
        %2380 = vmatpush2.bf16.msra.mxu0 %v1888
        %2381 = vmatprep.subr.bf16.mxu0 %v1881
        %2382 = vmatpush2.bf16.msra.mxu0 %v1880
        %2383 = vmatprep.mubr.bf16.mxu0 %v1971
        %2384 = vmatmul.mubr.bf16.gmra.mxu0 %v1970
        %v2385 = vpop.f32.mrf.mxu0
        %v2386 = vadd.f32 %v2345, %v2385
        %v2387 = vpop.f32.mrf.mxu0
        %v2388 = vadd.f32 %v2347, %v2387
        %v2389 = vpop.f32.mrf.mxu0
        %v2390 = vpop.f32.mrf.mxu0
        %2391 = vdwg.mxu0
        %2392 = vmatprep.subr.bf16.mxu0 %v1363
        %2393 = vmatpush1.bf16.msra.mxu0 %v1362
        %2394 = vmatprep.subr.bf16.mxu0 %v1355
        %2395 = vmatpush1.bf16.msra.mxu0 %v1354
        %2396 = vmatprep.subr.bf16.mxu0 %v1347
        %2397 = vmatpush1.bf16.msra.mxu0 %v1346
        %2398 = vmatprep.subr.bf16.mxu0 %v1339
        %2399 = vmatpush1.bf16.msra.mxu0 %v1338
        %2400 = vmatprep.subr.bf16.mxu0 %v1331
        %2401 = vmatpush1.bf16.msra.mxu0 %v1330
        %2402 = vmatprep.subr.bf16.mxu0 %v1323
        %2403 = vmatpush1.bf16.msra.mxu0 %v1322
        %2404 = vmatprep.subr.bf16.mxu0 %v1315
        %2405 = vmatpush1.bf16.msra.mxu0 %v1314
        %2406 = vmatprep.subr.bf16.mxu0 %v1307
        %2407 = vmatpush1.bf16.msra.mxu0 %v1306
        %2408 = vmatprep.subr.bf16.mxu0 %v1427
        %2409 = vmatpush2.bf16.msra.mxu0 %v1426
        %2410 = vmatprep.subr.bf16.mxu0 %v1419
        %2411 = vmatpush2.bf16.msra.mxu0 %v1418
        %2412 = vmatprep.subr.bf16.mxu0 %v1411
        %2413 = vmatpush2.bf16.msra.mxu0 %v1410
        %2414 = vmatprep.subr.bf16.mxu0 %v1403
        %2415 = vmatpush2.bf16.msra.mxu0 %v1402
        %2416 = vmatprep.subr.bf16.mxu0 %v1395
        %2417 = vmatpush2.bf16.msra.mxu0 %v1394
        %2418 = vmatprep.subr.bf16.mxu0 %v1387
        %2419 = vmatpush2.bf16.msra.mxu0 %v1386
        %2420 = vmatprep.subr.bf16.mxu0 %v1379
        %2421 = vmatpush2.bf16.msra.mxu0 %v1378
        %2422 = vmatprep.subr.bf16.mxu0 %v1371
        %2423 = vmatpush2.bf16.msra.mxu0 %v1370
        %2424 = vmatprep.mubr.bf16.mxu0 %v1963
        %2425 = vmatmul.mubr.bf16.gmra.mxu0 %v1962
        %v2426 = vpop.f32.mrf.mxu0
        %v2427 = vadd.f32 0.0, %v2426
        %v2428 = vpop.f32.mrf.mxu0
        %v2429 = vadd.f32 0.0, %v2428
        %v2430 = vpop.f32.mrf.mxu0
        %v2431 = vpop.f32.mrf.mxu0
        %2432 = vdwg.mxu0
        %2433 = vmatprep.subr.bf16.mxu0 %v1491
        %2434 = vmatpush1.bf16.msra.mxu0 %v1490
        %2435 = vmatprep.subr.bf16.mxu0 %v1483
        %2436 = vmatpush1.bf16.msra.mxu0 %v1482
        %2437 = vmatprep.subr.bf16.mxu0 %v1475
        %2438 = vmatpush1.bf16.msra.mxu0 %v1474
        %2439 = vmatprep.subr.bf16.mxu0 %v1467
        %2440 = vmatpush1.bf16.msra.mxu0 %v1466
        %2441 = vmatprep.subr.bf16.mxu0 %v1459
        %2442 = vmatpush1.bf16.msra.mxu0 %v1458
        %2443 = vmatprep.subr.bf16.mxu0 %v1451
        %2444 = vmatpush1.bf16.msra.mxu0 %v1450
        %2445 = vmatprep.subr.bf16.mxu0 %v1443
        %2446 = vmatpush1.bf16.msra.mxu0 %v1442
        %2447 = vmatprep.subr.bf16.mxu0 %v1435
        %2448 = vmatpush1.bf16.msra.mxu0 %v1434
        %2449 = vmatprep.subr.bf16.mxu0 %v1555
        %2450 = vmatpush2.bf16.msra.mxu0 %v1554
        %2451 = vmatprep.subr.bf16.mxu0 %v1547
        %2452 = vmatpush2.bf16.msra.mxu0 %v1546
        %2453 = vmatprep.subr.bf16.mxu0 %v1539
        %2454 = vmatpush2.bf16.msra.mxu0 %v1538
        %2455 = vmatprep.subr.bf16.mxu0 %v1531
        %2456 = vmatpush2.bf16.msra.mxu0 %v1530
        %2457 = vmatprep.subr.bf16.mxu0 %v1523
        %2458 = vmatpush2.bf16.msra.mxu0 %v1522
        %2459 = vmatprep.subr.bf16.mxu0 %v1515
        %2460 = vmatpush2.bf16.msra.mxu0 %v1514
        %2461 = vmatprep.subr.bf16.mxu0 %v1507
        %2462 = vmatpush2.bf16.msra.mxu0 %v1506
        %2463 = vmatprep.subr.bf16.mxu0 %v1499
        %2464 = vmatpush2.bf16.msra.mxu0 %v1498
        %2465 = vmatprep.mubr.bf16.mxu0 %v1965
        %2466 = vmatmul.mubr.bf16.gmra.mxu0 %v1964
        %v2467 = vpop.f32.mrf.mxu0
        %v2468 = vadd.f32 %v2427, %v2467
        %v2469 = vpop.f32.mrf.mxu0
        %v2470 = vadd.f32 %v2429, %v2469
        %v2471 = vpop.f32.mrf.mxu0
        %v2472 = vpop.f32.mrf.mxu0
        %2473 = vdwg.mxu0
        %2474 = vmatprep.subr.bf16.mxu0 %v1619
        %2475 = vmatpush1.bf16.msra.mxu0 %v1618
        %2476 = vmatprep.subr.bf16.mxu0 %v1611
        %2477 = vmatpush1.bf16.msra.mxu0 %v1610
        %2478 = vmatprep.subr.bf16.mxu0 %v1603
        %2479 = vmatpush1.bf16.msra.mxu0 %v1602
        %2480 = vmatprep.subr.bf16.mxu0 %v1595
        %2481 = vmatpush1.bf16.msra.mxu0 %v1594
        %2482 = vmatprep.subr.bf16.mxu0 %v1587
        %2483 = vmatpush1.bf16.msra.mxu0 %v1586
        %2484 = vmatprep.subr.bf16.mxu0 %v1579
        %2485 = vmatpush1.bf16.msra.mxu0 %v1578
        %2486 = vmatprep.subr.bf16.mxu0 %v1571
        %2487 = vmatpush1.bf16.msra.mxu0 %v1570
        %2488 = vmatprep.subr.bf16.mxu0 %v1563
        %2489 = vmatpush1.bf16.msra.mxu0 %v1562
        %2490 = vmatprep.subr.bf16.mxu0 %v1683
        %2491 = vmatpush2.bf16.msra.mxu0 %v1682
        %2492 = vmatprep.subr.bf16.mxu0 %v1675
        %2493 = vmatpush2.bf16.msra.mxu0 %v1674
        %2494 = vmatprep.subr.bf16.mxu0 %v1667
        %2495 = vmatpush2.bf16.msra.mxu0 %v1666
        %2496 = vmatprep.subr.bf16.mxu0 %v1659
        %2497 = vmatpush2.bf16.msra.mxu0 %v1658
        %2498 = vmatprep.subr.bf16.mxu0 %v1651
        %2499 = vmatpush2.bf16.msra.mxu0 %v1650
        %2500 = vmatprep.subr.bf16.mxu0 %v1643
        %2501 = vmatpush2.bf16.msra.mxu0 %v1642
        %2502 = vmatprep.subr.bf16.mxu0 %v1635
        %2503 = vmatpush2.bf16.msra.mxu0 %v1634
        %2504 = vmatprep.subr.bf16.mxu0 %v1627
        %2505 = vmatpush2.bf16.msra.mxu0 %v1626
        %2506 = vmatprep.mubr.bf16.mxu0 %v1967
        %2507 = vmatmul.mubr.bf16.gmra.mxu0 %v1966
        %v2508 = vpop.f32.mrf.mxu0
        %v2509 = vadd.f32 %v2468, %v2508
        %v2510 = vpop.f32.mrf.mxu0
        %v2511 = vadd.f32 %v2470, %v2510
        %v2512 = vpop.f32.mrf.mxu0
        %v2513 = vpop.f32.mrf.mxu0
        %2514 = vdwg.mxu0
        %2515 = vmatprep.subr.bf16.mxu0 %v1747
        %2516 = vmatpush1.bf16.msra.mxu0 %v1746
        %2517 = vmatprep.subr.bf16.mxu0 %v1739
        %2518 = vmatpush1.bf16.msra.mxu0 %v1738
        %2519 = vmatprep.subr.bf16.mxu0 %v1731
        %2520 = vmatpush1.bf16.msra.mxu0 %v1730
        %2521 = vmatprep.subr.bf16.mxu0 %v1723
        %2522 = vmatpush1.bf16.msra.mxu0 %v1722
        %2523 = vmatprep.subr.bf16.mxu0 %v1715
        %2524 = vmatpush1.bf16.msra.mxu0 %v1714
        %2525 = vmatprep.subr.bf16.mxu0 %v1707
        %2526 = vmatpush1.bf16.msra.mxu0 %v1706
        %2527 = vmatprep.subr.bf16.mxu0 %v1699
        %2528 = vmatpush1.bf16.msra.mxu0 %v1698
        %2529 = vmatprep.subr.bf16.mxu0 %v1691
        %2530 = vmatpush1.bf16.msra.mxu0 %v1690
        %2531 = vmatprep.subr.bf16.mxu0 %v1811
        %2532 = vmatpush2.bf16.msra.mxu0 %v1810
        %2533 = vmatprep.subr.bf16.mxu0 %v1803
        %2534 = vmatpush2.bf16.msra.mxu0 %v1802
        %2535 = vmatprep.subr.bf16.mxu0 %v1795
        %2536 = vmatpush2.bf16.msra.mxu0 %v1794
        %2537 = vmatprep.subr.bf16.mxu0 %v1787
        %2538 = vmatpush2.bf16.msra.mxu0 %v1786
        %2539 = vmatprep.subr.bf16.mxu0 %v1779
        %2540 = vmatpush2.bf16.msra.mxu0 %v1778
        %2541 = vmatprep.subr.bf16.mxu0 %v1771
        %2542 = vmatpush2.bf16.msra.mxu0 %v1770
        %2543 = vmatprep.subr.bf16.mxu0 %v1763
        %2544 = vmatpush2.bf16.msra.mxu0 %v1762
        %2545 = vmatprep.subr.bf16.mxu0 %v1755
        %2546 = vmatpush2.bf16.msra.mxu0 %v1754
        %2547 = vmatprep.mubr.bf16.mxu0 %v1969
        %2548 = vmatmul.mubr.bf16.gmra.mxu0 %v1968
        %v2549 = vpop.f32.mrf.mxu0
        %v2550 = vadd.f32 %v2509, %v2549
        %v2551 = vpop.f32.mrf.mxu0
        %v2552 = vadd.f32 %v2511, %v2551
        %v2553 = vpop.f32.mrf.mxu0
        %v2554 = vpop.f32.mrf.mxu0
        %2555 = vdwg.mxu0
        %2556 = vmatprep.subr.bf16.mxu0 %v1875
        %2557 = vmatpush1.bf16.msra.mxu0 %v1874
        %2558 = vmatprep.subr.bf16.mxu0 %v1867
        %2559 = vmatpush1.bf16.msra.mxu0 %v1866
        %2560 = vmatprep.subr.bf16.mxu0 %v1859
        %2561 = vmatpush1.bf16.msra.mxu0 %v1858
        %2562 = vmatprep.subr.bf16.mxu0 %v1851
        %2563 = vmatpush1.bf16.msra.mxu0 %v1850
        %2564 = vmatprep.subr.bf16.mxu0 %v1843
        %2565 = vmatpush1.bf16.msra.mxu0 %v1842
        %2566 = vmatprep.subr.bf16.mxu0 %v1835
        %2567 = vmatpush1.bf16.msra.mxu0 %v1834
        %2568 = vmatprep.subr.bf16.mxu0 %v1827
        %2569 = vmatpush1.bf16.msra.mxu0 %v1826
        %2570 = vmatprep.subr.bf16.mxu0 %v1819
        %2571 = vmatpush1.bf16.msra.mxu0 %v1818
        %2572 = vmatprep.subr.bf16.mxu0 %v1939
        %2573 = vmatpush2.bf16.msra.mxu0 %v1938
        %2574 = vmatprep.subr.bf16.mxu0 %v1931
        %2575 = vmatpush2.bf16.msra.mxu0 %v1930
        %2576 = vmatprep.subr.bf16.mxu0 %v1923
        %2577 = vmatpush2.bf16.msra.mxu0 %v1922
        %2578 = vmatprep.subr.bf16.mxu0 %v1915
        %2579 = vmatpush2.bf16.msra.mxu0 %v1914
        %2580 = vmatprep.subr.bf16.mxu0 %v1907
        %2581 = vmatpush2.bf16.msra.mxu0 %v1906
        %2582 = vmatprep.subr.bf16.mxu0 %v1899
        %2583 = vmatpush2.bf16.msra.mxu0 %v1898
        %2584 = vmatprep.subr.bf16.mxu0 %v1891
        %2585 = vmatpush2.bf16.msra.mxu0 %v1890
        %2586 = vmatprep.subr.bf16.mxu0 %v1883
        %2587 = vmatpush2.bf16.msra.mxu0 %v1882
        %2588 = vmatprep.mubr.bf16.mxu0 %v1971
        %2589 = vmatmul.mubr.bf16.gmra.mxu0 %v1970
        %v2590 = vpop.f32.mrf.mxu0
        %v2591 = vadd.f32 %v2550, %v2590
        %v2592 = vpop.f32.mrf.mxu0
        %v2593 = vadd.f32 %v2552, %v2592
        %v2594 = vpop.f32.mrf.mxu0
        %v2595 = vpop.f32.mrf.mxu0
        %2596 = vdwg.mxu0
        %2597 = vmatprep.subr.bf16.mxu0 %v1365
        %2598 = vmatpush1.bf16.msra.mxu0 %v1364
        %2599 = vmatprep.subr.bf16.mxu0 %v1357
        %2600 = vmatpush1.bf16.msra.mxu0 %v1356
        %2601 = vmatprep.subr.bf16.mxu0 %v1349
        %2602 = vmatpush1.bf16.msra.mxu0 %v1348
        %2603 = vmatprep.subr.bf16.mxu0 %v1341
        %2604 = vmatpush1.bf16.msra.mxu0 %v1340
        %2605 = vmatprep.subr.bf16.mxu0 %v1333
        %2606 = vmatpush1.bf16.msra.mxu0 %v1332
        %2607 = vmatprep.subr.bf16.mxu0 %v1325
        %2608 = vmatpush1.bf16.msra.mxu0 %v1324
        %2609 = vmatprep.subr.bf16.mxu0 %v1317
        %2610 = vmatpush1.bf16.msra.mxu0 %v1316
        %2611 = vmatprep.subr.bf16.mxu0 %v1309
        %2612 = vmatpush1.bf16.msra.mxu0 %v1308
        %2613 = vmatprep.subr.bf16.mxu0 %v1429
        %2614 = vmatpush2.bf16.msra.mxu0 %v1428
        %2615 = vmatprep.subr.bf16.mxu0 %v1421
        %2616 = vmatpush2.bf16.msra.mxu0 %v1420
        %2617 = vmatprep.subr.bf16.mxu0 %v1413
        %2618 = vmatpush2.bf16.msra.mxu0 %v1412
        %2619 = vmatprep.subr.bf16.mxu0 %v1405
        %2620 = vmatpush2.bf16.msra.mxu0 %v1404
        %2621 = vmatprep.subr.bf16.mxu0 %v1397
        %2622 = vmatpush2.bf16.msra.mxu0 %v1396
        %2623 = vmatprep.subr.bf16.mxu0 %v1389
        %2624 = vmatpush2.bf16.msra.mxu0 %v1388
        %2625 = vmatprep.subr.bf16.mxu0 %v1381
        %2626 = vmatpush2.bf16.msra.mxu0 %v1380
        %2627 = vmatprep.subr.bf16.mxu0 %v1373
        %2628 = vmatpush2.bf16.msra.mxu0 %v1372
        %2629 = vmatprep.mubr.bf16.mxu0 %v1963
        %2630 = vmatmul.mubr.bf16.gmra.mxu0 %v1962
        %v2631 = vpop.f32.mrf.mxu0
        %v2632 = vadd.f32 0.0, %v2631
        %v2633 = vpop.f32.mrf.mxu0
        %v2634 = vadd.f32 0.0, %v2633
        %v2635 = vpop.f32.mrf.mxu0
        %v2636 = vpop.f32.mrf.mxu0
        %2637 = vdwg.mxu0
        %2638 = vmatprep.subr.bf16.mxu0 %v1493
        %2639 = vmatpush1.bf16.msra.mxu0 %v1492
        %2640 = vmatprep.subr.bf16.mxu0 %v1485
        %2641 = vmatpush1.bf16.msra.mxu0 %v1484
        %2642 = vmatprep.subr.bf16.mxu0 %v1477
        %2643 = vmatpush1.bf16.msra.mxu0 %v1476
        %2644 = vmatprep.subr.bf16.mxu0 %v1469
        %2645 = vmatpush1.bf16.msra.mxu0 %v1468
        %2646 = vmatprep.subr.bf16.mxu0 %v1461
        %2647 = vmatpush1.bf16.msra.mxu0 %v1460
        %2648 = vmatprep.subr.bf16.mxu0 %v1453
        %2649 = vmatpush1.bf16.msra.mxu0 %v1452
        %2650 = vmatprep.subr.bf16.mxu0 %v1445
        %2651 = vmatpush1.bf16.msra.mxu0 %v1444
        %2652 = vmatprep.subr.bf16.mxu0 %v1437
        %2653 = vmatpush1.bf16.msra.mxu0 %v1436
        %2654 = vmatprep.subr.bf16.mxu0 %v1557
        %2655 = vmatpush2.bf16.msra.mxu0 %v1556
        %2656 = vmatprep.subr.bf16.mxu0 %v1549
        %2657 = vmatpush2.bf16.msra.mxu0 %v1548
        %2658 = vmatprep.subr.bf16.mxu0 %v1541
        %2659 = vmatpush2.bf16.msra.mxu0 %v1540
        %2660 = vmatprep.subr.bf16.mxu0 %v1533
        %2661 = vmatpush2.bf16.msra.mxu0 %v1532
        %2662 = vmatprep.subr.bf16.mxu0 %v1525
        %2663 = vmatpush2.bf16.msra.mxu0 %v1524
        %2664 = vmatprep.subr.bf16.mxu0 %v1517
        %2665 = vmatpush2.bf16.msra.mxu0 %v1516
        %2666 = vmatprep.subr.bf16.mxu0 %v1509
        %2667 = vmatpush2.bf16.msra.mxu0 %v1508
        %2668 = vmatprep.subr.bf16.mxu0 %v1501
        %2669 = vmatpush2.bf16.msra.mxu0 %v1500
        %2670 = vmatprep.mubr.bf16.mxu0 %v1965
        %2671 = vmatmul.mubr.bf16.gmra.mxu0 %v1964
        %v2672 = vpop.f32.mrf.mxu0
        %v2673 = vadd.f32 %v2632, %v2672
        %v2674 = vpop.f32.mrf.mxu0
        %v2675 = vadd.f32 %v2634, %v2674
        %v2676 = vpop.f32.mrf.mxu0
        %v2677 = vpop.f32.mrf.mxu0
        %2678 = vdwg.mxu0
        %2679 = vmatprep.subr.bf16.mxu0 %v1621
        %2680 = vmatpush1.bf16.msra.mxu0 %v1620
        %2681 = vmatprep.subr.bf16.mxu0 %v1613
        %2682 = vmatpush1.bf16.msra.mxu0 %v1612
        %2683 = vmatprep.subr.bf16.mxu0 %v1605
        %2684 = vmatpush1.bf16.msra.mxu0 %v1604
        %2685 = vmatprep.subr.bf16.mxu0 %v1597
        %2686 = vmatpush1.bf16.msra.mxu0 %v1596
        %2687 = vmatprep.subr.bf16.mxu0 %v1589
        %2688 = vmatpush1.bf16.msra.mxu0 %v1588
        %2689 = vmatprep.subr.bf16.mxu0 %v1581
        %2690 = vmatpush1.bf16.msra.mxu0 %v1580
        %2691 = vmatprep.subr.bf16.mxu0 %v1573
        %2692 = vmatpush1.bf16.msra.mxu0 %v1572
        %2693 = vmatprep.subr.bf16.mxu0 %v1565
        %2694 = vmatpush1.bf16.msra.mxu0 %v1564
        %2695 = vmatprep.subr.bf16.mxu0 %v1685
        %2696 = vmatpush2.bf16.msra.mxu0 %v1684
        %2697 = vmatprep.subr.bf16.mxu0 %v1677
        %2698 = vmatpush2.bf16.msra.mxu0 %v1676
        %2699 = vmatprep.subr.bf16.mxu0 %v1669
        %2700 = vmatpush2.bf16.msra.mxu0 %v1668
        %2701 = vmatprep.subr.bf16.mxu0 %v1661
        %2702 = vmatpush2.bf16.msra.mxu0 %v1660
        %2703 = vmatprep.subr.bf16.mxu0 %v1653
        %2704 = vmatpush2.bf16.msra.mxu0 %v1652
        %2705 = vmatprep.subr.bf16.mxu0 %v1645
        %2706 = vmatpush2.bf16.msra.mxu0 %v1644
        %2707 = vmatprep.subr.bf16.mxu0 %v1637
        %2708 = vmatpush2.bf16.msra.mxu0 %v1636
        %2709 = vmatprep.subr.bf16.mxu0 %v1629
        %2710 = vmatpush2.bf16.msra.mxu0 %v1628
        %2711 = vmatprep.mubr.bf16.mxu0 %v1967
        %2712 = vmatmul.mubr.bf16.gmra.mxu0 %v1966
        %v2713 = vpop.f32.mrf.mxu0
        %v2714 = vadd.f32 %v2673, %v2713
        %v2715 = vpop.f32.mrf.mxu0
        %v2716 = vadd.f32 %v2675, %v2715
        %v2717 = vpop.f32.mrf.mxu0
        %v2718 = vpop.f32.mrf.mxu0
        %2719 = vdwg.mxu0
        %2720 = vmatprep.subr.bf16.mxu0 %v1749
        %2721 = vmatpush1.bf16.msra.mxu0 %v1748
        %2722 = vmatprep.subr.bf16.mxu0 %v1741
        %2723 = vmatpush1.bf16.msra.mxu0 %v1740
        %2724 = vmatprep.subr.bf16.mxu0 %v1733
        %2725 = vmatpush1.bf16.msra.mxu0 %v1732
        %2726 = vmatprep.subr.bf16.mxu0 %v1725
        %2727 = vmatpush1.bf16.msra.mxu0 %v1724
        %2728 = vmatprep.subr.bf16.mxu0 %v1717
        %2729 = vmatpush1.bf16.msra.mxu0 %v1716
        %2730 = vmatprep.subr.bf16.mxu0 %v1709
        %2731 = vmatpush1.bf16.msra.mxu0 %v1708
        %2732 = vmatprep.subr.bf16.mxu0 %v1701
        %2733 = vmatpush1.bf16.msra.mxu0 %v1700
        %2734 = vmatprep.subr.bf16.mxu0 %v1693
        %2735 = vmatpush1.bf16.msra.mxu0 %v1692
        %2736 = vmatprep.subr.bf16.mxu0 %v1813
        %2737 = vmatpush2.bf16.msra.mxu0 %v1812
        %2738 = vmatprep.subr.bf16.mxu0 %v1805
        %2739 = vmatpush2.bf16.msra.mxu0 %v1804
        %2740 = vmatprep.subr.bf16.mxu0 %v1797
        %2741 = vmatpush2.bf16.msra.mxu0 %v1796
        %2742 = vmatprep.subr.bf16.mxu0 %v1789
        %2743 = vmatpush2.bf16.msra.mxu0 %v1788
        %2744 = vmatprep.subr.bf16.mxu0 %v1781
        %2745 = vmatpush2.bf16.msra.mxu0 %v1780
        %2746 = vmatprep.subr.bf16.mxu0 %v1773
        %2747 = vmatpush2.bf16.msra.mxu0 %v1772
        %2748 = vmatprep.subr.bf16.mxu0 %v1765
        %2749 = vmatpush2.bf16.msra.mxu0 %v1764
        %2750 = vmatprep.subr.bf16.mxu0 %v1757
        %2751 = vmatpush2.bf16.msra.mxu0 %v1756
        %2752 = vmatprep.mubr.bf16.mxu0 %v1969
        %2753 = vmatmul.mubr.bf16.gmra.mxu0 %v1968
        %v2754 = vpop.f32.mrf.mxu0
        %v2755 = vadd.f32 %v2714, %v2754
        %v2756 = vpop.f32.mrf.mxu0
        %v2757 = vadd.f32 %v2716, %v2756
        %v2758 = vpop.f32.mrf.mxu0
        %v2759 = vpop.f32.mrf.mxu0
        %2760 = vdwg.mxu0
        %2761 = vmatprep.subr.bf16.mxu0 %v1877
        %2762 = vmatpush1.bf16.msra.mxu0 %v1876
        %2763 = vmatprep.subr.bf16.mxu0 %v1869
        %2764 = vmatpush1.bf16.msra.mxu0 %v1868
        %2765 = vmatprep.subr.bf16.mxu0 %v1861
        %2766 = vmatpush1.bf16.msra.mxu0 %v1860
        %2767 = vmatprep.subr.bf16.mxu0 %v1853
        %2768 = vmatpush1.bf16.msra.mxu0 %v1852
        %2769 = vmatprep.subr.bf16.mxu0 %v1845
        %2770 = vmatpush1.bf16.msra.mxu0 %v1844
        %2771 = vmatprep.subr.bf16.mxu0 %v1837
        %2772 = vmatpush1.bf16.msra.mxu0 %v1836
        %2773 = vmatprep.subr.bf16.mxu0 %v1829
        %2774 = vmatpush1.bf16.msra.mxu0 %v1828
        %2775 = vmatprep.subr.bf16.mxu0 %v1821
        %2776 = vmatpush1.bf16.msra.mxu0 %v1820
        %2777 = vmatprep.subr.bf16.mxu0 %v1941
        %2778 = vmatpush2.bf16.msra.mxu0 %v1940
        %2779 = vmatprep.subr.bf16.mxu0 %v1933
        %2780 = vmatpush2.bf16.msra.mxu0 %v1932
        %2781 = vmatprep.subr.bf16.mxu0 %v1925
        %2782 = vmatpush2.bf16.msra.mxu0 %v1924
        %2783 = vmatprep.subr.bf16.mxu0 %v1917
        %2784 = vmatpush2.bf16.msra.mxu0 %v1916
        %2785 = vmatprep.subr.bf16.mxu0 %v1909
        %2786 = vmatpush2.bf16.msra.mxu0 %v1908
        %2787 = vmatprep.subr.bf16.mxu0 %v1901
        %2788 = vmatpush2.bf16.msra.mxu0 %v1900
        %2789 = vmatprep.subr.bf16.mxu0 %v1893
        %2790 = vmatpush2.bf16.msra.mxu0 %v1892
        %2791 = vmatprep.subr.bf16.mxu0 %v1885
        %2792 = vmatpush2.bf16.msra.mxu0 %v1884
        %2793 = vmatprep.mubr.bf16.mxu0 %v1971
        %2794 = vmatmul.mubr.bf16.gmra.mxu0 %v1970
        %v2795 = vpop.f32.mrf.mxu0
        %v2796 = vadd.f32 %v2755, %v2795
        %v2797 = vpop.f32.mrf.mxu0
        %v2798 = vadd.f32 %v2757, %v2797
        %v2799 = vpop.f32.mrf.mxu0
        %v2800 = vpop.f32.mrf.mxu0
        %2801 = vdwg.mxu0
        %v2802 = vld [vmem:[%s452] sm:$0xff]
        %v2804 = vlaneseq
        %v2805 = vshrl.u32 %v2804, 7
        %v2806 = vsub.s32 0, %v2805
        %v2807 = vrot.slane %v2802, %v2806
        %v2808 = vlaneseq
        %v2809 = vshrl.u32 %v2808, 7
        %v2810 = vsub.s32 1, %v2809
        %v2811 = vrot.slane %v2802, %v2810
        %v2812 = vlaneseq
        %v2813 = vshrl.u32 %v2812, 7
        %v2814 = vsub.s32 2, %v2813
        %v2815 = vrot.slane %v2802, %v2814
        %v2816 = vlaneseq
        %v2817 = vshrl.u32 %v2816, 7
        %v2818 = vsub.s32 3, %v2817
        %v2819 = vrot.slane %v2802, %v2818
        %v2820 = vlaneseq
        %v2821 = vshrl.u32 %v2820, 7
        %v2822 = vsub.s32 4, %v2821
        %v2823 = vrot.slane %v2802, %v2822
        %v2824 = vlaneseq
        %v2825 = vshrl.u32 %v2824, 7
        %v2826 = vsub.s32 5, %v2825
        %v2827 = vrot.slane %v2802, %v2826
        %v2828 = vlaneseq
        %v2829 = vshrl.u32 %v2828, 7
        %v2830 = vsub.s32 6, %v2829
        %v2831 = vrot.slane %v2802, %v2830
        %v2832 = vlaneseq
        %v2833 = vshrl.u32 %v2832, 7
        %v2834 = vsub.s32 7, %v2833
        %v2835 = vrot.slane %v2802, %v2834
        %v2844 = vmul.f32 %v2181, %v2807
        %v2845 = vmul.f32 %v2183, %v2811
        %v2846 = vmul.f32 %v2386, %v2815
        %v2847 = vmul.f32 %v2388, %v2819
        %v2848 = vmul.f32 %v2591, %v2823
        %v2849 = vmul.f32 %v2593, %v2827
        %v2850 = vmul.f32 %v2796, %v2831
        %v2851 = vmul.f32 %v2798, %v2835
        %v2852 = vld [vmem:[%s461] sm:$0xff]
        %v2854 = vlaneseq
        %v2855 = vshrl.u32 %v2854, 7
        %v2856 = vsub.s32 0, %v2855
        %v2857 = vrot.slane %v2852, %v2856
        %v2858 = vlaneseq
        %v2859 = vshrl.u32 %v2858, 7
        %v2860 = vsub.s32 1, %v2859
        %v2861 = vrot.slane %v2852, %v2860
        %v2862 = vlaneseq
        %v2863 = vshrl.u32 %v2862, 7
        %v2864 = vsub.s32 2, %v2863
        %v2865 = vrot.slane %v2852, %v2864
        %v2866 = vlaneseq
        %v2867 = vshrl.u32 %v2866, 7
        %v2868 = vsub.s32 3, %v2867
        %v2869 = vrot.slane %v2852, %v2868
        %v2870 = vlaneseq
        %v2871 = vshrl.u32 %v2870, 7
        %v2872 = vsub.s32 4, %v2871
        %v2873 = vrot.slane %v2852, %v2872
        %v2874 = vlaneseq
        %v2875 = vshrl.u32 %v2874, 7
        %v2876 = vsub.s32 5, %v2875
        %v2877 = vrot.slane %v2852, %v2876
        %v2878 = vlaneseq
        %v2879 = vshrl.u32 %v2878, 7
        %v2880 = vsub.s32 6, %v2879
        %v2881 = vrot.slane %v2852, %v2880
        %v2882 = vlaneseq
        %v2883 = vshrl.u32 %v2882, 7
        %v2884 = vsub.s32 7, %v2883
        %v2885 = vrot.slane %v2852, %v2884
        %v2894 = vadd.f32 %v2844, %v2857
        %v2895 = vadd.f32 %v2845, %v2861
        %v2896 = vadd.f32 %v2846, %v2865
        %v2897 = vadd.f32 %v2847, %v2869
        %v2898 = vadd.f32 %v2848, %v2873
        %v2899 = vadd.f32 %v2849, %v2877
        %v2900 = vadd.f32 %v2850, %v2881
        %v2901 = vadd.f32 %v2851, %v2885
        %v2902 = vmax.f32 %v2894, 0.0
        %v2903 = vmax.f32 %v2895, 0.0
        %v2904 = vmax.f32 %v2896, 0.0
        %v2905 = vmax.f32 %v2897, 0.0
        %v2906 = vmax.f32 %v2898, 0.0
        %v2907 = vmax.f32 %v2899, 0.0
        %v2908 = vmax.f32 %v2900, 0.0
        %v2909 = vmax.f32 %v2901, 0.0
        %v2910 = vld [vmem:[%s470] sm:$0xff]
        %v2911 = vld [vmem:[%s470 + $0x8] sm:$0xff]
        %v2912 = vld [vmem:[%s470 + $0x10] sm:$0xff]
        %v2913 = vld [vmem:[%s470 + $0x18] sm:$0xff]
        %v2914 = vld [vmem:[%s470 + $0x20] sm:$0xff]
        %v2915 = vld [vmem:[%s470 + $0x28] sm:$0xff]
        %v2916 = vld [vmem:[%s470 + $0x30] sm:$0xff]
        %v2917 = vld [vmem:[%s470 + $0x38] sm:$0xff]
        %v2918 = vld [vmem:[%s470 + $0x40] sm:$0xff]
        %v2919 = vld [vmem:[%s470 + $0x48] sm:$0xff]
        %v2920 = vld [vmem:[%s470 + $0x50] sm:$0xff]
        %v2921 = vld [vmem:[%s470 + $0x58] sm:$0xff]
        %v2922 = vld [vmem:[%s470 + $0x60] sm:$0xff]
        %v2923 = vld [vmem:[%s470 + $0x68] sm:$0xff]
        %v2924 = vld [vmem:[%s470 + $0x70] sm:$0xff]
        %v2925 = vld [vmem:[%s470 + $0x78] sm:$0xff]
        %v2926 = vld [vmem:[%s470 + $0x80] sm:$0xff]
        %v2927 = vld [vmem:[%s470 + $0x88] sm:$0xff]
        %v2928 = vld [vmem:[%s470 + $0x90] sm:$0xff]
        %v2929 = vld [vmem:[%s470 + $0x98] sm:$0xff]
        %v2930 = vld [vmem:[%s470 + $0xa0] sm:$0xff]
        %v2931 = vld [vmem:[%s470 + $0xa8] sm:$0xff]
        %v2932 = vld [vmem:[%s470 + $0xb0] sm:$0xff]
        %v2933 = vld [vmem:[%s470 + $0xb8] sm:$0xff]
        %v2934 = vld [vmem:[%s470 + $0xc0] sm:$0xff]
        %v2935 = vld [vmem:[%s470 + $0xc8] sm:$0xff]
        %v2936 = vld [vmem:[%s470 + $0xd0] sm:$0xff]
        %v2937 = vld [vmem:[%s470 + $0xd8] sm:$0xff]
        %v2938 = vld [vmem:[%s470 + $0xe0] sm:$0xff]
        %v2939 = vld [vmem:[%s470 + $0xe8] sm:$0xff]
        %v2940 = vld [vmem:[%s470 + $0xf0] sm:$0xff]
        %v2941 = vld [vmem:[%s470 + $0xf8] sm:$0xff]
        %v2942 = vld [vmem:[%s470 + $0x100] sm:$0xff]
        %v2943 = vld [vmem:[%s470 + $0x108] sm:$0xff]
        %v2944 = vld [vmem:[%s470 + $0x110] sm:$0xff]
        %v2945 = vld [vmem:[%s470 + $0x118] sm:$0xff]
        %v2946 = vld [vmem:[%s470 + $0x120] sm:$0xff]
        %v2947 = vld [vmem:[%s470 + $0x128] sm:$0xff]
        %v2948 = vld [vmem:[%s470 + $0x130] sm:$0xff]
        %v2949 = vld [vmem:[%s470 + $0x138] sm:$0xff]
        %v2950 = vld [vmem:[%s470 + $0x140] sm:$0xff]
        %v2951 = vld [vmem:[%s470 + $0x148] sm:$0xff]
        %v2952 = vld [vmem:[%s470 + $0x150] sm:$0xff]
        %v2953 = vld [vmem:[%s470 + $0x158] sm:$0xff]
        %v2954 = vld [vmem:[%s470 + $0x160] sm:$0xff]
        %v2955 = vld [vmem:[%s470 + $0x168] sm:$0xff]
        %v2956 = vld [vmem:[%s470 + $0x170] sm:$0xff]
        %v2957 = vld [vmem:[%s470 + $0x178] sm:$0xff]
        %v2958 = vld [vmem:[%s470 + $0x180] sm:$0xff]
        %v2959 = vld [vmem:[%s470 + $0x188] sm:$0xff]
        %v2960 = vld [vmem:[%s470 + $0x190] sm:$0xff]
        %v2961 = vld [vmem:[%s470 + $0x198] sm:$0xff]
        %v2962 = vld [vmem:[%s470 + $0x1a0] sm:$0xff]
        %v2963 = vld [vmem:[%s470 + $0x1a8] sm:$0xff]
        %v2964 = vld [vmem:[%s470 + $0x1b0] sm:$0xff]
        %v2965 = vld [vmem:[%s470 + $0x1b8] sm:$0xff]
        %v2966 = vld [vmem:[%s470 + $0x1c0] sm:$0xff]
        %v2967 = vld [vmem:[%s470 + $0x1c8] sm:$0xff]
        %v2968 = vld [vmem:[%s470 + $0x1d0] sm:$0xff]
        %v2969 = vld [vmem:[%s470 + $0x1d8] sm:$0xff]
        %v2970 = vld [vmem:[%s470 + $0x1e0] sm:$0xff]
        %v2971 = vld [vmem:[%s470 + $0x1e8] sm:$0xff]
        %v2972 = vld [vmem:[%s470 + $0x1f0] sm:$0xff]
        %v2973 = vld [vmem:[%s470 + $0x1f8] sm:$0xff]
        %v2974 = vld [vmem:[%s470 + $0x200] sm:$0xff]
        %v2975 = vld [vmem:[%s470 + $0x208] sm:$0xff]
        %v2976 = vld [vmem:[%s470 + $0x210] sm:$0xff]
        %v2977 = vld [vmem:[%s470 + $0x218] sm:$0xff]
        %v2978 = vld [vmem:[%s470 + $0x220] sm:$0xff]
        %v2979 = vld [vmem:[%s470 + $0x228] sm:$0xff]
        %v2980 = vld [vmem:[%s470 + $0x230] sm:$0xff]
        %v2981 = vld [vmem:[%s470 + $0x238] sm:$0xff]
        %v2982 = vld [vmem:[%s470 + $0x240] sm:$0xff]
        %v2983 = vld [vmem:[%s470 + $0x248] sm:$0xff]
        %v2984 = vld [vmem:[%s470 + $0x250] sm:$0xff]
        %v2985 = vld [vmem:[%s470 + $0x258] sm:$0xff]
        %v2986 = vld [vmem:[%s470 + $0x260] sm:$0xff]
        %v2987 = vld [vmem:[%s470 + $0x268] sm:$0xff]
        %v2988 = vld [vmem:[%s470 + $0x270] sm:$0xff]
        %v2989 = vld [vmem:[%s470 + $0x278] sm:$0xff]
        %v2990 = vld [vmem:[%s470 + $0x280] sm:$0xff]
        %v2991 = vld [vmem:[%s470 + $0x288] sm:$0xff]
        %v2992 = vld [vmem:[%s470 + $0x290] sm:$0xff]
        %v2993 = vld [vmem:[%s470 + $0x298] sm:$0xff]
        %v2994 = vld [vmem:[%s470 + $0x2a0] sm:$0xff]
        %v2995 = vld [vmem:[%s470 + $0x2a8] sm:$0xff]
        %v2996 = vld [vmem:[%s470 + $0x2b0] sm:$0xff]
        %v2997 = vld [vmem:[%s470 + $0x2b8] sm:$0xff]
        %v2998 = vld [vmem:[%s470 + $0x2c0] sm:$0xff]
        %v2999 = vld [vmem:[%s470 + $0x2c8] sm:$0xff]
        %v3000 = vld [vmem:[%s470 + $0x2d0] sm:$0xff]
        %v3001 = vld [vmem:[%s470 + $0x2d8] sm:$0xff]
        %v3002 = vld [vmem:[%s470 + $0x2e0] sm:$0xff]
        %v3003 = vld [vmem:[%s470 + $0x2e8] sm:$0xff]
        %v3004 = vld [vmem:[%s470 + $0x2f0] sm:$0xff]
        %v3005 = vld [vmem:[%s470 + $0x2f8] sm:$0xff]
        %v3006 = vld [vmem:[%s470 + $0x300] sm:$0xff]
        %v3007 = vld [vmem:[%s470 + $0x308] sm:$0xff]
        %v3008 = vld [vmem:[%s470 + $0x310] sm:$0xff]
        %v3009 = vld [vmem:[%s470 + $0x318] sm:$0xff]
        %v3010 = vld [vmem:[%s470 + $0x320] sm:$0xff]
        %v3011 = vld [vmem:[%s470 + $0x328] sm:$0xff]
        %v3012 = vld [vmem:[%s470 + $0x330] sm:$0xff]
        %v3013 = vld [vmem:[%s470 + $0x338] sm:$0xff]
        %v3014 = vld [vmem:[%s470 + $0x340] sm:$0xff]
        %v3015 = vld [vmem:[%s470 + $0x348] sm:$0xff]
        %v3016 = vld [vmem:[%s470 + $0x350] sm:$0xff]
        %v3017 = vld [vmem:[%s470 + $0x358] sm:$0xff]
        %v3018 = vld [vmem:[%s470 + $0x360] sm:$0xff]
        %v3019 = vld [vmem:[%s470 + $0x368] sm:$0xff]
        %v3020 = vld [vmem:[%s470 + $0x370] sm:$0xff]
        %v3021 = vld [vmem:[%s470 + $0x378] sm:$0xff]
        %v3022 = vld [vmem:[%s470 + $0x380] sm:$0xff]
        %v3023 = vld [vmem:[%s470 + $0x388] sm:$0xff]
        %v3024 = vld [vmem:[%s470 + $0x390] sm:$0xff]
        %v3025 = vld [vmem:[%s470 + $0x398] sm:$0xff]
        %v3026 = vld [vmem:[%s470 + $0x3a0] sm:$0xff]
        %v3027 = vld [vmem:[%s470 + $0x3a8] sm:$0xff]
        %v3028 = vld [vmem:[%s470 + $0x3b0] sm:$0xff]
        %v3029 = vld [vmem:[%s470 + $0x3b8] sm:$0xff]
        %v3030 = vld [vmem:[%s470 + $0x3c0] sm:$0xff]
        %v3031 = vld [vmem:[%s470 + $0x3c8] sm:$0xff]
        %v3032 = vld [vmem:[%s470 + $0x3d0] sm:$0xff]
        %v3033 = vld [vmem:[%s470 + $0x3d8] sm:$0xff]
        %v3034 = vld [vmem:[%s470 + $0x3e0] sm:$0xff]
        %v3035 = vld [vmem:[%s470 + $0x3e8] sm:$0xff]
        %v3036 = vld [vmem:[%s470 + $0x3f0] sm:$0xff]
        %v3037 = vld [vmem:[%s470 + $0x3f8] sm:$0xff]
        %v3038 = vunpack.c.l.s8.bf16 %v2910
        %v3039 = vunpack.c.l.s8.bf16 %v2911
        %v3040 = vunpack.c.l.s8.bf16 %v2912
        %v3041 = vunpack.c.l.s8.bf16 %v2913
        %v3042 = vunpack.c.h.s8.bf16 %v2910
        %v3043 = vunpack.c.h.s8.bf16 %v2911
        %v3044 = vunpack.c.h.s8.bf16 %v2912
        %v3045 = vunpack.c.h.s8.bf16 %v2913
        %v3046 = vunpack.c.l.s8.bf16 %v2914
        %v3047 = vunpack.c.l.s8.bf16 %v2915
        %v3048 = vunpack.c.l.s8.bf16 %v2916
        %v3049 = vunpack.c.l.s8.bf16 %v2917
        %v3050 = vunpack.c.h.s8.bf16 %v2914
        %v3051 = vunpack.c.h.s8.bf16 %v2915
        %v3052 = vunpack.c.h.s8.bf16 %v2916
        %v3053 = vunpack.c.h.s8.bf16 %v2917
        %v3054 = vunpack.c.l.s8.bf16 %v2918
        %v3055 = vunpack.c.l.s8.bf16 %v2919
        %v3056 = vunpack.c.l.s8.bf16 %v2920
        %v3057 = vunpack.c.l.s8.bf16 %v2921
        %v3058 = vunpack.c.h.s8.bf16 %v2918
        %v3059 = vunpack.c.h.s8.bf16 %v2919
        %v3060 = vunpack.c.h.s8.bf16 %v2920
        %v3061 = vunpack.c.h.s8.bf16 %v2921
        %v3062 = vunpack.c.l.s8.bf16 %v2922
        %v3063 = vunpack.c.l.s8.bf16 %v2923
        %v3064 = vunpack.c.l.s8.bf16 %v2924
        %v3065 = vunpack.c.l.s8.bf16 %v2925
        %v3066 = vunpack.c.h.s8.bf16 %v2922
        %v3067 = vunpack.c.h.s8.bf16 %v2923
        %v3068 = vunpack.c.h.s8.bf16 %v2924
        %v3069 = vunpack.c.h.s8.bf16 %v2925
        %v3070 = vunpack.c.l.s8.bf16 %v2926
        %v3071 = vunpack.c.l.s8.bf16 %v2927
        %v3072 = vunpack.c.l.s8.bf16 %v2928
        %v3073 = vunpack.c.l.s8.bf16 %v2929
        %v3074 = vunpack.c.h.s8.bf16 %v2926
        %v3075 = vunpack.c.h.s8.bf16 %v2927
        %v3076 = vunpack.c.h.s8.bf16 %v2928
        %v3077 = vunpack.c.h.s8.bf16 %v2929
        %v3078 = vunpack.c.l.s8.bf16 %v2930
        %v3079 = vunpack.c.l.s8.bf16 %v2931
        %v3080 = vunpack.c.l.s8.bf16 %v2932
        %v3081 = vunpack.c.l.s8.bf16 %v2933
        %v3082 = vunpack.c.h.s8.bf16 %v2930
        %v3083 = vunpack.c.h.s8.bf16 %v2931
        %v3084 = vunpack.c.h.s8.bf16 %v2932
        %v3085 = vunpack.c.h.s8.bf16 %v2933
        %v3086 = vunpack.c.l.s8.bf16 %v2934
        %v3087 = vunpack.c.l.s8.bf16 %v2935
        %v3088 = vunpack.c.l.s8.bf16 %v2936
        %v3089 = vunpack.c.l.s8.bf16 %v2937
        %v3090 = vunpack.c.h.s8.bf16 %v2934
        %v3091 = vunpack.c.h.s8.bf16 %v2935
        %v3092 = vunpack.c.h.s8.bf16 %v2936
        %v3093 = vunpack.c.h.s8.bf16 %v2937
        %v3094 = vunpack.c.l.s8.bf16 %v2938
        %v3095 = vunpack.c.l.s8.bf16 %v2939
        %v3096 = vunpack.c.l.s8.bf16 %v2940
        %v3097 = vunpack.c.l.s8.bf16 %v2941
        %v3098 = vunpack.c.h.s8.bf16 %v2938
        %v3099 = vunpack.c.h.s8.bf16 %v2939
        %v3100 = vunpack.c.h.s8.bf16 %v2940
        %v3101 = vunpack.c.h.s8.bf16 %v2941
        %v3102 = vunpack.c.l.s8.bf16 %v2942
        %v3103 = vunpack.c.l.s8.bf16 %v2943
        %v3104 = vunpack.c.l.s8.bf16 %v2944
        %v3105 = vunpack.c.l.s8.bf16 %v2945
        %v3106 = vunpack.c.h.s8.bf16 %v2942
        %v3107 = vunpack.c.h.s8.bf16 %v2943
        %v3108 = vunpack.c.h.s8.bf16 %v2944
        %v3109 = vunpack.c.h.s8.bf16 %v2945
        %v3110 = vunpack.c.l.s8.bf16 %v2946
        %v3111 = vunpack.c.l.s8.bf16 %v2947
        %v3112 = vunpack.c.l.s8.bf16 %v2948
        %v3113 = vunpack.c.l.s8.bf16 %v2949
        %v3114 = vunpack.c.h.s8.bf16 %v2946
        %v3115 = vunpack.c.h.s8.bf16 %v2947
        %v3116 = vunpack.c.h.s8.bf16 %v2948
        %v3117 = vunpack.c.h.s8.bf16 %v2949
        %v3118 = vunpack.c.l.s8.bf16 %v2950
        %v3119 = vunpack.c.l.s8.bf16 %v2951
        %v3120 = vunpack.c.l.s8.bf16 %v2952
        %v3121 = vunpack.c.l.s8.bf16 %v2953
        %v3122 = vunpack.c.h.s8.bf16 %v2950
        %v3123 = vunpack.c.h.s8.bf16 %v2951
        %v3124 = vunpack.c.h.s8.bf16 %v2952
        %v3125 = vunpack.c.h.s8.bf16 %v2953
        %v3126 = vunpack.c.l.s8.bf16 %v2954
        %v3127 = vunpack.c.l.s8.bf16 %v2955
        %v3128 = vunpack.c.l.s8.bf16 %v2956
        %v3129 = vunpack.c.l.s8.bf16 %v2957
        %v3130 = vunpack.c.h.s8.bf16 %v2954
        %v3131 = vunpack.c.h.s8.bf16 %v2955
        %v3132 = vunpack.c.h.s8.bf16 %v2956
        %v3133 = vunpack.c.h.s8.bf16 %v2957
        %v3134 = vunpack.c.l.s8.bf16 %v2958
        %v3135 = vunpack.c.l.s8.bf16 %v2959
        %v3136 = vunpack.c.l.s8.bf16 %v2960
        %v3137 = vunpack.c.l.s8.bf16 %v2961
        %v3138 = vunpack.c.h.s8.bf16 %v2958
        %v3139 = vunpack.c.h.s8.bf16 %v2959
        %v3140 = vunpack.c.h.s8.bf16 %v2960
        %v3141 = vunpack.c.h.s8.bf16 %v2961
        %v3142 = vunpack.c.l.s8.bf16 %v2962
        %v3143 = vunpack.c.l.s8.bf16 %v2963
        %v3144 = vunpack.c.l.s8.bf16 %v2964
        %v3145 = vunpack.c.l.s8.bf16 %v2965
        %v3146 = vunpack.c.h.s8.bf16 %v2962
        %v3147 = vunpack.c.h.s8.bf16 %v2963
        %v3148 = vunpack.c.h.s8.bf16 %v2964
        %v3149 = vunpack.c.h.s8.bf16 %v2965
        %v3150 = vunpack.c.l.s8.bf16 %v2966
        %v3151 = vunpack.c.l.s8.bf16 %v2967
        %v3152 = vunpack.c.l.s8.bf16 %v2968
        %v3153 = vunpack.c.l.s8.bf16 %v2969
        %v3154 = vunpack.c.h.s8.bf16 %v2966
        %v3155 = vunpack.c.h.s8.bf16 %v2967
        %v3156 = vunpack.c.h.s8.bf16 %v2968
        %v3157 = vunpack.c.h.s8.bf16 %v2969
        %v3158 = vunpack.c.l.s8.bf16 %v2970
        %v3159 = vunpack.c.l.s8.bf16 %v2971
        %v3160 = vunpack.c.l.s8.bf16 %v2972
        %v3161 = vunpack.c.l.s8.bf16 %v2973
        %v3162 = vunpack.c.h.s8.bf16 %v2970
        %v3163 = vunpack.c.h.s8.bf16 %v2971
        %v3164 = vunpack.c.h.s8.bf16 %v2972
        %v3165 = vunpack.c.h.s8.bf16 %v2973
        %v3166 = vunpack.c.l.s8.bf16 %v2974
        %v3167 = vunpack.c.l.s8.bf16 %v2975
        %v3168 = vunpack.c.l.s8.bf16 %v2976
        %v3169 = vunpack.c.l.s8.bf16 %v2977
        %v3170 = vunpack.c.h.s8.bf16 %v2974
        %v3171 = vunpack.c.h.s8.bf16 %v2975
        %v3172 = vunpack.c.h.s8.bf16 %v2976
        %v3173 = vunpack.c.h.s8.bf16 %v2977
        %v3174 = vunpack.c.l.s8.bf16 %v2978
        %v3175 = vunpack.c.l.s8.bf16 %v2979
        %v3176 = vunpack.c.l.s8.bf16 %v2980
        %v3177 = vunpack.c.l.s8.bf16 %v2981
        %v3178 = vunpack.c.h.s8.bf16 %v2978
        %v3179 = vunpack.c.h.s8.bf16 %v2979
        %v3180 = vunpack.c.h.s8.bf16 %v2980
        %v3181 = vunpack.c.h.s8.bf16 %v2981
        %v3182 = vunpack.c.l.s8.bf16 %v2982
        %v3183 = vunpack.c.l.s8.bf16 %v2983
        %v3184 = vunpack.c.l.s8.bf16 %v2984
        %v3185 = vunpack.c.l.s8.bf16 %v2985
        %v3186 = vunpack.c.h.s8.bf16 %v2982
        %v3187 = vunpack.c.h.s8.bf16 %v2983
        %v3188 = vunpack.c.h.s8.bf16 %v2984
        %v3189 = vunpack.c.h.s8.bf16 %v2985
        %v3190 = vunpack.c.l.s8.bf16 %v2986
        %v3191 = vunpack.c.l.s8.bf16 %v2987
        %v3192 = vunpack.c.l.s8.bf16 %v2988
        %v3193 = vunpack.c.l.s8.bf16 %v2989
        %v3194 = vunpack.c.h.s8.bf16 %v2986
        %v3195 = vunpack.c.h.s8.bf16 %v2987
        %v3196 = vunpack.c.h.s8.bf16 %v2988
        %v3197 = vunpack.c.h.s8.bf16 %v2989
        %v3198 = vunpack.c.l.s8.bf16 %v2990
        %v3199 = vunpack.c.l.s8.bf16 %v2991
        %v3200 = vunpack.c.l.s8.bf16 %v2992
        %v3201 = vunpack.c.l.s8.bf16 %v2993
        %v3202 = vunpack.c.h.s8.bf16 %v2990
        %v3203 = vunpack.c.h.s8.bf16 %v2991
        %v3204 = vunpack.c.h.s8.bf16 %v2992
        %v3205 = vunpack.c.h.s8.bf16 %v2993
        %v3206 = vunpack.c.l.s8.bf16 %v2994
        %v3207 = vunpack.c.l.s8.bf16 %v2995
        %v3208 = vunpack.c.l.s8.bf16 %v2996
        %v3209 = vunpack.c.l.s8.bf16 %v2997
        %v3210 = vunpack.c.h.s8.bf16 %v2994
        %v3211 = vunpack.c.h.s8.bf16 %v2995
        %v3212 = vunpack.c.h.s8.bf16 %v2996
        %v3213 = vunpack.c.h.s8.bf16 %v2997
        %v3214 = vunpack.c.l.s8.bf16 %v2998
        %v3215 = vunpack.c.l.s8.bf16 %v2999
        %v3216 = vunpack.c.l.s8.bf16 %v3000
        %v3217 = vunpack.c.l.s8.bf16 %v3001
        %v3218 = vunpack.c.h.s8.bf16 %v2998
        %v3219 = vunpack.c.h.s8.bf16 %v2999
        %v3220 = vunpack.c.h.s8.bf16 %v3000
        %v3221 = vunpack.c.h.s8.bf16 %v3001
        %v3222 = vunpack.c.l.s8.bf16 %v3002
        %v3223 = vunpack.c.l.s8.bf16 %v3003
        %v3224 = vunpack.c.l.s8.bf16 %v3004
        %v3225 = vunpack.c.l.s8.bf16 %v3005
        %v3226 = vunpack.c.h.s8.bf16 %v3002
        %v3227 = vunpack.c.h.s8.bf16 %v3003
        %v3228 = vunpack.c.h.s8.bf16 %v3004
        %v3229 = vunpack.c.h.s8.bf16 %v3005
        %v3230 = vunpack.c.l.s8.bf16 %v3006
        %v3231 = vunpack.c.l.s8.bf16 %v3007
        %v3232 = vunpack.c.l.s8.bf16 %v3008
        %v3233 = vunpack.c.l.s8.bf16 %v3009
        %v3234 = vunpack.c.h.s8.bf16 %v3006
        %v3235 = vunpack.c.h.s8.bf16 %v3007
        %v3236 = vunpack.c.h.s8.bf16 %v3008
        %v3237 = vunpack.c.h.s8.bf16 %v3009
        %v3238 = vunpack.c.l.s8.bf16 %v3010
        %v3239 = vunpack.c.l.s8.bf16 %v3011
        %v3240 = vunpack.c.l.s8.bf16 %v3012
        %v3241 = vunpack.c.l.s8.bf16 %v3013
        %v3242 = vunpack.c.h.s8.bf16 %v3010
        %v3243 = vunpack.c.h.s8.bf16 %v3011
        %v3244 = vunpack.c.h.s8.bf16 %v3012
        %v3245 = vunpack.c.h.s8.bf16 %v3013
        %v3246 = vunpack.c.l.s8.bf16 %v3014
        %v3247 = vunpack.c.l.s8.bf16 %v3015
        %v3248 = vunpack.c.l.s8.bf16 %v3016
        %v3249 = vunpack.c.l.s8.bf16 %v3017
        %v3250 = vunpack.c.h.s8.bf16 %v3014
        %v3251 = vunpack.c.h.s8.bf16 %v3015
        %v3252 = vunpack.c.h.s8.bf16 %v3016
        %v3253 = vunpack.c.h.s8.bf16 %v3017
        %v3254 = vunpack.c.l.s8.bf16 %v3018
        %v3255 = vunpack.c.l.s8.bf16 %v3019
        %v3256 = vunpack.c.l.s8.bf16 %v3020
        %v3257 = vunpack.c.l.s8.bf16 %v3021
        %v3258 = vunpack.c.h.s8.bf16 %v3018
        %v3259 = vunpack.c.h.s8.bf16 %v3019
        %v3260 = vunpack.c.h.s8.bf16 %v3020
        %v3261 = vunpack.c.h.s8.bf16 %v3021
        %v3262 = vunpack.c.l.s8.bf16 %v3022
        %v3263 = vunpack.c.l.s8.bf16 %v3023
        %v3264 = vunpack.c.l.s8.bf16 %v3024
        %v3265 = vunpack.c.l.s8.bf16 %v3025
        %v3266 = vunpack.c.h.s8.bf16 %v3022
        %v3267 = vunpack.c.h.s8.bf16 %v3023
        %v3268 = vunpack.c.h.s8.bf16 %v3024
        %v3269 = vunpack.c.h.s8.bf16 %v3025
        %v3270 = vunpack.c.l.s8.bf16 %v3026
        %v3271 = vunpack.c.l.s8.bf16 %v3027
        %v3272 = vunpack.c.l.s8.bf16 %v3028
        %v3273 = vunpack.c.l.s8.bf16 %v3029
        %v3274 = vunpack.c.h.s8.bf16 %v3026
        %v3275 = vunpack.c.h.s8.bf16 %v3027
        %v3276 = vunpack.c.h.s8.bf16 %v3028
        %v3277 = vunpack.c.h.s8.bf16 %v3029
        %v3278 = vunpack.c.l.s8.bf16 %v3030
        %v3279 = vunpack.c.l.s8.bf16 %v3031
        %v3280 = vunpack.c.l.s8.bf16 %v3032
        %v3281 = vunpack.c.l.s8.bf16 %v3033
        %v3282 = vunpack.c.h.s8.bf16 %v3030
        %v3283 = vunpack.c.h.s8.bf16 %v3031
        %v3284 = vunpack.c.h.s8.bf16 %v3032
        %v3285 = vunpack.c.h.s8.bf16 %v3033
        %v3286 = vunpack.c.l.s8.bf16 %v3034
        %v3287 = vunpack.c.l.s8.bf16 %v3035
        %v3288 = vunpack.c.l.s8.bf16 %v3036
        %v3289 = vunpack.c.l.s8.bf16 %v3037
        %v3290 = vunpack.c.h.s8.bf16 %v3034
        %v3291 = vunpack.c.h.s8.bf16 %v3035
        %v3292 = vunpack.c.h.s8.bf16 %v3036
        %v3293 = vunpack.c.h.s8.bf16 %v3037
        %v3294 = vld [vmem:[#allocation3] sm:$0xff]
        %v3295 = vld [vmem:[#allocation3 + $0x8] sm:$0xff]
        %v3296 = vld [vmem:[#allocation3 + $0x10] sm:$0xff]
        %v3297 = vld [vmem:[#allocation3 + $0x18] sm:$0xff]
        %v3298 = vpack.c.bf16 %v2902, %v2902
        %v3299 = vpack.c.bf16 %v2903, %v2903
        %v3300 = vpack.c.bf16 %v2904, %v2904
        %v3301 = vpack.c.bf16 %v2905, %v2905
        %v3302 = vpack.c.bf16 %v2906, %v2906
        %v3303 = vpack.c.bf16 %v2907, %v2907
        %v3304 = vpack.c.bf16 %v2908, %v2908
        %v3305 = vpack.c.bf16 %v2909, %v2909
        %3306 = vmatprep.subr.bf16.mxu0 %v3067
        %3307 = vmatpush1.bf16.msra.mxu0 %v3066
        %3308 = vmatprep.subr.bf16.mxu0 %v3063
        %3309 = vmatpush1.bf16.msra.mxu0 %v3062
        %3310 = vmatprep.subr.bf16.mxu0 %v3059
        %3311 = vmatpush1.bf16.msra.mxu0 %v3058
        %3312 = vmatprep.subr.bf16.mxu0 %v3055
        %3313 = vmatpush1.bf16.msra.mxu0 %v3054
        %3314 = vmatprep.subr.bf16.mxu0 %v3051
        %3315 = vmatpush1.bf16.msra.mxu0 %v3050
        %3316 = vmatprep.subr.bf16.mxu0 %v3047
        %3317 = vmatpush1.bf16.msra.mxu0 %v3046
        %3318 = vmatprep.subr.bf16.mxu0 %v3043
        %3319 = vmatpush1.bf16.msra.mxu0 %v3042
        %3320 = vmatprep.subr.bf16.mxu0 %v3039
        %3321 = vmatpush1.bf16.msra.mxu0 %v3038
        %3322 = vmatprep.subr.bf16.mxu0 %v3099
        %3323 = vmatpush2.bf16.msra.mxu0 %v3098
        %3324 = vmatprep.subr.bf16.mxu0 %v3095
        %3325 = vmatpush2.bf16.msra.mxu0 %v3094
        %3326 = vmatprep.subr.bf16.mxu0 %v3091
        %3327 = vmatpush2.bf16.msra.mxu0 %v3090
        %3328 = vmatprep.subr.bf16.mxu0 %v3087
        %3329 = vmatpush2.bf16.msra.mxu0 %v3086
        %3330 = vmatprep.subr.bf16.mxu0 %v3083
        %3331 = vmatpush2.bf16.msra.mxu0 %v3082
        %3332 = vmatprep.subr.bf16.mxu0 %v3079
        %3333 = vmatpush2.bf16.msra.mxu0 %v3078
        %3334 = vmatprep.subr.bf16.mxu0 %v3075
        %3335 = vmatpush2.bf16.msra.mxu0 %v3074
        %3336 = vmatprep.subr.bf16.mxu0 %v3071
        %3337 = vmatpush2.bf16.msra.mxu0 %v3070
        %3338 = vmatprep.mubr.bf16.mxu0 %v3299
        %3339 = vmatmul.mubr.bf16.gmra.mxu0 %v3298
        %v3340 = vpop.f32.mrf.mxu0
        %v3341 = vadd.f32 0.0, %v3340
        %v3342 = vpop.f32.mrf.mxu0
        %v3343 = vadd.f32 0.0, %v3342
        %v3344 = vpop.f32.mrf.mxu0
        %v3345 = vpop.f32.mrf.mxu0
        %3346 = vdwg.mxu0
        %3347 = vmatprep.subr.bf16.mxu0 %v3131
        %3348 = vmatpush1.bf16.msra.mxu0 %v3130
        %3349 = vmatprep.subr.bf16.mxu0 %v3127
        %3350 = vmatpush1.bf16.msra.mxu0 %v3126
        %3351 = vmatprep.subr.bf16.mxu0 %v3123
        %3352 = vmatpush1.bf16.msra.mxu0 %v3122
        %3353 = vmatprep.subr.bf16.mxu0 %v3119
        %3354 = vmatpush1.bf16.msra.mxu0 %v3118
        %3355 = vmatprep.subr.bf16.mxu0 %v3115
        %3356 = vmatpush1.bf16.msra.mxu0 %v3114
        %3357 = vmatprep.subr.bf16.mxu0 %v3111
        %3358 = vmatpush1.bf16.msra.mxu0 %v3110
        %3359 = vmatprep.subr.bf16.mxu0 %v3107
        %3360 = vmatpush1.bf16.msra.mxu0 %v3106
        %3361 = vmatprep.subr.bf16.mxu0 %v3103
        %3362 = vmatpush1.bf16.msra.mxu0 %v3102
        %3363 = vmatprep.subr.bf16.mxu0 %v3163
        %3364 = vmatpush2.bf16.msra.mxu0 %v3162
        %3365 = vmatprep.subr.bf16.mxu0 %v3159
        %3366 = vmatpush2.bf16.msra.mxu0 %v3158
        %3367 = vmatprep.subr.bf16.mxu0 %v3155
        %3368 = vmatpush2.bf16.msra.mxu0 %v3154
        %3369 = vmatprep.subr.bf16.mxu0 %v3151
        %3370 = vmatpush2.bf16.msra.mxu0 %v3150
        %3371 = vmatprep.subr.bf16.mxu0 %v3147
        %3372 = vmatpush2.bf16.msra.mxu0 %v3146
        %3373 = vmatprep.subr.bf16.mxu0 %v3143
        %3374 = vmatpush2.bf16.msra.mxu0 %v3142
        %3375 = vmatprep.subr.bf16.mxu0 %v3139
        %3376 = vmatpush2.bf16.msra.mxu0 %v3138
        %3377 = vmatprep.subr.bf16.mxu0 %v3135
        %3378 = vmatpush2.bf16.msra.mxu0 %v3134
        %3379 = vmatprep.mubr.bf16.mxu0 %v3301
        %3380 = vmatmul.mubr.bf16.gmra.mxu0 %v3300
        %v3381 = vpop.f32.mrf.mxu0
        %v3382 = vadd.f32 %v3341, %v3381
        %v3383 = vpop.f32.mrf.mxu0
        %v3384 = vadd.f32 %v3343, %v3383
        %v3385 = vpop.f32.mrf.mxu0
        %v3386 = vpop.f32.mrf.mxu0
        %3387 = vdwg.mxu0
        %3388 = vmatprep.subr.bf16.mxu0 %v3195
        %3389 = vmatpush1.bf16.msra.mxu0 %v3194
        %3390 = vmatprep.subr.bf16.mxu0 %v3191
        %3391 = vmatpush1.bf16.msra.mxu0 %v3190
        %3392 = vmatprep.subr.bf16.mxu0 %v3187
        %3393 = vmatpush1.bf16.msra.mxu0 %v3186
        %3394 = vmatprep.subr.bf16.mxu0 %v3183
        %3395 = vmatpush1.bf16.msra.mxu0 %v3182
        %3396 = vmatprep.subr.bf16.mxu0 %v3179
        %3397 = vmatpush1.bf16.msra.mxu0 %v3178
        %3398 = vmatprep.subr.bf16.mxu0 %v3175
        %3399 = vmatpush1.bf16.msra.mxu0 %v3174
        %3400 = vmatprep.subr.bf16.mxu0 %v3171
        %3401 = vmatpush1.bf16.msra.mxu0 %v3170
        %3402 = vmatprep.subr.bf16.mxu0 %v3167
        %3403 = vmatpush1.bf16.msra.mxu0 %v3166
        %3404 = vmatprep.subr.bf16.mxu0 %v3227
        %3405 = vmatpush2.bf16.msra.mxu0 %v3226
        %3406 = vmatprep.subr.bf16.mxu0 %v3223
        %3407 = vmatpush2.bf16.msra.mxu0 %v3222
        %3408 = vmatprep.subr.bf16.mxu0 %v3219
        %3409 = vmatpush2.bf16.msra.mxu0 %v3218
        %3410 = vmatprep.subr.bf16.mxu0 %v3215
        %3411 = vmatpush2.bf16.msra.mxu0 %v3214
        %3412 = vmatprep.subr.bf16.mxu0 %v3211
        %3413 = vmatpush2.bf16.msra.mxu0 %v3210
        %3414 = vmatprep.subr.bf16.mxu0 %v3207
        %3415 = vmatpush2.bf16.msra.mxu0 %v3206
        %3416 = vmatprep.subr.bf16.mxu0 %v3203
        %3417 = vmatpush2.bf16.msra.mxu0 %v3202
        %3418 = vmatprep.subr.bf16.mxu0 %v3199
        %3419 = vmatpush2.bf16.msra.mxu0 %v3198
        %3420 = vmatprep.mubr.bf16.mxu0 %v3303
        %3421 = vmatmul.mubr.bf16.gmra.mxu0 %v3302
        %v3422 = vpop.f32.mrf.mxu0
        %v3423 = vadd.f32 %v3382, %v3422
        %v3424 = vpop.f32.mrf.mxu0
        %v3425 = vadd.f32 %v3384, %v3424
        %v3426 = vpop.f32.mrf.mxu0
        %v3427 = vpop.f32.mrf.mxu0
        %3428 = vdwg.mxu0
        %3429 = vmatprep.subr.bf16.mxu0 %v3259
        %3430 = vmatpush1.bf16.msra.mxu0 %v3258
        %3431 = vmatprep.subr.bf16.mxu0 %v3255
        %3432 = vmatpush1.bf16.msra.mxu0 %v3254
        %3433 = vmatprep.subr.bf16.mxu0 %v3251
        %3434 = vmatpush1.bf16.msra.mxu0 %v3250
        %3435 = vmatprep.subr.bf16.mxu0 %v3247
        %3436 = vmatpush1.bf16.msra.mxu0 %v3246
        %3437 = vmatprep.subr.bf16.mxu0 %v3243
        %3438 = vmatpush1.bf16.msra.mxu0 %v3242
        %3439 = vmatprep.subr.bf16.mxu0 %v3239
        %3440 = vmatpush1.bf16.msra.mxu0 %v3238
        %3441 = vmatprep.subr.bf16.mxu0 %v3235
        %3442 = vmatpush1.bf16.msra.mxu0 %v3234
        %3443 = vmatprep.subr.bf16.mxu0 %v3231
        %3444 = vmatpush1.bf16.msra.mxu0 %v3230
        %3445 = vmatprep.subr.bf16.mxu0 %v3291
        %3446 = vmatpush2.bf16.msra.mxu0 %v3290
        %3447 = vmatprep.subr.bf16.mxu0 %v3287
        %3448 = vmatpush2.bf16.msra.mxu0 %v3286
        %3449 = vmatprep.subr.bf16.mxu0 %v3283
        %3450 = vmatpush2.bf16.msra.mxu0 %v3282
        %3451 = vmatprep.subr.bf16.mxu0 %v3279
        %3452 = vmatpush2.bf16.msra.mxu0 %v3278
        %3453 = vmatprep.subr.bf16.mxu0 %v3275
        %3454 = vmatpush2.bf16.msra.mxu0 %v3274
        %3455 = vmatprep.subr.bf16.mxu0 %v3271
        %3456 = vmatpush2.bf16.msra.mxu0 %v3270
        %3457 = vmatprep.subr.bf16.mxu0 %v3267
        %3458 = vmatpush2.bf16.msra.mxu0 %v3266
        %3459 = vmatprep.subr.bf16.mxu0 %v3263
        %3460 = vmatpush2.bf16.msra.mxu0 %v3262
        %3461 = vmatprep.mubr.bf16.mxu0 %v3305
        %3462 = vmatmul.mubr.bf16.gmra.mxu0 %v3304
        %v3463 = vpop.f32.mrf.mxu0
        %v3464 = vadd.f32 %v3423, %v3463
        %v3465 = vpop.f32.mrf.mxu0
        %v3466 = vadd.f32 %v3425, %v3465
        %v3467 = vpop.f32.mrf.mxu0
        %v3468 = vpop.f32.mrf.mxu0
        %3469 = vdwg.mxu0
        %3470 = vmatprep.subr.bf16.mxu0 %v3069
        %3471 = vmatpush1.bf16.msra.mxu0 %v3068
        %3472 = vmatprep.subr.bf16.mxu0 %v3065
        %3473 = vmatpush1.bf16.msra.mxu0 %v3064
        %3474 = vmatprep.subr.bf16.mxu0 %v3061
        %3475 = vmatpush1.bf16.msra.mxu0 %v3060
        %3476 = vmatprep.subr.bf16.mxu0 %v3057
        %3477 = vmatpush1.bf16.msra.mxu0 %v3056
        %3478 = vmatprep.subr.bf16.mxu0 %v3053
        %3479 = vmatpush1.bf16.msra.mxu0 %v3052
        %3480 = vmatprep.subr.bf16.mxu0 %v3049
        %3481 = vmatpush1.bf16.msra.mxu0 %v3048
        %3482 = vmatprep.subr.bf16.mxu0 %v3045
        %3483 = vmatpush1.bf16.msra.mxu0 %v3044
        %3484 = vmatprep.subr.bf16.mxu0 %v3041
        %3485 = vmatpush1.bf16.msra.mxu0 %v3040
        %3486 = vmatprep.subr.bf16.mxu0 %v3101
        %3487 = vmatpush2.bf16.msra.mxu0 %v3100
        %3488 = vmatprep.subr.bf16.mxu0 %v3097
        %3489 = vmatpush2.bf16.msra.mxu0 %v3096
        %3490 = vmatprep.subr.bf16.mxu0 %v3093
        %3491 = vmatpush2.bf16.msra.mxu0 %v3092
        %3492 = vmatprep.subr.bf16.mxu0 %v3089
        %3493 = vmatpush2.bf16.msra.mxu0 %v3088
        %3494 = vmatprep.subr.bf16.mxu0 %v3085
        %3495 = vmatpush2.bf16.msra.mxu0 %v3084
        %3496 = vmatprep.subr.bf16.mxu0 %v3081
        %3497 = vmatpush2.bf16.msra.mxu0 %v3080
        %3498 = vmatprep.subr.bf16.mxu0 %v3077
        %3499 = vmatpush2.bf16.msra.mxu0 %v3076
        %3500 = vmatprep.subr.bf16.mxu0 %v3073
        %3501 = vmatpush2.bf16.msra.mxu0 %v3072
        %3502 = vmatprep.mubr.bf16.mxu0 %v3299
        %3503 = vmatmul.mubr.bf16.gmra.mxu0 %v3298
        %v3504 = vpop.f32.mrf.mxu0
        %v3505 = vadd.f32 0.0, %v3504
        %v3506 = vpop.f32.mrf.mxu0
        %v3507 = vadd.f32 0.0, %v3506
        %v3508 = vpop.f32.mrf.mxu0
        %v3509 = vpop.f32.mrf.mxu0
        %3510 = vdwg.mxu0
        %3511 = vmatprep.subr.bf16.mxu0 %v3133
        %3512 = vmatpush1.bf16.msra.mxu0 %v3132
        %3513 = vmatprep.subr.bf16.mxu0 %v3129
        %3514 = vmatpush1.bf16.msra.mxu0 %v3128
        %3515 = vmatprep.subr.bf16.mxu0 %v3125
        %3516 = vmatpush1.bf16.msra.mxu0 %v3124
        %3517 = vmatprep.subr.bf16.mxu0 %v3121
        %3518 = vmatpush1.bf16.msra.mxu0 %v3120
        %3519 = vmatprep.subr.bf16.mxu0 %v3117
        %3520 = vmatpush1.bf16.msra.mxu0 %v3116
        %3521 = vmatprep.subr.bf16.mxu0 %v3113
        %3522 = vmatpush1.bf16.msra.mxu0 %v3112
        %3523 = vmatprep.subr.bf16.mxu0 %v3109
        %3524 = vmatpush1.bf16.msra.mxu0 %v3108
        %3525 = vmatprep.subr.bf16.mxu0 %v3105
        %3526 = vmatpush1.bf16.msra.mxu0 %v3104
        %3527 = vmatprep.subr.bf16.mxu0 %v3165
        %3528 = vmatpush2.bf16.msra.mxu0 %v3164
        %3529 = vmatprep.subr.bf16.mxu0 %v3161
        %3530 = vmatpush2.bf16.msra.mxu0 %v3160
        %3531 = vmatprep.subr.bf16.mxu0 %v3157
        %3532 = vmatpush2.bf16.msra.mxu0 %v3156
        %3533 = vmatprep.subr.bf16.mxu0 %v3153
        %3534 = vmatpush2.bf16.msra.mxu0 %v3152
        %3535 = vmatprep.subr.bf16.mxu0 %v3149
        %3536 = vmatpush2.bf16.msra.mxu0 %v3148
        %3537 = vmatprep.subr.bf16.mxu0 %v3145
        %3538 = vmatpush2.bf16.msra.mxu0 %v3144
        %3539 = vmatprep.subr.bf16.mxu0 %v3141
        %3540 = vmatpush2.bf16.msra.mxu0 %v3140
        %3541 = vmatprep.subr.bf16.mxu0 %v3137
        %3542 = vmatpush2.bf16.msra.mxu0 %v3136
        %3543 = vmatprep.mubr.bf16.mxu0 %v3301
        %3544 = vmatmul.mubr.bf16.gmra.mxu0 %v3300
        %v3545 = vpop.f32.mrf.mxu0
        %v3546 = vadd.f32 %v3505, %v3545
        %v3547 = vpop.f32.mrf.mxu0
        %v3548 = vadd.f32 %v3507, %v3547
        %v3549 = vpop.f32.mrf.mxu0
        %v3550 = vpop.f32.mrf.mxu0
        %3551 = vdwg.mxu0
        %3552 = vmatprep.subr.bf16.mxu0 %v3197
        %3553 = vmatpush1.bf16.msra.mxu0 %v3196
        %3554 = vmatprep.subr.bf16.mxu0 %v3193
        %3555 = vmatpush1.bf16.msra.mxu0 %v3192
        %3556 = vmatprep.subr.bf16.mxu0 %v3189
        %3557 = vmatpush1.bf16.msra.mxu0 %v3188
        %3558 = vmatprep.subr.bf16.mxu0 %v3185
        %3559 = vmatpush1.bf16.msra.mxu0 %v3184
        %3560 = vmatprep.subr.bf16.mxu0 %v3181
        %3561 = vmatpush1.bf16.msra.mxu0 %v3180
        %3562 = vmatprep.subr.bf16.mxu0 %v3177
        %3563 = vmatpush1.bf16.msra.mxu0 %v3176
        %3564 = vmatprep.subr.bf16.mxu0 %v3173
        %3565 = vmatpush1.bf16.msra.mxu0 %v3172
        %3566 = vmatprep.subr.bf16.mxu0 %v3169
        %3567 = vmatpush1.bf16.msra.mxu0 %v3168
        %3568 = vmatprep.subr.bf16.mxu0 %v3229
        %3569 = vmatpush2.bf16.msra.mxu0 %v3228
        %3570 = vmatprep.subr.bf16.mxu0 %v3225
        %3571 = vmatpush2.bf16.msra.mxu0 %v3224
        %3572 = vmatprep.subr.bf16.mxu0 %v3221
        %3573 = vmatpush2.bf16.msra.mxu0 %v3220
        %3574 = vmatprep.subr.bf16.mxu0 %v3217
        %3575 = vmatpush2.bf16.msra.mxu0 %v3216
        %3576 = vmatprep.subr.bf16.mxu0 %v3213
        %3577 = vmatpush2.bf16.msra.mxu0 %v3212
        %3578 = vmatprep.subr.bf16.mxu0 %v3209
        %3579 = vmatpush2.bf16.msra.mxu0 %v3208
        %3580 = vmatprep.subr.bf16.mxu0 %v3205
        %3581 = vmatpush2.bf16.msra.mxu0 %v3204
        %3582 = vmatprep.subr.bf16.mxu0 %v3201
        %3583 = vmatpush2.bf16.msra.mxu0 %v3200
        %3584 = vmatprep.mubr.bf16.mxu0 %v3303
        %3585 = vmatmul.mubr.bf16.gmra.mxu0 %v3302
        %v3586 = vpop.f32.mrf.mxu0
        %v3587 = vadd.f32 %v3546, %v3586
        %v3588 = vpop.f32.mrf.mxu0
        %v3589 = vadd.f32 %v3548, %v3588
        %v3590 = vpop.f32.mrf.mxu0
        %v3591 = vpop.f32.mrf.mxu0
        %3592 = vdwg.mxu0
        %3593 = vmatprep.subr.bf16.mxu0 %v3261
        %3594 = vmatpush1.bf16.msra.mxu0 %v3260
        %3595 = vmatprep.subr.bf16.mxu0 %v3257
        %3596 = vmatpush1.bf16.msra.mxu0 %v3256
        %3597 = vmatprep.subr.bf16.mxu0 %v3253
        %3598 = vmatpush1.bf16.msra.mxu0 %v3252
        %3599 = vmatprep.subr.bf16.mxu0 %v3249
        %3600 = vmatpush1.bf16.msra.mxu0 %v3248
        %3601 = vmatprep.subr.bf16.mxu0 %v3245
        %3602 = vmatpush1.bf16.msra.mxu0 %v3244
        %3603 = vmatprep.subr.bf16.mxu0 %v3241
        %3604 = vmatpush1.bf16.msra.mxu0 %v3240
        %3605 = vmatprep.subr.bf16.mxu0 %v3237
        %3606 = vmatpush1.bf16.msra.mxu0 %v3236
        %3607 = vmatprep.subr.bf16.mxu0 %v3233
        %3608 = vmatpush1.bf16.msra.mxu0 %v3232
        %3609 = vmatprep.subr.bf16.mxu0 %v3293
        %3610 = vmatpush2.bf16.msra.mxu0 %v3292
        %3611 = vmatprep.subr.bf16.mxu0 %v3289
        %3612 = vmatpush2.bf16.msra.mxu0 %v3288
        %3613 = vmatprep.subr.bf16.mxu0 %v3285
        %3614 = vmatpush2.bf16.msra.mxu0 %v3284
        %3615 = vmatprep.subr.bf16.mxu0 %v3281
        %3616 = vmatpush2.bf16.msra.mxu0 %v3280
        %3617 = vmatprep.subr.bf16.mxu0 %v3277
        %3618 = vmatpush2.bf16.msra.mxu0 %v3276
        %3619 = vmatprep.subr.bf16.mxu0 %v3273
        %3620 = vmatpush2.bf16.msra.mxu0 %v3272
        %3621 = vmatprep.subr.bf16.mxu0 %v3269
        %3622 = vmatpush2.bf16.msra.mxu0 %v3268
        %3623 = vmatprep.subr.bf16.mxu0 %v3265
        %3624 = vmatpush2.bf16.msra.mxu0 %v3264
        %3625 = vmatprep.mubr.bf16.mxu0 %v3305
        %3626 = vmatmul.mubr.bf16.gmra.mxu0 %v3304
        %v3627 = vpop.f32.mrf.mxu0
        %v3628 = vadd.f32 %v3587, %v3627
        %v3629 = vpop.f32.mrf.mxu0
        %v3630 = vadd.f32 %v3589, %v3629
        %v3631 = vpop.f32.mrf.mxu0
        %v3632 = vpop.f32.mrf.mxu0
        %3633 = vdwg.mxu0
        %v3634 = vadd.f32 %v3294, %v3464
        %v3635 = vadd.f32 %v3295, %v3466
        %v3636 = vadd.f32 %v3296, %v3628
        %v3637 = vadd.f32 %v3297, %v3630
        %3638 = vst [vmem:[#allocation3] sm:$0xff] %v3634
        %3639 = vst [vmem:[#allocation3 + $0x8] sm:$0xff] %v3635
        %3640 = vst [vmem:[#allocation3 + $0x10] sm:$0xff] %v3636
        %3641 = vst [vmem:[#allocation3 + $0x18] sm:$0xff] %v3637
        %p3642 = scmp.eq.s32.totalorder %s32, 1
        // Predicated region
        $region97: #{tpu_custom_call.1} parent=59 // pred_check
          %p3643 = pneg %p3642
        $region98: #{tpu_custom_call.1} parent=59 // pred_check_branch
          %3645 = sbr.rel (%p3643) target = $region100
        $region99: #{tpu_custom_call.1} parent=59 // pred_region
          %v3646 = vld [vmem:[#allocation3] sm:$0xff]
          %v3647 = vld [vmem:[#allocation3 + $0x8] sm:$0xff]
          %v3648 = vld [vmem:[#allocation3 + $0x10] sm:$0xff]
          %v3649 = vld [vmem:[#allocation3 + $0x18] sm:$0xff]
          %v3650 = vld [vmem:[#allocation13] sm:$0xf]
          %v3652 = vlaneseq
          %v3653 = vshrl.u32 %v3652, 7
          %v3654 = vsub.s32 0, %v3653
          %v3655 = vrot.slane %v3650, %v3654
          %v3656 = vlaneseq
          %v3657 = vshrl.u32 %v3656, 7
          %v3658 = vsub.s32 1, %v3657
          %v3659 = vrot.slane %v3650, %v3658
          %v3660 = vlaneseq
          %v3661 = vshrl.u32 %v3660, 7
          %v3662 = vsub.s32 2, %v3661
          %v3663 = vrot.slane %v3650, %v3662
          %v3664 = vlaneseq
          %v3665 = vshrl.u32 %v3664, 7
          %v3666 = vsub.s32 3, %v3665
          %v3667 = vrot.slane %v3650, %v3666
          %v3672 = vmul.f32 %v3646, %v3655
          %v3673 = vmul.f32 %v3647, %v3659
          %v3674 = vmul.f32 %v3648, %v3663
          %v3675 = vmul.f32 %v3649, %v3667
          %v3676 = vld [vmem:[#allocation15] sm:$0xf]
          %v3678 = vlaneseq
          %v3679 = vshrl.u32 %v3678, 7
          %v3680 = vsub.s32 0, %v3679
          %v3681 = vrot.slane %v3676, %v3680
          %v3682 = vlaneseq
          %v3683 = vshrl.u32 %v3682, 7
          %v3684 = vsub.s32 1, %v3683
          %v3685 = vrot.slane %v3676, %v3684
          %v3686 = vlaneseq
          %v3687 = vshrl.u32 %v3686, 7
          %v3688 = vsub.s32 2, %v3687
          %v3689 = vrot.slane %v3676, %v3688
          %v3690 = vlaneseq
          %v3691 = vshrl.u32 %v3690, 7
          %v3692 = vsub.s32 3, %v3691
          %v3693 = vrot.slane %v3676, %v3692
          %v3698 = vadd.f32 %v3672, %v3681
          %v3699 = vadd.f32 %v3673, %v3685
          %v3700 = vadd.f32 %v3674, %v3689
          %v3701 = vadd.f32 %v3675, %v3693
          %v3702 = vmax.f32 %v3698, 0.0
          %v3703 = vmax.f32 %v3699, 0.0
          %v3704 = vmax.f32 %v3700, 0.0
          %v3705 = vmax.f32 %v3701, 0.0
          %v3706 = vld [vmem:[#allocation16] sm:$0xf]
          %v3708 = vlaneseq
          %v3709 = vshrl.u32 %v3708, 7
          %v3710 = vsub.s32 0, %v3709
          %v3711 = vrot.slane %v3706, %v3710
          %v3712 = vlaneseq
          %v3713 = vshrl.u32 %v3712, 7
          %v3714 = vsub.s32 1, %v3713
          %v3715 = vrot.slane %v3706, %v3714
          %v3716 = vlaneseq
          %v3717 = vshrl.u32 %v3716, 7
          %v3718 = vsub.s32 2, %v3717
          %v3719 = vrot.slane %v3706, %v3718
          %v3720 = vlaneseq
          %v3721 = vshrl.u32 %v3720, 7
          %v3722 = vsub.s32 3, %v3721
          %v3723 = vrot.slane %v3706, %v3722
          %v3728 = vmul.f32 %v3702, %v3711
          %v3729 = vmul.f32 %v3703, %v3715
          %v3730 = vmul.f32 %v3704, %v3719
          %v3731 = vmul.f32 %v3705, %v3723
          %v3732 = vadd.f32 %v3728, %v3729
          %v3733 = vadd.f32 %v3732, %v3730
          %v3734 = vadd.f32 %v3733, %v3731
          %3735 = vadd.xlane.f32.xlu0 %v3734
          %v3736 = vpop.xlane.xlu0 %3735
          %v3737 = vld [vmem:[#allocation4] sm:$0x1]
          %v3739 = vlaneseq
          %v3740 = vshrl.u32 %v3739, 7
          %v3741 = vsub.s32 0, %v3740
          %v3742 = vrot.slane %v3737, %v3741
          %v3744 = vadd.f32 %v3736, %v3742
          %vm3745 = vcmask 7168
          %3746 = vst.msk [vmem:[%s10] sm:$0xff] %vm3745, %v3744
        $region100: #{tpu_custom_call.1} parent=59 // pred_fallthru
          _
        // Predicated region
        $region101: #{tpu_custom_call.1} parent=59 // pred_check
          %p3747 = pneg %p275
        $region102: #{tpu_custom_call.1} parent=59 // pred_check_branch
          %3749 = sbr.rel (%p3747) target = $region104
        $region103: #{tpu_custom_call.1} parent=59 // pred_region
          _
        $region104: #{tpu_custom_call.1} parent=59 // pred_fallthru
          _
        // Predicated region
        $region105: #{tpu_custom_call.1} parent=59 // pred_check
          %p3750 = pneg %p275
        $region106: #{tpu_custom_call.1} parent=59 // pred_check_branch
          %3752 = sbr.rel (%p3750) target = $region108
        $region107: #{tpu_custom_call.1} parent=59 // pred_region
          _
        $region108: #{tpu_custom_call.1} parent=59 // pred_fallthru
          _
      $region60: #{tpu_custom_call.1} parent=5 // pred_fallthru
        _
      %p3753 = scmp.le.s32.totalorder 2, %s27
      // Predicated region
      $region109: #{tpu_custom_call.1} parent=5 // pred_check
        %p3754 = pneg %p3753
      $region110: #{tpu_custom_call.1} parent=5 // pred_check_branch
        %3756 = sbr.rel (%p3754) target = $region112
      $region111: #{tpu_custom_call.1} parent=5 // pred_region
        %s3757 = ssub.s32 %s27, 2
      $region112: #{tpu_custom_call.1} parent=5 // pred_fallthru
        _
    $region6: #{tpu_custom_call.1} parent=1 // loop_footer
      %s31 = sadd.s32 1, %s27
    $region7: #{tpu_custom_call.1} parent=1 // loop_footer_branch
      %26 = sbr.rel target = $region3
    $region8: #{tpu_custom_call.1} parent=1 // loop_exit
      _
    %3758 = vsyncpa [#allocation6], 1
    %s3759 = scalar_lea.sflag [#allocation6], 1
    %3760 = vsyncpa %s3759, 1
    %3761 = vsyncpa [#allocation8], 1
    %s3762 = scalar_lea.sflag [#allocation8], 1
    %3763 = vsyncpa %s3762, 1
    %3764 = vsyncpa [#allocation11], 1
    %s3765 = scalar_lea.sflag [#allocation11], 1
    %3766 = vsyncpa %s3765, 1
    %3767 = vsyncpa [#allocation14], 1
    %3768 = vsyncpa [#allocation17], 1

</llo_original>
